<compile_context>
chip_gen: v7x
topology: tpu7x:2x2x1
jax: 0.10.0
libtpu: 0.0.40
codegen_flags: <defaults>
</compile_context>

<pallas_src>
import itertools
from functools import partial

import numpy as np
import jax
import jax.numpy as jnp
from jax import lax
from jax.experimental import pallas as pl
from jax.experimental.pallas import tpu as pltpu


M_ALIGN = 1024                 # row-padding bucket (kernels compile per bucket, not per nreal)
TM_MM = 512                    # GEMM row tile (v7x-safe; 1024 is better on v5e/v6e)
TM_EW = 1024                   # BN / elementwise row tile
KFOLD_MAX = 1152               # max folded contraction depth Kb*Cin per MXU push
OOB = np.int32(2 ** 30)        # sentinel index: jnp.take(mode='fill') -> 0 row
VMEM_LIMIT = 32 * 1024 * 1024  # explicit scoped-VMEM limit for the resident-weight GEMM


def _round_up(n, m):
    return ((n + m - 1) // m) * m


def _choose_kb(k3, cin):
    """Largest divisor of k3 with kb*cin <= KFOLD_MAX (no offset padding needed)."""
    kb = 1
    for d in range(1, k3 + 1):
        if k3 % d == 0 and d * cin <= KFOLD_MAX:
            kb = d
    return kb


# ----------------------------------------------------------------------------
# Pallas kernels (hot paths)
# ----------------------------------------------------------------------------
def _spconv_kernel(a_ref, w_ref, o_ref, sum_ref, sq_ref, acc_ref):
    """Accumulating sparse-conv GEMM over folded offset groups.

    grid = (row_tiles, Kg). a_ref: (1, TM_MM, Kfold) bf16 gathered slab for offset
    group k; w_ref: full (Kg, Kfold, Cout) bf16 weight, VMEM-resident (constant
    index_map), indexed in-kernel with k. f32 accumulator resident across k.
    Epilogue stores bf16 output + BN partial moments per row tile.
    """
    k = pl.program_id(1)

    @pl.when(k == 0)
    def _():
        acc_ref[...] = jnp.zeros_like(acc_ref)

    acc_ref[...] += jnp.dot(a_ref[0], w_ref[k],
                            preferred_element_type=jnp.float32)

    @pl.when(k == pl.num_programs(1) - 1)
    def _():
        y = acc_ref[...]
        o_ref[...] = y.astype(o_ref.dtype)
        sum_ref[...] = jnp.sum(y, axis=0, keepdims=True)[None]
        sq_ref[...] = jnp.sum(y * y, axis=0, keepdims=True)[None]


def _sparse_conv_gemm(a3, w3):
    """a3: (Kg, M_pad, Kfold) bf16; w3: (Kg, Kfold, Cout) bf16.

    Returns (out bf16 (M_pad, Cout), sums f32 (nt,1,Cout), sumsqs f32 (nt,1,Cout)).
    """
    kg, m_pad, kfold = a3.shape
    cout = w3.shape[-1]
    num_i = m_pad // TM_MM
    flops = 2 * m_pad * kg * kfold * cout
    bytes_accessed = a3.size * 2 + w3.size * 2 + m_pad * cout * 2
    return pl.pallas_call(
        _spconv_kernel,
        out_shape=(jax.ShapeDtypeStruct((m_pad, cout), jnp.bfloat16),
                   jax.ShapeDtypeStruct((num_i, 1, cout), jnp.float32),
                   jax.ShapeDtypeStruct((num_i, 1, cout), jnp.float32)),
        grid_spec=pltpu.PrefetchScalarGridSpec(
            num_scalar_prefetch=0,
            grid=(num_i, kg),
            in_specs=[pl.BlockSpec((1, TM_MM, kfold), lambda i, k: (k, i, 0)),
                      pl.BlockSpec((kg, kfold, cout), lambda i, k: (0, 0, 0))],
            out_specs=[pl.BlockSpec((TM_MM, cout), lambda i, k: (i, 0)),
                       pl.BlockSpec((1, 1, cout), lambda i, k: (i, 0, 0)),
                       pl.BlockSpec((1, 1, cout), lambda i, k: (i, 0, 0))],
            scratch_shapes=[pltpu.VMEM((TM_MM, cout), jnp.float32)]),
        compiler_params=pltpu.CompilerParams(
            dimension_semantics=("parallel", "arbitrary"),
            vmem_limit_bytes=VMEM_LIMIT),
        cost_estimate=pl.CostEstimate(flops=flops, transcendentals=0,
                                      bytes_accessed=bytes_accessed),
    )(a3, w3)


def _bn_act_kernel(relu, n_ref, x_ref, s_ref, b_ref, o_ref):
    y = x_ref[...].astype(jnp.float32) * s_ref[...] + b_ref[...]
    if relu:
        y = jnp.maximum(y, 0.0)
    rows = (lax.broadcasted_iota(jnp.int32, y.shape, 0)
            + pl.program_id(0) * y.shape[0])
    # keep padded rows exactly zero so GEMM-epilogue BN stats stay clean downstream
    o_ref[...] = jnp.where(rows < n_ref[0], y, 0.0).astype(o_ref.dtype)


def _bn_add_relu_kernel(n_ref, x_ref, s_ref, b_ref, r_ref, o_ref):
    y = (x_ref[...].astype(jnp.float32) * s_ref[...] + b_ref[...]
         + r_ref[...].astype(jnp.float32))
    y = jnp.maximum(y, 0.0)
    rows = (lax.broadcasted_iota(jnp.int32, y.shape, 0)
            + pl.program_id(0) * y.shape[0])
    o_ref[...] = jnp.where(rows < n_ref[0], y, 0.0).astype(o_ref.dtype)


def _bn_act(x, scale, shift, n_arr, relu):
    m_pad, c = x.shape
    return pl.pallas_call(
        partial(_bn_act_kernel, relu),
        out_shape=jax.ShapeDtypeStruct((m_pad, c), jnp.bfloat16),
        grid_spec=pltpu.PrefetchScalarGridSpec(
            num_scalar_prefetch=1,
            grid=(m_pad // TM_EW,),
            in_specs=[pl.BlockSpec((TM_EW, c), lambda i, n: (i, 0)),
                      pl.BlockSpec((1, c), lambda i, n: (0, 0)),
                      pl.BlockSpec((1, c), lambda i, n: (0, 0))],
            out_specs=pl.BlockSpec((TM_EW, c), lambda i, n: (i, 0))),
        compiler_params=pltpu.CompilerParams(dimension_semantics=("parallel",)),
    )(n_arr, x, scale, shift)


def _bn_add_relu(x, scale, shift, res, n_arr):
    m_pad, c = x.shape
    return pl.pallas_call(
        _bn_add_relu_kernel,
        out_shape=jax.ShapeDtypeStruct((m_pad, c), jnp.bfloat16),
        grid_spec=pltpu.PrefetchScalarGridSpec(
            num_scalar_prefetch=1,
            grid=(m_pad // TM_EW,),
            in_specs=[pl.BlockSpec((TM_EW, c), lambda i, n: (i, 0)),
                      pl.BlockSpec((1, c), lambda i, n: (0, 0)),
                      pl.BlockSpec((1, c), lambda i, n: (0, 0)),
                      pl.BlockSpec((TM_EW, c), lambda i, n: (i, 0))],
            out_specs=pl.BlockSpec((TM_EW, c), lambda i, n: (i, 0))),
        compiler_params=pltpu.CompilerParams(dimension_semantics=("parallel",)),
    )(n_arr, x, scale, shift, res)


# ----------------------------------------------------------------------------
# Conv + BN composites (folded gather -> Pallas GEMM -> fused BN affine)
# ----------------------------------------------------------------------------
def _bn_from_stats(sums, sqs, gamma, beta, nreal, eps=1e-3):
    # TODO(synk): nn.BatchNorm1d in training mode (module default) -> batch stats;
    # single-pass E[x^2]-E[x]^2 variance in f32 (flagged, acceptable here).
    n = jnp.asarray(nreal).astype(jnp.float32)
    s = jnp.sum(sums, axis=(0, 1))
    ss = jnp.sum(sqs, axis=(0, 1))
    mean = s / n
    var = jnp.maximum(ss / n - mean * mean, 0.0)
    scale = gamma * lax.rsqrt(var + eps)
    shift = beta - mean * scale
    return scale[None, :], shift[None, :]


@partial(jax.jit, static_argnames=("relu",))
def conv_bn_act(feat, kmapf, w, gamma, beta, nreal, *, relu=True):
    kg, m_pad, kb = kmapf.shape
    k3, cin, cout = w.shape
    assert k3 == kg * kb
    a = jnp.take(feat, kmapf, axis=0, mode="fill", fill_value=0)
    a = a.reshape(kg, m_pad, kb * cin)
    w3 = w.astype(jnp.bfloat16).reshape(kg, kb * cin, cout)
    out, sums, sqs = _sparse_conv_gemm(a, w3)
    scale, shift = _bn_from_stats(sums, sqs, gamma, beta, nreal)
    n_arr = jnp.reshape(nreal, (1,)).astype(jnp.int32)
    return _bn_act(out, scale, shift, n_arr, relu)


@jax.jit
def conv_bn_add_relu(feat, kmapf, w, gamma, beta, res, nreal):
    kg, m_pad, kb = kmapf.shape
    k3, cin, cout = w.shape
    assert k3 == kg * kb
    a = jnp.take(feat, kmapf, axis=0, mode="fill", fill_value=0)
    a = a.reshape(kg, m_pad, kb * cin)
    w3 = w.astype(jnp.bfloat16).reshape(kg, kb * cin, cout)
    out, sums, sqs = _sparse_conv_gemm(a, w3)
    scale, shift = _bn_from_stats(sums, sqs, gamma, beta, nreal)
    n_arr = jnp.reshape(nreal, (1,)).astype(jnp.int32)
    return _bn_add_relu(out, scale, shift, res, n_arr)


@partial(jax.jit, static_argnames=("relu",))
def linear_bn_act(x, w, gamma, beta, nreal, *, relu):
    out, sums, sqs = _sparse_conv_gemm(x[None], w.astype(jnp.bfloat16)[None])
    scale, shift = _bn_from_stats(sums, sqs, gamma, beta, nreal)
    n_arr = jnp.reshape(nreal, (1,)).astype(jnp.int32)
    return _bn_act(out, scale, shift, n_arr, relu)


def basic_block(x, kmapf3, nreal, p):
    out1 = conv_bn_act(x, kmapf3, p['w1'], *p['bn1'], nreal, relu=True)
    if 'proj_w' in p:                                  # SubMConv3d k=1 + BN
        res = linear_bn_act(x, p['proj_w'], *p['proj_bn'], nreal, relu=False)
    else:
        res = x
    return conv_bn_add_relu(out1, kmapf3, p['w2'], *p['bn2'], res, nreal)


# ----------------------------------------------------------------------------
# Host-side rulebook construction (spconv indice_key equivalents)
# TODO(synk): spconv's GPU hash-table rulebook construction has no clean Pallas
# equivalent; indices are built host-side (vectorized numpy), feature GEMMs in Pallas.
# ----------------------------------------------------------------------------
def submconv_kmap(coords, k):
    """Vectorized SubM rulebook: coords (N,4)=[b,x,y,z] >=0 -> (N, k^3) kmap (-1 miss)."""
    r = k // 2
    offs = np.array(list(itertools.product(range(-r, r + 1), repeat=3)), np.int64)
    c = coords.astype(np.int64)
    base = int(c[:, 1:].max()) + 2 * r + 2

    def key(arr):
        return (((arr[:, 0] * base + (arr[:, 1] + r)) * base
                 + (arr[:, 2] + r)) * base + (arr[:, 3] + r))

    key_all = key(c)
    order = np.argsort(key_all, kind='stable')
    key_sorted = key_all[order]
    n = c.shape[0]
    kmap = np.full((n, offs.shape[0]), -1, np.int32)
    for j in range(offs.shape[0]):
        nb = c.copy()
        nb[:, 1:] += offs[j][None, :]
        nbk = key(nb)
        pos = np.searchsorted(key_sorted, nbk)
        pos_c = np.minimum(pos, n - 1)
        hit = key_sorted[pos_c] == nbk
        kmap[:, j] = np.where(hit, order[pos_c].astype(np.int32), -1)
    return kmap


def build_down(coords):
    """SparseConv3d(kernel=2, stride=2) rulebook + inverse (SparseInverseConv3d)."""
    parents = coords.copy()
    parents[:, 1:] = parents[:, 1:] // 2
    out_coords, inv = np.unique(parents, axis=0, return_inverse=True)
    inv = inv.reshape(-1).astype(np.int64)
    n_in, n_out = coords.shape[0], out_coords.shape[0]
    d = coords[:, 1:] - 2 * out_coords[inv][:, 1:]          # in {0,1}^3
    oidx = d[:, 0] * 4 + d[:, 1] * 2 + d[:, 2]
    kmap_down = np.full((n_out, 8), -1, np.int32)
    kmap_down[inv, oidx] = np.arange(n_in, dtype=np.int32)
    kmap_inv = np.full((n_in, 8), -1, np.int32)
    kmap_inv[np.arange(n_in), oidx] = inv.astype(np.int32)
    return dict(out_coords=out_coords, kmap_down=kmap_down, kmap_inv=kmap_inv)


def kmap_fold_to_device(kmap, nreal, cin):
    """(Nout, K3) kmap with -1 missing -> folded (Kg, M_pad, Kb), OOB-filled, row-padded."""
    n_out, k3 = kmap.shape
    kb = _choose_kb(k3, cin)
    kg = k3 // kb
    m_pad = _round_up(max(int(nreal), 1), M_ALIGN)
    km = np.full((m_pad, k3), OOB, np.int32)
    km[:n_out] = np.where(kmap < 0, OOB, kmap).astype(np.int32)
    km = np.ascontiguousarray(km.reshape(m_pad, kg, kb).transpose(1, 0, 2))
    return jnp.asarray(km)


def fnv_hash(arr):
    assert arr.ndim == 2
    arr = arr.astype(np.uint64, copy=True)
    h = np.full(arr.shape[0], np.uint64(14695981039346656037), dtype=np.uint64)
    for j in range(arr.shape[1]):
        h = h * np.uint64(1099511628211)
        h = np.bitwise_xor(h, arr[:, j])
    return h


# ----------------------------------------------------------------------------
# FPS + ball query (pointops equivalents, JAX glue)
# ----------------------------------------------------------------------------
@partial(jax.jit, static_argnames=("m",))
def fps_jax(coords, m):
    n = coords.shape[0]

    def body(i, state):
        dists, inds, last = state
        diff = coords - coords[last]
        d = jnp.sum(diff * diff, axis=1)
        dists = jnp.minimum(dists, d)
        nxt = jnp.argmax(dists).astype(jnp.int32)
        return dists, inds.at[i].set(nxt), nxt

    dists0 = jnp.full((n,), 1e10, jnp.float32)
    inds0 = jnp.zeros((m,), jnp.int32)
    _, inds, _ = lax.fori_loop(1, m, body, (dists0, inds0, jnp.int32(0)))
    return inds


@partial(jax.jit, static_argnames=("nsample",))
def ball_query_group_max(feats_b, pts_b, q_b, radius, nsample):
    n = pts_b.shape[0]
    d2 = jnp.sum((q_b[:, None, :] - pts_b[None, :, :]) ** 2, axis=-1)
    within = d2 <= radius * radius
    cand = jnp.where(within, jnp.arange(n, dtype=jnp.int32)[None, :], n)
    cand = jnp.sort(cand, axis=1)[:, :nsample]
    first = cand[:, :1]
    cand = jnp.where(cand >= n, first, cand)
    # TODO(synk): pointops' padding when no neighbour lies within the radius is
    # implementation-defined; fall back to index 0 of the batch here.
    cand = jnp.where(cand >= n, 0, cand)
    g = jnp.take(feats_b, cand, axis=0)                     # (m, nsample, C)
    return jnp.max(g, axis=1)


# ----------------------------------------------------------------------------
# Parameters (deterministic synthetic init; only modules used in forward)
# ----------------------------------------------------------------------------
def init_params(in_channels=3, base_channels=32,
                channels=(32, 64, 128, 256, 256, 288, 1, 1),
                layers=(2, 3, 4, 6, 2, 2, 1, 1)):
    rng = np.random.default_rng(0)

    # TODO(synk): trunc_normal_(std=0.02) approximated by normal*0.02 (synthetic).
    def conv_w(k3, cin, cout):
        return jnp.asarray((rng.standard_normal((k3, cin, cout)) * 0.02)
                           .astype(np.float32))

    def bn(c):
        return (jnp.ones((c,), jnp.float32), jnp.zeros((c,), jnp.float32))

    def block(cin, cout):
        p = dict(w1=conv_w(27, cin, cout), bn1=bn(cout),
                 w2=conv_w(27, cout, cout), bn2=bn(cout))
        if cin != cout:
            p['proj_w'] = conv_w(1, cin, cout)[0]
            p['proj_bn'] = bn(cout)
        return p

    num_stages = len(layers) // 2
    P = {'conv_input': dict(w=conv_w(125, in_channels, base_channels),
                            bn=bn(base_channels)),
         'down': [], 'enc': [],
         'up': [None] * num_stages, 'dec': [None] * num_stages}
    enc_channels = base_channels
    dec_channels = channels[-1]
    for s in range(num_stages):
        P['down'].append(dict(w=conv_w(8, enc_channels, channels[s]),
                              bn=bn(channels[s])))
        P['enc'].append([block(channels[s], channels[s]) for _ in range(layers[s])])
        if s >= num_stages - 2:        # only up[2],up[3]/dec[2],dec[3] are executed
            up_in = channels[len(channels) - s - 2]
            P['up'][s] = dict(w=conv_w(8, up_in, dec_channels), bn=bn(dec_channels))
            nblocks = layers[len(channels) - s - 1]
            blks = []
            for i in range(nblocks):
                cin = dec_channels + enc_channels if i == 0 else dec_channels
                blks.append(block(cin, dec_channels))
            P['dec'][s] = blks
        enc_channels = channels[s]
        dec_channels = channels[len(channels) - s - 2]
    return P


# ----------------------------------------------------------------------------
# Forward
# ----------------------------------------------------------------------------
def spunet_forward(pointcloud, offset, bss, params,
                   grid_size=0.02, fps_num=1024, num_stages=4):
    pc = np.asarray(pointcloud, dtype=np.float32)
    src_offset = np.asarray(offset).astype(np.int64)

    # voxelisation -------------------------------------------------------------
    dc = np.floor(pc[:, 0:3] / grid_size).astype(np.int32)
    dc_min = dc.min(axis=0)
    dc = dc - dc_min

    n_per = pc.shape[0] // bss
    dc_b = dc.reshape(bss, n_per, 3)
    feats_b = pc[:, 3:].reshape(bss, n_per, 3)

    feat_list, coord_list = [], []
    for b in range(bss):
        key = fnv_hash(dc_b[b])
        idx_sort = np.argsort(key)
        key_sort = key[idx_sort]
        _, _, count = np.unique(key_sort, return_inverse=True, return_counts=True)
        idx_select = (np.cumsum(np.insert(count, 0, 0)[0:-1])
                      + np.random.randint(0, count.max(), count.size) % count)
        idx_unique = idx_sort[idx_select]
        feat_list.append(feats_b[b][idx_unique])
        coord_list.append(dc_b[b][idx_unique])

    feat_np = np.concatenate(feat_list, axis=0).astype(np.float32)
    vox_coords = np.concatenate(
        [np.concatenate([np.full((len(c), 1), b, np.int32), c.astype(np.int32)],
                        axis=1) for b, c in enumerate(coord_list)], axis=0)
    n0 = vox_coords.shape[0]

    # input features: bf16, pad 3 -> 8 channels (keeps the stem GEMM well shaped)
    in_c = feat_np.shape[1]
    cin0 = _round_up(max(in_c, 8), 8)
    feat0 = np.zeros((n0, cin0), np.float32)
    feat0[:, :in_c] = feat_np
    feat = jnp.asarray(feat0, jnp.bfloat16)

    # stem ('stem' SubMConv3d k=5, 125 offsets folded into a single GEMM step) ---
    kmapf_stem = kmap_fold_to_device(submconv_kmap(vox_coords, 5), n0, cin0)
    w_stem = jnp.pad(params['conv_input']['w'],
                     ((0, 0), (0, cin0 - in_c), (0, 0)))
    x = conv_bn_act(feat, kmapf_stem, w_stem, *params['conv_input']['bn'],
                    np.int32(n0), relu=True)

    skips_feat, skips_coords, skips_n = [x], [vox_coords], [n0]
    cur_coords, cur_n = vox_coords, n0
    down_structs, kmapf3 = [], {}

    # encoder -------------------------------------------------------------------
    for s in range(num_stages):
        ds = build_down(cur_coords)                                   # 'spconv{s+1}'
        down_structs.append(ds)
        n_out = ds['out_coords'].shape[0]
        cin_down = params['down'][s]['w'].shape[1]
        kd = kmap_fold_to_device(ds['kmap_down'], n_out, cin_down)
        x = conv_bn_act(x, kd, params['down'][s]['w'], *params['down'][s]['bn'],
                        np.int32(n_out), relu=True)
        cur_coords, cur_n = ds['out_coords'], n_out
        kmapf3[s + 1] = kmap_fold_to_device(                          # 'subm{s+1}'
            submconv_kmap(cur_coords, 3), cur_n,
            params['enc'][s][0]['w1'].shape[1])
        for blk in params['enc'][s]:
            x = basic_block(x, kmapf3[s + 1], np.int32(cur_n), blk)
        skips_feat.append(x)
        skips_coords.append(cur_coords)
        skips_n.append(cur_n)

    # decoder (only two stages executed, as in the reference forward) ------------
    x = skips_feat.pop()
    skips_coords.pop()
    skips_n.pop()
    enc_num = 0
    for s in reversed(range(num_stages)):
        skip = skips_feat.pop()
        cur_coords = skips_coords.pop()
        cur_n = skips_n.pop()
        cin_up = params['up'][s]['w'].shape[1]
        ki = kmap_fold_to_device(down_structs[s]['kmap_inv'], cur_n, cin_up)
        x = conv_bn_act(x, ki, params['up'][s]['w'], *params['up'][s]['bn'],
                        np.int32(cur_n), relu=True)
        x = jnp.concatenate([x, skip], axis=1)
        for blk in params['dec'][s]:
            x = basic_block(x, kmapf3[s], np.int32(cur_n), blk)
        enc_num += 1
        if enc_num == 2:
            break

    # head: FPS + ball-query grouping + max over neighbours -----------------------
    down_xyz = jnp.asarray(((cur_coords[:, 1:] + dc_min) * grid_size)
                           .astype(np.float32))
    down_feats = x[:cur_n].astype(jnp.float32)               # (Md, 288)
    down_offset = np.cumsum(np.bincount(cur_coords[:, 0], minlength=bss))

    coord_all = jnp.asarray(pc[:, 0:3])
    fps_list, start = [], 0
    for b in range(bss):
        end = int(src_offset[b])
        fps_list.append(fps_jax(coord_all[start:end], fps_num) + start)
        start = end
    fps_inds = jnp.concatenate(fps_list, axis=0)
    xyz = jnp.take(coord_all, fps_inds, axis=0)

    grouped, dstart = [], 0
    for b in range(bss):
        dend = int(down_offset[b])
        q_b = xyz[b * fps_num:(b + 1) * fps_num]
        grouped.append(ball_query_group_max(down_feats[dstart:dend],
                                            down_xyz[dstart:dend], q_b, 0.2, 2))
        dstart = dend
    grouped = jnp.concatenate(grouped, axis=0)               # (bss*fps_num, 288)

    end_points = {}
    end_points['fp2_features'] = jnp.transpose(
        grouped.reshape(bss, fps_num, 288), (0, 2, 1))       # (bss, 288, fps_num)
    end_points['fp2_xyz'] = xyz.reshape(bss, fps_num, 3).astype(jnp.float32)
    fps_split = [fps_inds[b * fps_num:(b + 1) * fps_num] for b in range(bss)]
    for b in range(bss - 1):
        fps_split[b + 1] = fps_split[b + 1] - int(src_offset[b])
    end_points['fp2_inds'] = jnp.stack(fps_split, axis=0)
    return end_points


# ----------------------------------------------------------------------------
if __name__ == "__main__":
    np.random.seed(0)                 # for the voxel-dedup random pick (as in ref)
    key = jax.random.PRNGKey(0)
    bss = 2
    n_per = 512
    fps_num = 64                      # reference hardcodes 1024; reduced for a small fast test

    k1, k2 = jax.random.split(key)
    xyz = jax.random.uniform(k1, (bss * n_per, 3), jnp.float32)        # ~50^3 voxel grid @ 0.02
    pfeat = jax.random.normal(k2, (bss * n_per, 3), jnp.float32)
    pointcloud = jnp.concatenate([xyz, pfeat], axis=1)                 # (N, 6) = xyz + 3 feats
    offset = jnp.array([n_per * (b + 1) for b in range(bss)], jnp.int32)

    params = init_params(in_channels=3)
    end_points = spunet_forward(pointcloud, offset, bss, params, fps_num=fps_num)

    jax.block_until_ready(end_points['fp2_features'])
    assert end_points['fp2_features'].shape == (bss, 288, fps_num)
    assert end_points['fp2_xyz'].shape == (bss, fps_num, 3)
    assert end_points['fp2_inds'].shape == (bss, fps_num)
    assert bool(jnp.all(jnp.isfinite(end_points['fp2_features'])))
    print("KERNEL_OK")
</pallas_src>

<mosaic_0001>
module attributes {stable_mosaic.version = 11 : i64} {
  func.func @_spconv_kernel(%arg0: i32, %arg1: i32, %arg2: memref<1x512x1000xbf16, #tpu.memory_space<vmem>>, %arg3: memref<1x1000x32xbf16, #tpu.memory_space<vmem>>, %arg4: memref<512x32xbf16, #tpu.memory_space<vmem>>, %arg5: memref<1x1x32xf32, #tpu.memory_space<vmem>>, %arg6: memref<1x1x32xf32, #tpu.memory_space<vmem>>, %arg7: memref<512x32xf32, #tpu.memory_space<vmem>>) attributes {dimension_semantics = [#tpu.dimension_semantics<parallel>, #tpu.dimension_semantics<arbitrary>], iteration_bounds = array<i64: 2, 1>, scalar_prefetch = 0 : i64, scratch_operands = 1 : i64, tpu.core_type = #tpu.core_type<tc>, window_params = [{transform_indices = @transform_0, window_bounds = array<i64: 1, 512, 1000>}, {pipeline_mode = #tpu.pipeline_mode<synchronous>, transform_indices = @transform_1, window_bounds = array<i64: 1, 1000, 32>}, {transform_indices = @transform_2, window_bounds = array<i64: 512, 32>}, {transform_indices = @transform_3, window_bounds = array<i64: 1, 1, 32>}, {transform_indices = @transform_4, window_bounds = array<i64: 1, 1, 32>}]} {
    %c0_i32 = arith.constant 0 : i32
    %0 = arith.cmpi eq, %arg1, %c0_i32 : i32
    %1 = arith.extui %0 : i1 to i32
    %c0_i32_0 = arith.constant 0 : i32
    %2 = arith.cmpi ne, %1, %c0_i32_0 : i32
    scf.if %2 {
      %cst_11 = arith.constant 0.000000e+00 : f32
      %15 = vector.broadcast %cst_11 : f32 to vector<512x32xf32>
      %c0_12 = arith.constant 0 : index
      %c0_13 = arith.constant 0 : index
      %16 = vector.load %arg7[%c0_12, %c0_13] : memref<512x32xf32, #tpu.memory_space<vmem>>, vector<512x32xf32>
      tpu.vector_store %arg7[%c0_12, %c0_13], %15 {strides = array<i32>} : memref<512x32xf32, #tpu.memory_space<vmem>>, vector<512x32xf32>,
    } else {
    }
    %c0 = arith.constant 0 : index
    %c0_1 = arith.constant 0 : index
    %3 = vector.load %arg7[%c0, %c0_1] : memref<512x32xf32, #tpu.memory_space<vmem>>, vector<512x32xf32>
    %c0_2 = arith.constant 0 : index
    %c0_3 = arith.constant 0 : index
    %c0_4 = arith.constant 0 : index
    %4 = vector.load %arg2[%c0_2, %c0_3, %c0_4] : memref<1x512x1000xbf16, #tpu.memory_space<vmem>>, vector<1x512x1000xbf16>
    %5 = vector.shape_cast %4 : vector<1x512x1000xbf16> to vector<512x1000xbf16>
    %6 = arith.index_cast %arg1 : i32 to index
    %c0_5 = arith.constant 0 : index
    %c0_6 = arith.constant 0 : index
    %7 = vector.load %arg3[%6, %c0_5, %c0_6] : memref<1x1000x32xbf16, #tpu.memory_space<vmem>>, vector<1x1000x32xbf16>
    %8 = vector.shape_cast %7 : vector<1x1000x32xbf16> to vector<1000x32xbf16>
    %cst = arith.constant dense<0.000000e+00> : vector<512x32xf32>
    %9 = tpu.matmul %5, %8, %cst {dimension_numbers = #tpu.dot_dimension_numbers<[1], [0], [0], [1], [0, 0, 1, 1], [], []>} : vector<512x1000xbf16>, vector<1000x32xbf16>, vector<512x32xf32> -> vector<512x32xf32>
    %10 = arith.addf %3, %9 : vector<512x32xf32>
    %c0_7 = arith.constant 0 : index
    %c0_8 = arith.constant 0 : index
    %11 = vector.load %arg7[%c0_7, %c0_8] : memref<512x32xf32, #tpu.memory_space<vmem>>, vector<512x32xf32>
    tpu.vector_store %arg7[%c0_7, %c0_8], %10 {strides = array<i32>} : memref<512x32xf32, #tpu.memory_space<vmem>>, vector<512x32xf32>,
    %c0_i32_9 = arith.constant 0 : i32
    %12 = arith.cmpi eq, %arg1, %c0_i32_9 : i32
    %13 = arith.extui %12 : i1 to i32
    %c0_i32_10 = arith.constant 0 : i32
    %14 = arith.cmpi ne, %13, %c0_i32_10 : i32
    scf.if %14 {
      %c0_11 = arith.constant 0 : index
      %c0_12 = arith.constant 0 : index
      %15 = vector.load %arg7[%c0_11, %c0_12] : memref<512x32xf32, #tpu.memory_space<vmem>>, vector<512x32xf32>
      %16 = arith.truncf %15 : vector<512x32xf32> to vector<512x32xbf16>
      %c0_13 = arith.constant 0 : index
      %c0_14 = arith.constant 0 : index
      %17 = vector.load %arg4[%c0_13, %c0_14] : memref<512x32xbf16, #tpu.memory_space<vmem>>, vector<512x32xbf16>
      tpu.vector_store %arg4[%c0_13, %c0_14], %16 {strides = array<i32>} : memref<512x32xbf16, #tpu.memory_space<vmem>>, vector<512x32xbf16>,
      %cst_15 = arith.constant dense<0.000000e+00> : vector<32xf32>
      %18 = vector.multi_reduction <add>, %15, %cst_15 [0] : vector<512x32xf32> to vector<32xf32>
      %19 = vector.shape_cast %18 : vector<32xf32> to vector<1x32xf32>
      %20 = vector.shape_cast %19 : vector<1x32xf32> to vector<1x1x32xf32>
      %c0_16 = arith.constant 0 : index
      %c0_17 = arith.constant 0 : index
      %c0_18 = arith.constant 0 : index
      %21 = vector.load %arg5[%c0_16, %c0_17, %c0_18] : memref<1x1x32xf32, #tpu.memory_space<vmem>>, vector<1x1x32xf32>
      tpu.vector_store %arg5[%c0_16, %c0_17, %c0_18], %20 {strides = array<i32>} : memref<1x1x32xf32, #tpu.memory_space<vmem>>, vector<1x1x32xf32>,
      %22 = arith.mulf %15, %15 : vector<512x32xf32>
      %cst_19 = arith.constant dense<0.000000e+00> : vector<32xf32>
      %23 = vector.multi_reduction <add>, %22, %cst_19 [0] : vector<512x32xf32> to vector<32xf32>
      %24 = vector.shape_cast %23 : vector<32xf32> to vector<1x32xf32>
      %25 = vector.shape_cast %24 : vector<1x32xf32> to vector<1x1x32xf32>
      %c0_20 = arith.constant 0 : index
      %c0_21 = arith.constant 0 : index
      %c0_22 = arith.constant 0 : index
      %26 = vector.load %arg6[%c0_20, %c0_21, %c0_22] : memref<1x1x32xf32, #tpu.memory_space<vmem>>, vector<1x1x32xf32>
      tpu.vector_store %arg6[%c0_20, %c0_21, %c0_22], %25 {strides = array<i32>} : memref<1x1x32xf32, #tpu.memory_space<vmem>>, vector<1x1x32xf32>,
    } else {
    }
    return
  }
  func.func @transform_0(%arg0: i32, %arg1: i32) -> (i32, i32, i32) {
    %c0_i32 = arith.constant 0 : i32
    %c0_i32_0 = arith.constant 0 : i32
    return %arg1, %arg0, %c0_i32 : i32, i32, i32
  }
  func.func @transform_1(%arg0: i32, %arg1: i32) -> (i32, i32, i32) {
    %c0_i32 = arith.constant 0 : i32
    %c0_i32_0 = arith.constant 0 : i32
    %c0_i32_1 = arith.constant 0 : i32
    %c0_i32_2 = arith.constant 0 : i32
    return %c0_i32, %c0_i32_0, %c0_i32_1 : i32, i32, i32
  }
  func.func @transform_2(%arg0: i32, %arg1: i32) -> (i32, i32) {
    %c0_i32 = arith.constant 0 : i32
    %c0_i32_0 = arith.constant 0 : i32
    return %arg0, %c0_i32 : i32, i32
  }
  func.func @transform_3(%arg0: i32, %arg1: i32) -> (i32, i32, i32) {
    %c0_i32 = arith.constant 0 : i32
    %c0_i32_0 = arith.constant 0 : i32
    %c0_i32_1 = arith.constant 0 : i32
    return %arg0, %c0_i32, %c0_i32_0 : i32, i32, i32
  }
  func.func @transform_4(%arg0: i32, %arg1: i32) -> (i32, i32, i32) {
    %c0_i32 = arith.constant 0 : i32
    %c0_i32_0 = arith.constant 0 : i32
    %c0_i32_1 = arith.constant 0 : i32
    return %arg0, %c0_i32, %c0_i32_0 : i32, i32, i32
  }
}

module attributes {stable_mosaic.version = 11 : i64} {
  func.func @_bn_act_kernel(%arg0: i32, %arg1: memref<1xi32, #tpu.memory_space<smem>>, %arg2: memref<1024x32xbf16, #tpu.memory_space<vmem>>, %arg3: memref<1x32xf32, #tpu.memory_space<vmem>>, %arg4: memref<1x32xf32, #tpu.memory_space<vmem>>, %arg5: memref<1024x32xbf16, #tpu.memory_space<vmem>>) attributes {dimension_semantics = [#tpu.dimension_semantics<parallel>], iteration_bounds = array<i64: 1>, scalar_prefetch = 1 : i64, scratch_operands = 0 : i64, tpu.core_type = #tpu.core_type<tc>, window_params = [{transform_indices = @transform_0, window_bounds = array<i64: 1024, 32>}, {pipeline_mode = #tpu.pipeline_mode<synchronous>, transform_indices = @transform_1, window_bounds = array<i64: 1, 32>}, {pipeline_mode = #tpu.pipeline_mode<synchronous>, transform_indices = @transform_2, window_bounds = array<i64: 1, 32>}, {transform_indices = @transform_3, window_bounds = array<i64: 1024, 32>}]} {
    %c0 = arith.constant 0 : index
    %c0_0 = arith.constant 0 : index
    %0 = vector.load %arg2[%c0, %c0_0] : memref<1024x32xbf16, #tpu.memory_space<vmem>>, vector<1024x32xbf16>
    %1 = arith.extf %0 : vector<1024x32xbf16> to vector<1024x32xf32>
    %c0_1 = arith.constant 0 : index
    %c0_2 = arith.constant 0 : index
    %2 = vector.load %arg3[%c0_1, %c0_2] : memref<1x32xf32, #tpu.memory_space<vmem>>, vector<1x32xf32>
    %3 = vector.broadcast %2 : vector<1x32xf32> to vector<1024x32xf32>
    %4 = arith.mulf %1, %3 : vector<1024x32xf32>
    %c0_3 = arith.constant 0 : index
    %c0_4 = arith.constant 0 : index
    %5 = vector.load %arg4[%c0_3, %c0_4] : memref<1x32xf32, #tpu.memory_space<vmem>>, vector<1x32xf32>
    %6 = vector.broadcast %5 : vector<1x32xf32> to vector<1024x32xf32>
    %7 = arith.addf %4, %6 : vector<1024x32xf32>
    %cst = arith.constant 0.000000e+00 : f32
    %8 = vector.broadcast %cst : f32 to vector<1024x32xf32>
    %9 = arith.maximumf %7, %8 : vector<1024x32xf32>
    %10 = tpu.iota {dimensions = array<i32: 0>} : vector<1024x32xi32>
    %c1024_i32 = arith.constant 1024 : i32
    %11 = arith.muli %arg0, %c1024_i32 : i32
    %12 = vector.broadcast %11 : i32 to vector<1024x32xi32>
    %13 = arith.addi %10, %12 : vector<1024x32xi32>
    %c0_5 = arith.constant 0 : index
    %14 = memref.load %arg1[%c0_5] : memref<1xi32, #tpu.memory_space<smem>>
    %15 = vector.broadcast %14 : i32 to vector<1024x32xi32>
    %16 = arith.cmpi slt, %13, %15 : vector<1024x32xi32>
    %cst_6 = arith.constant 0.000000e+00 : f32
    %17 = vector.broadcast %cst_6 : f32 to vector<1024x32xf32>
    %18 = arith.select %16, %9, %17 : vector<1024x32xi1>, vector<1024x32xf32>
    %19 = arith.truncf %18 : vector<1024x32xf32> to vector<1024x32xbf16>
    %c0_7 = arith.constant 0 : index
    %c0_8 = arith.constant 0 : index
    %20 = vector.load %arg5[%c0_7, %c0_8] : memref<1024x32xbf16, #tpu.memory_space<vmem>>, vector<1024x32xbf16>
    tpu.vector_store %arg5[%c0_7, %c0_8], %19 {strides = array<i32>} : memref<1024x32xbf16, #tpu.memory_space<vmem>>, vector<1024x32xbf16>,
    return
  }
  func.func @transform_0(%arg0: i32, %arg1: memref<1xi32, #tpu.memory_space<smem>>) -> (i32, i32) {
    %c0_i32 = arith.constant 0 : i32
    %c0_i32_0 = arith.constant 0 : i32
    return %arg0, %c0_i32 : i32, i32
  }
  func.func @transform_1(%arg0: i32, %arg1: memref<1xi32, #tpu.memory_space<smem>>) -> (i32, i32) {
    %c0_i32 = arith.constant 0 : i32
    %c0_i32_0 = arith.constant 0 : i32
    %c0_i32_1 = arith.constant 0 : i32
    return %c0_i32, %c0_i32_0 : i32, i32
  }
  func.func @transform_2(%arg0: i32, %arg1: memref<1xi32, #tpu.memory_space<smem>>) -> (i32, i32) {
    %c0_i32 = arith.constant 0 : i32
    %c0_i32_0 = arith.constant 0 : i32
    %c0_i32_1 = arith.constant 0 : i32
    return %c0_i32, %c0_i32_0 : i32, i32
  }
  func.func @transform_3(%arg0: i32, %arg1: memref<1xi32, #tpu.memory_space<smem>>) -> (i32, i32) {
    %c0_i32 = arith.constant 0 : i32
    %c0_i32_0 = arith.constant 0 : i32
    return %arg0, %c0_i32 : i32, i32
  }
}

</mosaic_0001>

<llo_original>
// kernel: conv_bn_act.3
$region0: #{conv_bn_act.3}
  #allocation0 [shape = 'u32[]', space=smem, size = 0x4, offset = 0x4, fixed_abs, tag = 'smem constant byte address 0x4 - core index']
  #allocation1 [shape = 'u32[144,128]{1,0:T(1,128)}', space=vmem, size = 0x12000, scoped, tag = 'internal scratch']
  #allocation2 [shape = 's32[1]{0}', space=sflag, size = 0x4, scoped, tag = 'scoped memory for conv_bn_act.3']
  #allocation3 [shape = 's32[1]{0:T(128)S(6)}', space=smem, size = 0x200, scoped, tag = 'prefetched SMEM operand 0']
  %s0 = inlined_call_operand.<no memory space> [shape: s32[1], index: 0, kind: input, shape index: {}]
  %s1 = inlined_call_operand.vmem [shape: bf16[1024,32], index: 1, kind: input, shape index: {}]
  %s2 = inlined_call_operand.vmem [shape: f32[1,32], index: 2, kind: input, shape index: {}]
  %s3 = inlined_call_operand.vmem [shape: f32[1,32], index: 3, kind: input, shape index: {}]
  %s4 = inlined_call_operand.vmem [shape: bf16[1024,32], index: 4, kind: output, shape index: {}]
  %s5 = sld [smem:[#allocation0]]
  $region22: #{conv_bn_act.3} parent=0
    _
  %s7 = ssub.s32 1, %s5
  %s8 = scalar_select 0, %s7, %s5
  %9 = sst [smem:[#allocation3]] %s0
  // Predicated region
  $region2: #{conv_bn_act.3} parent=0 // pred_check
    _
  $region3: #{conv_bn_act.3} parent=0 // pred_check_branch
    %11 = sbr.rel (0) target = $region5
  $region4: #{conv_bn_act.3} parent=0 // pred_region
    _
  $region5: #{conv_bn_act.3} parent=0 // pred_fallthru
    _
  // Predicated region
  $region6: #{conv_bn_act.3} parent=0 // pred_check
    _
  $region7: #{conv_bn_act.3} parent=0 // pred_check_branch
    %13 = sbr.rel (0) target = $region9
  $region8: #{conv_bn_act.3} parent=0 // pred_region
    _
  $region9: #{conv_bn_act.3} parent=0 // pred_fallthru
    _
  // Predicated region
  $region10: #{conv_bn_act.3} parent=0 // pred_check
    _
  $region11: #{conv_bn_act.3} parent=0 // pred_check_branch
    %15 = sbr.rel (0) target = $region13
  $region12: #{conv_bn_act.3} parent=0 // pred_region
    _
  $region13: #{conv_bn_act.3} parent=0 // pred_fallthru
    _
  %v16 = vld [vmem:[%s1] sm:$0xf]
  %v17 = vld [vmem:[%s1 + $0x4] sm:$0xf]
  %v18 = vld [vmem:[%s1 + $0x8] sm:$0xf]
  %v19 = vld [vmem:[%s1 + $0xc] sm:$0xf]
  %v20 = vld [vmem:[%s1 + $0x10] sm:$0xf]
  %v21 = vld [vmem:[%s1 + $0x14] sm:$0xf]
  %v22 = vld [vmem:[%s1 + $0x18] sm:$0xf]
  %v23 = vld [vmem:[%s1 + $0x1c] sm:$0xf]
  %v24 = vld [vmem:[%s1 + $0x20] sm:$0xf]
  %v25 = vld [vmem:[%s1 + $0x24] sm:$0xf]
  %v26 = vld [vmem:[%s1 + $0x28] sm:$0xf]
  %v27 = vld [vmem:[%s1 + $0x2c] sm:$0xf]
  %v28 = vld [vmem:[%s1 + $0x30] sm:$0xf]
  %v29 = vld [vmem:[%s1 + $0x34] sm:$0xf]
  %v30 = vld [vmem:[%s1 + $0x38] sm:$0xf]
  %v31 = vld [vmem:[%s1 + $0x3c] sm:$0xf]
  %v32 = vld [vmem:[%s1 + $0x40] sm:$0xf]
  %v33 = vld [vmem:[%s1 + $0x44] sm:$0xf]
  %v34 = vld [vmem:[%s1 + $0x48] sm:$0xf]
  %v35 = vld [vmem:[%s1 + $0x4c] sm:$0xf]
  %v36 = vld [vmem:[%s1 + $0x50] sm:$0xf]
  %v37 = vld [vmem:[%s1 + $0x54] sm:$0xf]
  %v38 = vld [vmem:[%s1 + $0x58] sm:$0xf]
  %v39 = vld [vmem:[%s1 + $0x5c] sm:$0xf]
  %v40 = vld [vmem:[%s1 + $0x60] sm:$0xf]
  %v41 = vld [vmem:[%s1 + $0x64] sm:$0xf]
  %v42 = vld [vmem:[%s1 + $0x68] sm:$0xf]
  %v43 = vld [vmem:[%s1 + $0x6c] sm:$0xf]
  %v44 = vld [vmem:[%s1 + $0x70] sm:$0xf]
  %v45 = vld [vmem:[%s1 + $0x74] sm:$0xf]
  %v46 = vld [vmem:[%s1 + $0x78] sm:$0xf]
  %v47 = vld [vmem:[%s1 + $0x7c] sm:$0xf]
  %v48 = vld [vmem:[%s1 + $0x80] sm:$0xf]
  %v49 = vld [vmem:[%s1 + $0x84] sm:$0xf]
  %v50 = vld [vmem:[%s1 + $0x88] sm:$0xf]
  %v51 = vld [vmem:[%s1 + $0x8c] sm:$0xf]
  %v52 = vld [vmem:[%s1 + $0x90] sm:$0xf]
  %v53 = vld [vmem:[%s1 + $0x94] sm:$0xf]
  %v54 = vld [vmem:[%s1 + $0x98] sm:$0xf]
  %v55 = vld [vmem:[%s1 + $0x9c] sm:$0xf]
  %v56 = vld [vmem:[%s1 + $0xa0] sm:$0xf]
  %v57 = vld [vmem:[%s1 + $0xa4] sm:$0xf]
  %v58 = vld [vmem:[%s1 + $0xa8] sm:$0xf]
  %v59 = vld [vmem:[%s1 + $0xac] sm:$0xf]
  %v60 = vld [vmem:[%s1 + $0xb0] sm:$0xf]
  %v61 = vld [vmem:[%s1 + $0xb4] sm:$0xf]
  %v62 = vld [vmem:[%s1 + $0xb8] sm:$0xf]
  %v63 = vld [vmem:[%s1 + $0xbc] sm:$0xf]
  %v64 = vld [vmem:[%s1 + $0xc0] sm:$0xf]
  %v65 = vld [vmem:[%s1 + $0xc4] sm:$0xf]
  %v66 = vld [vmem:[%s1 + $0xc8] sm:$0xf]
  %v67 = vld [vmem:[%s1 + $0xcc] sm:$0xf]
  %v68 = vld [vmem:[%s1 + $0xd0] sm:$0xf]
  %v69 = vld [vmem:[%s1 + $0xd4] sm:$0xf]
  %v70 = vld [vmem:[%s1 + $0xd8] sm:$0xf]
  %v71 = vld [vmem:[%s1 + $0xdc] sm:$0xf]
  %v72 = vld [vmem:[%s1 + $0xe0] sm:$0xf]
  %v73 = vld [vmem:[%s1 + $0xe4] sm:$0xf]
  %v74 = vld [vmem:[%s1 + $0xe8] sm:$0xf]
  %v75 = vld [vmem:[%s1 + $0xec] sm:$0xf]
  %v76 = vld [vmem:[%s1 + $0xf0] sm:$0xf]
  %v77 = vld [vmem:[%s1 + $0xf4] sm:$0xf]
  %v78 = vld [vmem:[%s1 + $0xf8] sm:$0xf]
  %v79 = vld [vmem:[%s1 + $0xfc] sm:$0xf]
  %v80 = vld [vmem:[%s1 + $0x100] sm:$0xf]
  %v81 = vld [vmem:[%s1 + $0x104] sm:$0xf]
  %v82 = vld [vmem:[%s1 + $0x108] sm:$0xf]
  %v83 = vld [vmem:[%s1 + $0x10c] sm:$0xf]
  %v84 = vld [vmem:[%s1 + $0x110] sm:$0xf]
  %v85 = vld [vmem:[%s1 + $0x114] sm:$0xf]
  %v86 = vld [vmem:[%s1 + $0x118] sm:$0xf]
  %v87 = vld [vmem:[%s1 + $0x11c] sm:$0xf]
  %v88 = vld [vmem:[%s1 + $0x120] sm:$0xf]
  %v89 = vld [vmem:[%s1 + $0x124] sm:$0xf]
  %v90 = vld [vmem:[%s1 + $0x128] sm:$0xf]
  %v91 = vld [vmem:[%s1 + $0x12c] sm:$0xf]
  %v92 = vld [vmem:[%s1 + $0x130] sm:$0xf]
  %v93 = vld [vmem:[%s1 + $0x134] sm:$0xf]
  %v94 = vld [vmem:[%s1 + $0x138] sm:$0xf]
  %v95 = vld [vmem:[%s1 + $0x13c] sm:$0xf]
  %v96 = vld [vmem:[%s1 + $0x140] sm:$0xf]
  %v97 = vld [vmem:[%s1 + $0x144] sm:$0xf]
  %v98 = vld [vmem:[%s1 + $0x148] sm:$0xf]
  %v99 = vld [vmem:[%s1 + $0x14c] sm:$0xf]
  %v100 = vld [vmem:[%s1 + $0x150] sm:$0xf]
  %v101 = vld [vmem:[%s1 + $0x154] sm:$0xf]
  %v102 = vld [vmem:[%s1 + $0x158] sm:$0xf]
  %v103 = vld [vmem:[%s1 + $0x15c] sm:$0xf]
  %v104 = vld [vmem:[%s1 + $0x160] sm:$0xf]
  %v105 = vld [vmem:[%s1 + $0x164] sm:$0xf]
  %v106 = vld [vmem:[%s1 + $0x168] sm:$0xf]
  %v107 = vld [vmem:[%s1 + $0x16c] sm:$0xf]
  %v108 = vld [vmem:[%s1 + $0x170] sm:$0xf]
  %v109 = vld [vmem:[%s1 + $0x174] sm:$0xf]
  %v110 = vld [vmem:[%s1 + $0x178] sm:$0xf]
  %v111 = vld [vmem:[%s1 + $0x17c] sm:$0xf]
  %v112 = vld [vmem:[%s1 + $0x180] sm:$0xf]
  %v113 = vld [vmem:[%s1 + $0x184] sm:$0xf]
  %v114 = vld [vmem:[%s1 + $0x188] sm:$0xf]
  %v115 = vld [vmem:[%s1 + $0x18c] sm:$0xf]
  %v116 = vld [vmem:[%s1 + $0x190] sm:$0xf]
  %v117 = vld [vmem:[%s1 + $0x194] sm:$0xf]
  %v118 = vld [vmem:[%s1 + $0x198] sm:$0xf]
  %v119 = vld [vmem:[%s1 + $0x19c] sm:$0xf]
  %v120 = vld [vmem:[%s1 + $0x1a0] sm:$0xf]
  %v121 = vld [vmem:[%s1 + $0x1a4] sm:$0xf]
  %v122 = vld [vmem:[%s1 + $0x1a8] sm:$0xf]
  %v123 = vld [vmem:[%s1 + $0x1ac] sm:$0xf]
  %v124 = vld [vmem:[%s1 + $0x1b0] sm:$0xf]
  %v125 = vld [vmem:[%s1 + $0x1b4] sm:$0xf]
  %v126 = vld [vmem:[%s1 + $0x1b8] sm:$0xf]
  %v127 = vld [vmem:[%s1 + $0x1bc] sm:$0xf]
  %v128 = vld [vmem:[%s1 + $0x1c0] sm:$0xf]
  %v129 = vld [vmem:[%s1 + $0x1c4] sm:$0xf]
  %v130 = vld [vmem:[%s1 + $0x1c8] sm:$0xf]
  %v131 = vld [vmem:[%s1 + $0x1cc] sm:$0xf]
  %v132 = vld [vmem:[%s1 + $0x1d0] sm:$0xf]
  %v133 = vld [vmem:[%s1 + $0x1d4] sm:$0xf]
  %v134 = vld [vmem:[%s1 + $0x1d8] sm:$0xf]
  %v135 = vld [vmem:[%s1 + $0x1dc] sm:$0xf]
  %v136 = vld [vmem:[%s1 + $0x1e0] sm:$0xf]
  %v137 = vld [vmem:[%s1 + $0x1e4] sm:$0xf]
  %v138 = vld [vmem:[%s1 + $0x1e8] sm:$0xf]
  %v139 = vld [vmem:[%s1 + $0x1ec] sm:$0xf]
  %v140 = vld [vmem:[%s1 + $0x1f0] sm:$0xf]
  %v141 = vld [vmem:[%s1 + $0x1f4] sm:$0xf]
  %v142 = vld [vmem:[%s1 + $0x1f8] sm:$0xf]
  %v143 = vld [vmem:[%s1 + $0x1fc] sm:$0xf]
  %v144 = vunpack.c.l.bf16 %v16
  %v145 = vunpack.c.l.bf16 %v17
  %v146 = vunpack.c.l.bf16 %v18
  %v147 = vunpack.c.l.bf16 %v19
  %v148 = vunpack.c.l.bf16 %v20
  %v149 = vunpack.c.l.bf16 %v21
  %v150 = vunpack.c.l.bf16 %v22
  %v151 = vunpack.c.l.bf16 %v23
  %v152 = vunpack.c.l.bf16 %v24
  %v153 = vunpack.c.l.bf16 %v25
  %v154 = vunpack.c.l.bf16 %v26
  %v155 = vunpack.c.l.bf16 %v27
  %v156 = vunpack.c.l.bf16 %v28
  %v157 = vunpack.c.l.bf16 %v29
  %v158 = vunpack.c.l.bf16 %v30
  %v159 = vunpack.c.l.bf16 %v31
  %v160 = vunpack.c.l.bf16 %v32
  %v161 = vunpack.c.l.bf16 %v33
  %v162 = vunpack.c.l.bf16 %v34
  %v163 = vunpack.c.l.bf16 %v35
  %v164 = vunpack.c.l.bf16 %v36
  %v165 = vunpack.c.l.bf16 %v37
  %v166 = vunpack.c.l.bf16 %v38
  %v167 = vunpack.c.l.bf16 %v39
  %v168 = vunpack.c.l.bf16 %v40
  %v169 = vunpack.c.l.bf16 %v41
  %v170 = vunpack.c.l.bf16 %v42
  %v171 = vunpack.c.l.bf16 %v43
  %v172 = vunpack.c.l.bf16 %v44
  %v173 = vunpack.c.l.bf16 %v45
  %v174 = vunpack.c.l.bf16 %v46
  %v175 = vunpack.c.l.bf16 %v47
  %v176 = vunpack.c.l.bf16 %v48
  %v177 = vunpack.c.l.bf16 %v49
  %v178 = vunpack.c.l.bf16 %v50
  %v179 = vunpack.c.l.bf16 %v51
  %v180 = vunpack.c.l.bf16 %v52
  %v181 = vunpack.c.l.bf16 %v53
  %v182 = vunpack.c.l.bf16 %v54
  %v183 = vunpack.c.l.bf16 %v55
  %v184 = vunpack.c.l.bf16 %v56
  %v185 = vunpack.c.l.bf16 %v57
  %v186 = vunpack.c.l.bf16 %v58
  %v187 = vunpack.c.l.bf16 %v59
  %v188 = vunpack.c.l.bf16 %v60
  %v189 = vunpack.c.l.bf16 %v61
  %v190 = vunpack.c.l.bf16 %v62
  %v191 = vunpack.c.l.bf16 %v63
  %v192 = vunpack.c.l.bf16 %v64
  %v193 = vunpack.c.l.bf16 %v65
  %v194 = vunpack.c.l.bf16 %v66
  %v195 = vunpack.c.l.bf16 %v67
  %v196 = vunpack.c.l.bf16 %v68
  %v197 = vunpack.c.l.bf16 %v69
  %v198 = vunpack.c.l.bf16 %v70
  %v199 = vunpack.c.l.bf16 %v71
  %v200 = vunpack.c.l.bf16 %v72
  %v201 = vunpack.c.l.bf16 %v73
  %v202 = vunpack.c.l.bf16 %v74
  %v203 = vunpack.c.l.bf16 %v75
  %v204 = vunpack.c.l.bf16 %v76
  %v205 = vunpack.c.l.bf16 %v77
  %v206 = vunpack.c.l.bf16 %v78
  %v207 = vunpack.c.l.bf16 %v79
  %v208 = vunpack.c.l.bf16 %v80
  %v209 = vunpack.c.l.bf16 %v81
  %v210 = vunpack.c.l.bf16 %v82
  %v211 = vunpack.c.l.bf16 %v83
  %v212 = vunpack.c.l.bf16 %v84
  %v213 = vunpack.c.l.bf16 %v85
  %v214 = vunpack.c.l.bf16 %v86
  %v215 = vunpack.c.l.bf16 %v87
  %v216 = vunpack.c.l.bf16 %v88
  %v217 = vunpack.c.l.bf16 %v89
  %v218 = vunpack.c.l.bf16 %v90
  %v219 = vunpack.c.l.bf16 %v91
  %v220 = vunpack.c.l.bf16 %v92
  %v221 = vunpack.c.l.bf16 %v93
  %v222 = vunpack.c.l.bf16 %v94
  %v223 = vunpack.c.l.bf16 %v95
  %v224 = vunpack.c.l.bf16 %v96
  %v225 = vunpack.c.l.bf16 %v97
  %v226 = vunpack.c.l.bf16 %v98
  %v227 = vunpack.c.l.bf16 %v99
  %v228 = vunpack.c.l.bf16 %v100
  %v229 = vunpack.c.l.bf16 %v101
  %v230 = vunpack.c.l.bf16 %v102
  %v231 = vunpack.c.l.bf16 %v103
  %v232 = vunpack.c.l.bf16 %v104
  %v233 = vunpack.c.l.bf16 %v105
  %v234 = vunpack.c.l.bf16 %v106
  %v235 = vunpack.c.l.bf16 %v107
  %v236 = vunpack.c.l.bf16 %v108
  %v237 = vunpack.c.l.bf16 %v109
  %v238 = vunpack.c.l.bf16 %v110
  %v239 = vunpack.c.l.bf16 %v111
  %v240 = vunpack.c.l.bf16 %v112
  %v241 = vunpack.c.l.bf16 %v113
  %v242 = vunpack.c.l.bf16 %v114
  %v243 = vunpack.c.l.bf16 %v115
  %v244 = vunpack.c.l.bf16 %v116
  %v245 = vunpack.c.l.bf16 %v117
  %v246 = vunpack.c.l.bf16 %v118
  %v247 = vunpack.c.l.bf16 %v119
  %v248 = vunpack.c.l.bf16 %v120
  %v249 = vunpack.c.l.bf16 %v121
  %v250 = vunpack.c.l.bf16 %v122
  %v251 = vunpack.c.l.bf16 %v123
  %v252 = vunpack.c.l.bf16 %v124
  %v253 = vunpack.c.l.bf16 %v125
  %v254 = vunpack.c.l.bf16 %v126
  %v255 = vunpack.c.l.bf16 %v127
  %v256 = vunpack.c.l.bf16 %v128
  %v257 = vunpack.c.l.bf16 %v129
  %v258 = vunpack.c.l.bf16 %v130
  %v259 = vunpack.c.l.bf16 %v131
  %v260 = vunpack.c.l.bf16 %v132
  %v261 = vunpack.c.l.bf16 %v133
  %v262 = vunpack.c.l.bf16 %v134
  %v263 = vunpack.c.l.bf16 %v135
  %v264 = vunpack.c.l.bf16 %v136
  %v265 = vunpack.c.l.bf16 %v137
  %v266 = vunpack.c.l.bf16 %v138
  %v267 = vunpack.c.l.bf16 %v139
  %v268 = vunpack.c.l.bf16 %v140
  %v269 = vunpack.c.l.bf16 %v141
  %v270 = vunpack.c.l.bf16 %v142
  %v271 = vunpack.c.l.bf16 %v143
  %v272 = vld [vmem:[%s2] sm:$0x1]
  %v274 = vlaneseq
  %v275 = vshrl.u32 %v274, 7
  %v276 = vsub.s32 0, %v275
  %v277 = vrot.slane %v272, %v276
  %v279 = vmul.f32 %v144, %v277
  %v280 = vmul.f32 %v145, %v277
  %v281 = vmul.f32 %v146, %v277
  %v282 = vmul.f32 %v147, %v277
  %v283 = vmul.f32 %v148, %v277
  %v284 = vmul.f32 %v149, %v277
  %v285 = vmul.f32 %v150, %v277
  %v286 = vmul.f32 %v151, %v277
  %v287 = vmul.f32 %v152, %v277
  %v288 = vmul.f32 %v153, %v277
  %v289 = vmul.f32 %v154, %v277
  %v290 = vmul.f32 %v155, %v277
  %v291 = vmul.f32 %v156, %v277
  %v292 = vmul.f32 %v157, %v277
  %v293 = vmul.f32 %v158, %v277
  %v294 = vmul.f32 %v159, %v277
  %v295 = vmul.f32 %v160, %v277
  %v296 = vmul.f32 %v161, %v277
  %v297 = vmul.f32 %v162, %v277
  %v298 = vmul.f32 %v163, %v277
  %v299 = vmul.f32 %v164, %v277
  %v300 = vmul.f32 %v165, %v277
  %v301 = vmul.f32 %v166, %v277
  %v302 = vmul.f32 %v167, %v277
  %v303 = vmul.f32 %v168, %v277
  %v304 = vmul.f32 %v169, %v277
  %v305 = vmul.f32 %v170, %v277
  %v306 = vmul.f32 %v171, %v277
  %v307 = vmul.f32 %v172, %v277
  %v308 = vmul.f32 %v173, %v277
  %v309 = vmul.f32 %v174, %v277
  %v310 = vmul.f32 %v175, %v277
  %v311 = vmul.f32 %v176, %v277
  %v312 = vmul.f32 %v177, %v277
  %v313 = vmul.f32 %v178, %v277
  %v314 = vmul.f32 %v179, %v277
  %v315 = vmul.f32 %v180, %v277
  %v316 = vmul.f32 %v181, %v277
  %v317 = vmul.f32 %v182, %v277
  %v318 = vmul.f32 %v183, %v277
  %v319 = vmul.f32 %v184, %v277
  %v320 = vmul.f32 %v185, %v277
  %v321 = vmul.f32 %v186, %v277
  %v322 = vmul.f32 %v187, %v277
  %v323 = vmul.f32 %v188, %v277
  %v324 = vmul.f32 %v189, %v277
  %v325 = vmul.f32 %v190, %v277
  %v326 = vmul.f32 %v191, %v277
  %v327 = vmul.f32 %v192, %v277
  %v328 = vmul.f32 %v193, %v277
  %v329 = vmul.f32 %v194, %v277
  %v330 = vmul.f32 %v195, %v277
  %v331 = vmul.f32 %v196, %v277
  %v332 = vmul.f32 %v197, %v277
  %v333 = vmul.f32 %v198, %v277
  %v334 = vmul.f32 %v199, %v277
  %v335 = vmul.f32 %v200, %v277
  %v336 = vmul.f32 %v201, %v277
  %v337 = vmul.f32 %v202, %v277
  %v338 = vmul.f32 %v203, %v277
  %v339 = vmul.f32 %v204, %v277
  %v340 = vmul.f32 %v205, %v277
  %v341 = vmul.f32 %v206, %v277
  %v342 = vmul.f32 %v207, %v277
  %v343 = vmul.f32 %v208, %v277
  %v344 = vmul.f32 %v209, %v277
  %v345 = vmul.f32 %v210, %v277
  %v346 = vmul.f32 %v211, %v277
  %v347 = vmul.f32 %v212, %v277
  %v348 = vmul.f32 %v213, %v277
  %v349 = vmul.f32 %v214, %v277
  %v350 = vmul.f32 %v215, %v277
  %v351 = vmul.f32 %v216, %v277
  %v352 = vmul.f32 %v217, %v277
  %v353 = vmul.f32 %v218, %v277
  %v354 = vmul.f32 %v219, %v277
  %v355 = vmul.f32 %v220, %v277
  %v356 = vmul.f32 %v221, %v277
  %v357 = vmul.f32 %v222, %v277
  %v358 = vmul.f32 %v223, %v277
  %v359 = vmul.f32 %v224, %v277
  %v360 = vmul.f32 %v225, %v277
  %v361 = vmul.f32 %v226, %v277
  %v362 = vmul.f32 %v227, %v277
  %v363 = vmul.f32 %v228, %v277
  %v364 = vmul.f32 %v229, %v277
  %v365 = vmul.f32 %v230, %v277
  %v366 = vmul.f32 %v231, %v277
  %v367 = vmul.f32 %v232, %v277
  %v368 = vmul.f32 %v233, %v277
  %v369 = vmul.f32 %v234, %v277
  %v370 = vmul.f32 %v235, %v277
  %v371 = vmul.f32 %v236, %v277
  %v372 = vmul.f32 %v237, %v277
  %v373 = vmul.f32 %v238, %v277
  %v374 = vmul.f32 %v239, %v277
  %v375 = vmul.f32 %v240, %v277
  %v376 = vmul.f32 %v241, %v277
  %v377 = vmul.f32 %v242, %v277
  %v378 = vmul.f32 %v243, %v277
  %v379 = vmul.f32 %v244, %v277
  %v380 = vmul.f32 %v245, %v277
  %v381 = vmul.f32 %v246, %v277
  %v382 = vmul.f32 %v247, %v277
  %v383 = vmul.f32 %v248, %v277
  %v384 = vmul.f32 %v249, %v277
  %v385 = vmul.f32 %v250, %v277
  %v386 = vmul.f32 %v251, %v277
  %v387 = vmul.f32 %v252, %v277
  %v388 = vmul.f32 %v253, %v277
  %v389 = vmul.f32 %v254, %v277
  %v390 = vmul.f32 %v255, %v277
  %v391 = vmul.f32 %v256, %v277
  %v392 = vmul.f32 %v257, %v277
  %v393 = vmul.f32 %v258, %v277
  %v394 = vmul.f32 %v259, %v277
  %v395 = vmul.f32 %v260, %v277
  %v396 = vmul.f32 %v261, %v277
  %v397 = vmul.f32 %v262, %v277
  %v398 = vmul.f32 %v263, %v277
  %v399 = vmul.f32 %v264, %v277
  %v400 = vmul.f32 %v265, %v277
  %v401 = vmul.f32 %v266, %v277
  %v402 = vmul.f32 %v267, %v277
  %v403 = vmul.f32 %v268, %v277
  %v404 = vmul.f32 %v269, %v277
  %v405 = vmul.f32 %v270, %v277
  %v406 = vmul.f32 %v271, %v277
  %v407 = vld [vmem:[%s3] sm:$0x1]
  %v409 = vlaneseq
  %v410 = vshrl.u32 %v409, 7
  %v411 = vsub.s32 0, %v410
  %v412 = vrot.slane %v407, %v411
  %v414 = vadd.f32 %v279, %v412
  %v415 = vadd.f32 %v280, %v412
  %v416 = vadd.f32 %v281, %v412
  %v417 = vadd.f32 %v282, %v412
  %v418 = vadd.f32 %v283, %v412
  %v419 = vadd.f32 %v284, %v412
  %v420 = vadd.f32 %v285, %v412
  %v421 = vadd.f32 %v286, %v412
  %v422 = vadd.f32 %v287, %v412
  %v423 = vadd.f32 %v288, %v412
  %v424 = vadd.f32 %v289, %v412
  %v425 = vadd.f32 %v290, %v412
  %v426 = vadd.f32 %v291, %v412
  %v427 = vadd.f32 %v292, %v412
  %v428 = vadd.f32 %v293, %v412
  %v429 = vadd.f32 %v294, %v412
  %v430 = vadd.f32 %v295, %v412
  %v431 = vadd.f32 %v296, %v412
  %v432 = vadd.f32 %v297, %v412
  %v433 = vadd.f32 %v298, %v412
  %v434 = vadd.f32 %v299, %v412
  %v435 = vadd.f32 %v300, %v412
  %v436 = vadd.f32 %v301, %v412
  %v437 = vadd.f32 %v302, %v412
  %v438 = vadd.f32 %v303, %v412
  %v439 = vadd.f32 %v304, %v412
  %v440 = vadd.f32 %v305, %v412
  %v441 = vadd.f32 %v306, %v412
  %v442 = vadd.f32 %v307, %v412
  %v443 = vadd.f32 %v308, %v412
  %v444 = vadd.f32 %v309, %v412
  %v445 = vadd.f32 %v310, %v412
  %v446 = vadd.f32 %v311, %v412
  %v447 = vadd.f32 %v312, %v412
  %v448 = vadd.f32 %v313, %v412
  %v449 = vadd.f32 %v314, %v412
  %v450 = vadd.f32 %v315, %v412
  %v451 = vadd.f32 %v316, %v412
  %v452 = vadd.f32 %v317, %v412
  %v453 = vadd.f32 %v318, %v412
  %v454 = vadd.f32 %v319, %v412
  %v455 = vadd.f32 %v320, %v412
  %v456 = vadd.f32 %v321, %v412
  %v457 = vadd.f32 %v322, %v412
  %v458 = vadd.f32 %v323, %v412
  %v459 = vadd.f32 %v324, %v412
  %v460 = vadd.f32 %v325, %v412
  %v461 = vadd.f32 %v326, %v412
  %v462 = vadd.f32 %v327, %v412
  %v463 = vadd.f32 %v328, %v412
  %v464 = vadd.f32 %v329, %v412
  %v465 = vadd.f32 %v330, %v412
  %v466 = vadd.f32 %v331, %v412
  %v467 = vadd.f32 %v332, %v412
  %v468 = vadd.f32 %v333, %v412
  %v469 = vadd.f32 %v334, %v412
  %v470 = vadd.f32 %v335, %v412
  %v471 = vadd.f32 %v336, %v412
  %v472 = vadd.f32 %v337, %v412
  %v473 = vadd.f32 %v338, %v412
  %v474 = vadd.f32 %v339, %v412
  %v475 = vadd.f32 %v340, %v412
  %v476 = vadd.f32 %v341, %v412
  %v477 = vadd.f32 %v342, %v412
  %v478 = vadd.f32 %v343, %v412
  %v479 = vadd.f32 %v344, %v412
  %v480 = vadd.f32 %v345, %v412
  %v481 = vadd.f32 %v346, %v412
  %v482 = vadd.f32 %v347, %v412
  %v483 = vadd.f32 %v348, %v412
  %v484 = vadd.f32 %v349, %v412
  %v485 = vadd.f32 %v350, %v412
  %v486 = vadd.f32 %v351, %v412
  %v487 = vadd.f32 %v352, %v412
  %v488 = vadd.f32 %v353, %v412
  %v489 = vadd.f32 %v354, %v412
  %v490 = vadd.f32 %v355, %v412
  %v491 = vadd.f32 %v356, %v412
  %v492 = vadd.f32 %v357, %v412
  %v493 = vadd.f32 %v358, %v412
  %v494 = vadd.f32 %v359, %v412
  %v495 = vadd.f32 %v360, %v412
  %v496 = vadd.f32 %v361, %v412
  %v497 = vadd.f32 %v362, %v412
  %v498 = vadd.f32 %v363, %v412
  %v499 = vadd.f32 %v364, %v412
  %v500 = vadd.f32 %v365, %v412
  %v501 = vadd.f32 %v366, %v412
  %v502 = vadd.f32 %v367, %v412
  %v503 = vadd.f32 %v368, %v412
  %v504 = vadd.f32 %v369, %v412
  %v505 = vadd.f32 %v370, %v412
  %v506 = vadd.f32 %v371, %v412
  %v507 = vadd.f32 %v372, %v412
  %v508 = vadd.f32 %v373, %v412
  %v509 = vadd.f32 %v374, %v412
  %v510 = vadd.f32 %v375, %v412
  %v511 = vadd.f32 %v376, %v412
  %v512 = vadd.f32 %v377, %v412
  %v513 = vadd.f32 %v378, %v412
  %v514 = vadd.f32 %v379, %v412
  %v515 = vadd.f32 %v380, %v412
  %v516 = vadd.f32 %v381, %v412
  %v517 = vadd.f32 %v382, %v412
  %v518 = vadd.f32 %v383, %v412
  %v519 = vadd.f32 %v384, %v412
  %v520 = vadd.f32 %v385, %v412
  %v521 = vadd.f32 %v386, %v412
  %v522 = vadd.f32 %v387, %v412
  %v523 = vadd.f32 %v388, %v412
  %v524 = vadd.f32 %v389, %v412
  %v525 = vadd.f32 %v390, %v412
  %v526 = vadd.f32 %v391, %v412
  %v527 = vadd.f32 %v392, %v412
  %v528 = vadd.f32 %v393, %v412
  %v529 = vadd.f32 %v394, %v412
  %v530 = vadd.f32 %v395, %v412
  %v531 = vadd.f32 %v396, %v412
  %v532 = vadd.f32 %v397, %v412
  %v533 = vadd.f32 %v398, %v412
  %v534 = vadd.f32 %v399, %v412
  %v535 = vadd.f32 %v400, %v412
  %v536 = vadd.f32 %v401, %v412
  %v537 = vadd.f32 %v402, %v412
  %v538 = vadd.f32 %v403, %v412
  %v539 = vadd.f32 %v404, %v412
  %v540 = vadd.f32 %v405, %v412
  %v541 = vadd.f32 %v406, %v412
  %v542 = vmax.f32 %v414, 0.0
  %v543 = vmax.f32 %v415, 0.0
  %v544 = vmax.f32 %v416, 0.0
  %v545 = vmax.f32 %v417, 0.0
  %v546 = vmax.f32 %v418, 0.0
  %v547 = vmax.f32 %v419, 0.0
  %v548 = vmax.f32 %v420, 0.0
  %v549 = vmax.f32 %v421, 0.0
  %v550 = vmax.f32 %v422, 0.0
  %v551 = vmax.f32 %v423, 0.0
  %v552 = vmax.f32 %v424, 0.0
  %v553 = vmax.f32 %v425, 0.0
  %v554 = vmax.f32 %v426, 0.0
  %v555 = vmax.f32 %v427, 0.0
  %v556 = vmax.f32 %v428, 0.0
  %v557 = vmax.f32 %v429, 0.0
  %v558 = vmax.f32 %v430, 0.0
  %v559 = vmax.f32 %v431, 0.0
  %v560 = vmax.f32 %v432, 0.0
  %v561 = vmax.f32 %v433, 0.0
  %v562 = vmax.f32 %v434, 0.0
  %v563 = vmax.f32 %v435, 0.0
  %v564 = vmax.f32 %v436, 0.0
  %v565 = vmax.f32 %v437, 0.0
  %v566 = vmax.f32 %v438, 0.0
  %v567 = vmax.f32 %v439, 0.0
  %v568 = vmax.f32 %v440, 0.0
  %v569 = vmax.f32 %v441, 0.0
  %v570 = vmax.f32 %v442, 0.0
  %v571 = vmax.f32 %v443, 0.0
  %v572 = vmax.f32 %v444, 0.0
  %v573 = vmax.f32 %v445, 0.0
  %v574 = vmax.f32 %v446, 0.0
  %v575 = vmax.f32 %v447, 0.0
  %v576 = vmax.f32 %v448, 0.0
  %v577 = vmax.f32 %v449, 0.0
  %v578 = vmax.f32 %v450, 0.0
  %v579 = vmax.f32 %v451, 0.0
  %v580 = vmax.f32 %v452, 0.0
  %v581 = vmax.f32 %v453, 0.0
  %v582 = vmax.f32 %v454, 0.0
  %v583 = vmax.f32 %v455, 0.0
  %v584 = vmax.f32 %v456, 0.0
  %v585 = vmax.f32 %v457, 0.0
  %v586 = vmax.f32 %v458, 0.0
  %v587 = vmax.f32 %v459, 0.0
  %v588 = vmax.f32 %v460, 0.0
  %v589 = vmax.f32 %v461, 0.0
  %v590 = vmax.f32 %v462, 0.0
  %v591 = vmax.f32 %v463, 0.0
  %v592 = vmax.f32 %v464, 0.0
  %v593 = vmax.f32 %v465, 0.0
  %v594 = vmax.f32 %v466, 0.0
  %v595 = vmax.f32 %v467, 0.0
  %v596 = vmax.f32 %v468, 0.0
  %v597 = vmax.f32 %v469, 0.0
  %v598 = vmax.f32 %v470, 0.0
  %v599 = vmax.f32 %v471, 0.0
  %v600 = vmax.f32 %v472, 0.0
  %v601 = vmax.f32 %v473, 0.0
  %v602 = vmax.f32 %v474, 0.0
  %v603 = vmax.f32 %v475, 0.0
  %v604 = vmax.f32 %v476, 0.0
  %v605 = vmax.f32 %v477, 0.0
  %v606 = vmax.f32 %v478, 0.0
  %v607 = vmax.f32 %v479, 0.0
  %v608 = vmax.f32 %v480, 0.0
  %v609 = vmax.f32 %v481, 0.0
  %v610 = vmax.f32 %v482, 0.0
  %v611 = vmax.f32 %v483, 0.0
  %v612 = vmax.f32 %v484, 0.0
  %v613 = vmax.f32 %v485, 0.0
  %v614 = vmax.f32 %v486, 0.0
  %v615 = vmax.f32 %v487, 0.0
  %v616 = vmax.f32 %v488, 0.0
  %v617 = vmax.f32 %v489, 0.0
  %v618 = vmax.f32 %v490, 0.0
  %v619 = vmax.f32 %v491, 0.0
  %v620 = vmax.f32 %v492, 0.0
  %v621 = vmax.f32 %v493, 0.0
  %v622 = vmax.f32 %v494, 0.0
  %v623 = vmax.f32 %v495, 0.0
  %v624 = vmax.f32 %v496, 0.0
  %v625 = vmax.f32 %v497, 0.0
  %v626 = vmax.f32 %v498, 0.0
  %v627 = vmax.f32 %v499, 0.0
  %v628 = vmax.f32 %v500, 0.0
  %v629 = vmax.f32 %v501, 0.0
  %v630 = vmax.f32 %v502, 0.0
  %v631 = vmax.f32 %v503, 0.0
  %v632 = vmax.f32 %v504, 0.0
  %v633 = vmax.f32 %v505, 0.0
  %v634 = vmax.f32 %v506, 0.0
  %v635 = vmax.f32 %v507, 0.0
  %v636 = vmax.f32 %v508, 0.0
  %v637 = vmax.f32 %v509, 0.0
  %v638 = vmax.f32 %v510, 0.0
  %v639 = vmax.f32 %v511, 0.0
  %v640 = vmax.f32 %v512, 0.0
  %v641 = vmax.f32 %v513, 0.0
  %v642 = vmax.f32 %v514, 0.0
  %v643 = vmax.f32 %v515, 0.0
  %v644 = vmax.f32 %v516, 0.0
  %v645 = vmax.f32 %v517, 0.0
  %v646 = vmax.f32 %v518, 0.0
  %v647 = vmax.f32 %v519, 0.0
  %v648 = vmax.f32 %v520, 0.0
  %v649 = vmax.f32 %v521, 0.0
  %v650 = vmax.f32 %v522, 0.0
  %v651 = vmax.f32 %v523, 0.0
  %v652 = vmax.f32 %v524, 0.0
  %v653 = vmax.f32 %v525, 0.0
  %v654 = vmax.f32 %v526, 0.0
  %v655 = vmax.f32 %v527, 0.0
  %v656 = vmax.f32 %v528, 0.0
  %v657 = vmax.f32 %v529, 0.0
  %v658 = vmax.f32 %v530, 0.0
  %v659 = vmax.f32 %v531, 0.0
  %v660 = vmax.f32 %v532, 0.0
  %v661 = vmax.f32 %v533, 0.0
  %v662 = vmax.f32 %v534, 0.0
  %v663 = vmax.f32 %v535, 0.0
  %v664 = vmax.f32 %v536, 0.0
  %v665 = vmax.f32 %v537, 0.0
  %v666 = vmax.f32 %v538, 0.0
  %v667 = vmax.f32 %v539, 0.0
  %v668 = vmax.f32 %v540, 0.0
  %v669 = vmax.f32 %v541, 0.0
  %v670 = vlaneseq
  %v671 = vshrl.u32 %v670, 7
  %v672 = vadd.s32 %v671, 8
  %v673 = vadd.s32 %v671, 16
  %v674 = vadd.s32 %v671, 24
  %v675 = vadd.s32 %v671, 32
  %v676 = vadd.s32 %v671, 40
  %v677 = vadd.s32 %v671, 48
  %v678 = vadd.s32 %v671, 56
  %v679 = vadd.s32 %v671, 64
  %v680 = vadd.s32 %v671, 72
  %v681 = vadd.s32 %v671, 80
  %v682 = vadd.s32 %v671, 88
  %v683 = vadd.s32 %v671, 96
  %v684 = vadd.s32 %v671, 104
  %v685 = vadd.s32 %v671, 112
  %v686 = vadd.s32 %v671, 120
  %v687 = vadd.s32 %v671, 128
  %v688 = vadd.s32 %v671, 136
  %v689 = vadd.s32 %v671, 144
  %v690 = vadd.s32 %v671, 152
  %v691 = vadd.s32 %v671, 160
  %v692 = vadd.s32 %v671, 168
  %v693 = vadd.s32 %v671, 176
  %v694 = vadd.s32 %v671, 184
  %v695 = vadd.s32 %v671, 192
  %v696 = vadd.s32 %v671, 200
  %v697 = vadd.s32 %v671, 208
  %v698 = vadd.s32 %v671, 216
  %v699 = vadd.s32 %v671, 224
  %v700 = vadd.s32 %v671, 232
  %v701 = vadd.s32 %v671, 240
  %v702 = vadd.s32 %v671, 248
  %v703 = vadd.s32 %v671, 256
  %v704 = vadd.s32 %v671, 264
  %v705 = vadd.s32 %v671, 272
  %v706 = vadd.s32 %v671, 280
  %v707 = vadd.s32 %v671, 288
  %v708 = vadd.s32 %v671, 296
  %v709 = vadd.s32 %v671, 304
  %v710 = vadd.s32 %v671, 312
  %v711 = vadd.s32 %v671, 320
  %v712 = vadd.s32 %v671, 328
  %v713 = vadd.s32 %v671, 336
  %v714 = vadd.s32 %v671, 344
  %v715 = vadd.s32 %v671, 352
  %v716 = vadd.s32 %v671, 360
  %v717 = vadd.s32 %v671, 368
  %v718 = vadd.s32 %v671, 376
  %v719 = vadd.s32 %v671, 384
  %v720 = vadd.s32 %v671, 392
  %v721 = vadd.s32 %v671, 400
  %v722 = vadd.s32 %v671, 408
  %v723 = vadd.s32 %v671, 416
  %v724 = vadd.s32 %v671, 424
  %v725 = vadd.s32 %v671, 432
  %v726 = vadd.s32 %v671, 440
  %v727 = vadd.s32 %v671, 448
  %v728 = vadd.s32 %v671, 456
  %v729 = vadd.s32 %v671, 464
  %v730 = vadd.s32 %v671, 472
  %v731 = vadd.s32 %v671, 480
  %v732 = vadd.s32 %v671, 488
  %v733 = vadd.s32 %v671, 496
  %v734 = vadd.s32 %v671, 504
  %v735 = vadd.s32 %v671, 512
  %v736 = vadd.s32 %v671, 520
  %v737 = vadd.s32 %v671, 528
  %v738 = vadd.s32 %v671, 536
  %v739 = vadd.s32 %v671, 544
  %v740 = vadd.s32 %v671, 552
  %v741 = vadd.s32 %v671, 560
  %v742 = vadd.s32 %v671, 568
  %v743 = vadd.s32 %v671, 576
  %v744 = vadd.s32 %v671, 584
  %v745 = vadd.s32 %v671, 592
  %v746 = vadd.s32 %v671, 600
  %v747 = vadd.s32 %v671, 608
  %v748 = vadd.s32 %v671, 616
  %v749 = vadd.s32 %v671, 624
  %v750 = vadd.s32 %v671, 632
  %v751 = vadd.s32 %v671, 640
  %v752 = vadd.s32 %v671, 648
  %v753 = vadd.s32 %v671, 656
  %v754 = vadd.s32 %v671, 664
  %v755 = vadd.s32 %v671, 672
  %v756 = vadd.s32 %v671, 680
  %v757 = vadd.s32 %v671, 688
  %v758 = vadd.s32 %v671, 696
  %v759 = vadd.s32 %v671, 704
  %v760 = vadd.s32 %v671, 712
  %v761 = vadd.s32 %v671, 720
  %v762 = vadd.s32 %v671, 728
  %v763 = vadd.s32 %v671, 736
  %v764 = vadd.s32 %v671, 744
  %v765 = vadd.s32 %v671, 752
  %v766 = vadd.s32 %v671, 760
  %v767 = vadd.s32 %v671, 768
  %v768 = vadd.s32 %v671, 776
  %v769 = vadd.s32 %v671, 784
  %v770 = vadd.s32 %v671, 792
  %v771 = vadd.s32 %v671, 800
  %v772 = vadd.s32 %v671, 808
  %v773 = vadd.s32 %v671, 816
  %v774 = vadd.s32 %v671, 824
  %v775 = vadd.s32 %v671, 832
  %v776 = vadd.s32 %v671, 840
  %v777 = vadd.s32 %v671, 848
  %v778 = vadd.s32 %v671, 856
  %v779 = vadd.s32 %v671, 864
  %v780 = vadd.s32 %v671, 872
  %v781 = vadd.s32 %v671, 880
  %v782 = vadd.s32 %v671, 888
  %v783 = vadd.s32 %v671, 896
  %v784 = vadd.s32 %v671, 904
  %v785 = vadd.s32 %v671, 912
  %v786 = vadd.s32 %v671, 920
  %v787 = vadd.s32 %v671, 928
  %v788 = vadd.s32 %v671, 936
  %v789 = vadd.s32 %v671, 944
  %v790 = vadd.s32 %v671, 952
  %v791 = vadd.s32 %v671, 960
  %v792 = vadd.s32 %v671, 968
  %v793 = vadd.s32 %v671, 976
  %v794 = vadd.s32 %v671, 984
  %v795 = vadd.s32 %v671, 992
  %v796 = vadd.s32 %v671, 1000
  %v797 = vadd.s32 %v671, 1008
  %v798 = vadd.s32 %v671, 1016
  %s799 = smul.u32 0, 1024
  %v800 = vstv %s799
  %v801 = vadd.s32 %v671, %v800
  %v802 = vadd.s32 %v672, %v800
  %v803 = vadd.s32 %v673, %v800
  %v804 = vadd.s32 %v674, %v800
  %v805 = vadd.s32 %v675, %v800
  %v806 = vadd.s32 %v676, %v800
  %v807 = vadd.s32 %v677, %v800
  %v808 = vadd.s32 %v678, %v800
  %v809 = vadd.s32 %v679, %v800
  %v810 = vadd.s32 %v680, %v800
  %v811 = vadd.s32 %v681, %v800
  %v812 = vadd.s32 %v682, %v800
  %v813 = vadd.s32 %v683, %v800
  %v814 = vadd.s32 %v684, %v800
  %v815 = vadd.s32 %v685, %v800
  %v816 = vadd.s32 %v686, %v800
  %v817 = vadd.s32 %v687, %v800
  %v818 = vadd.s32 %v688, %v800
  %v819 = vadd.s32 %v689, %v800
  %v820 = vadd.s32 %v690, %v800
  %v821 = vadd.s32 %v691, %v800
  %v822 = vadd.s32 %v692, %v800
  %v823 = vadd.s32 %v693, %v800
  %v824 = vadd.s32 %v694, %v800
  %v825 = vadd.s32 %v695, %v800
  %v826 = vadd.s32 %v696, %v800
  %v827 = vadd.s32 %v697, %v800
  %v828 = vadd.s32 %v698, %v800
  %v829 = vadd.s32 %v699, %v800
  %v830 = vadd.s32 %v700, %v800
  %v831 = vadd.s32 %v701, %v800
  %v832 = vadd.s32 %v702, %v800
  %v833 = vadd.s32 %v703, %v800
  %v834 = vadd.s32 %v704, %v800
  %v835 = vadd.s32 %v705, %v800
  %v836 = vadd.s32 %v706, %v800
  %v837 = vadd.s32 %v707, %v800
  %v838 = vadd.s32 %v708, %v800
  %v839 = vadd.s32 %v709, %v800
  %v840 = vadd.s32 %v710, %v800
  %v841 = vadd.s32 %v711, %v800
  %v842 = vadd.s32 %v712, %v800
  %v843 = vadd.s32 %v713, %v800
  %v844 = vadd.s32 %v714, %v800
  %v845 = vadd.s32 %v715, %v800
  %v846 = vadd.s32 %v716, %v800
  %v847 = vadd.s32 %v717, %v800
  %v848 = vadd.s32 %v718, %v800
  %v849 = vadd.s32 %v719, %v800
  %v850 = vadd.s32 %v720, %v800
  %v851 = vadd.s32 %v721, %v800
  %v852 = vadd.s32 %v722, %v800
  %v853 = vadd.s32 %v723, %v800
  %v854 = vadd.s32 %v724, %v800
  %v855 = vadd.s32 %v725, %v800
  %v856 = vadd.s32 %v726, %v800
  %v857 = vadd.s32 %v727, %v800
  %v858 = vadd.s32 %v728, %v800
  %v859 = vadd.s32 %v729, %v800
  %v860 = vadd.s32 %v730, %v800
  %v861 = vadd.s32 %v731, %v800
  %v862 = vadd.s32 %v732, %v800
  %v863 = vadd.s32 %v733, %v800
  %v864 = vadd.s32 %v734, %v800
  %v865 = vadd.s32 %v735, %v800
  %v866 = vadd.s32 %v736, %v800
  %v867 = vadd.s32 %v737, %v800
  %v868 = vadd.s32 %v738, %v800
  %v869 = vadd.s32 %v739, %v800
  %v870 = vadd.s32 %v740, %v800
  %v871 = vadd.s32 %v741, %v800
  %v872 = vadd.s32 %v742, %v800
  %v873 = vadd.s32 %v743, %v800
  %v874 = vadd.s32 %v744, %v800
  %v875 = vadd.s32 %v745, %v800
  %v876 = vadd.s32 %v746, %v800
  %v877 = vadd.s32 %v747, %v800
  %v878 = vadd.s32 %v748, %v800
  %v879 = vadd.s32 %v749, %v800
  %v880 = vadd.s32 %v750, %v800
  %v881 = vadd.s32 %v751, %v800
  %v882 = vadd.s32 %v752, %v800
  %v883 = vadd.s32 %v753, %v800
  %v884 = vadd.s32 %v754, %v800
  %v885 = vadd.s32 %v755, %v800
  %v886 = vadd.s32 %v756, %v800
  %v887 = vadd.s32 %v757, %v800
  %v888 = vadd.s32 %v758, %v800
  %v889 = vadd.s32 %v759, %v800
  %v890 = vadd.s32 %v760, %v800
  %v891 = vadd.s32 %v761, %v800
  %v892 = vadd.s32 %v762, %v800
  %v893 = vadd.s32 %v763, %v800
  %v894 = vadd.s32 %v764, %v800
  %v895 = vadd.s32 %v765, %v800
  %v896 = vadd.s32 %v766, %v800
  %v897 = vadd.s32 %v767, %v800
  %v898 = vadd.s32 %v768, %v800
  %v899 = vadd.s32 %v769, %v800
  %v900 = vadd.s32 %v770, %v800
  %v901 = vadd.s32 %v771, %v800
  %v902 = vadd.s32 %v772, %v800
  %v903 = vadd.s32 %v773, %v800
  %v904 = vadd.s32 %v774, %v800
  %v905 = vadd.s32 %v775, %v800
  %v906 = vadd.s32 %v776, %v800
  %v907 = vadd.s32 %v777, %v800
  %v908 = vadd.s32 %v778, %v800
  %v909 = vadd.s32 %v779, %v800
  %v910 = vadd.s32 %v780, %v800
  %v911 = vadd.s32 %v781, %v800
  %v912 = vadd.s32 %v782, %v800
  %v913 = vadd.s32 %v783, %v800
  %v914 = vadd.s32 %v784, %v800
  %v915 = vadd.s32 %v785, %v800
  %v916 = vadd.s32 %v786, %v800
  %v917 = vadd.s32 %v787, %v800
  %v918 = vadd.s32 %v788, %v800
  %v919 = vadd.s32 %v789, %v800
  %v920 = vadd.s32 %v790, %v800
  %v921 = vadd.s32 %v791, %v800
  %v922 = vadd.s32 %v792, %v800
  %v923 = vadd.s32 %v793, %v800
  %v924 = vadd.s32 %v794, %v800
  %v925 = vadd.s32 %v795, %v800
  %v926 = vadd.s32 %v796, %v800
  %v927 = vadd.s32 %v797, %v800
  %v928 = vadd.s32 %v798, %v800
  %s929 = sld [smem:[#allocation3]]
  %v930 = vstv %s929
  %vm931 = vcmp.lt.s32.totalorder %v801, %v930
  %vm932 = vcmp.lt.s32.totalorder %v802, %v930
  %vm933 = vcmp.lt.s32.totalorder %v803, %v930
  %vm934 = vcmp.lt.s32.totalorder %v804, %v930
  %vm935 = vcmp.lt.s32.totalorder %v805, %v930
  %vm936 = vcmp.lt.s32.totalorder %v806, %v930
  %vm937 = vcmp.lt.s32.totalorder %v807, %v930
  %vm938 = vcmp.lt.s32.totalorder %v808, %v930
  %vm939 = vcmp.lt.s32.totalorder %v809, %v930
  %vm940 = vcmp.lt.s32.totalorder %v810, %v930
  %vm941 = vcmp.lt.s32.totalorder %v811, %v930
  %vm942 = vcmp.lt.s32.totalorder %v812, %v930
  %vm943 = vcmp.lt.s32.totalorder %v813, %v930
  %vm944 = vcmp.lt.s32.totalorder %v814, %v930
  %vm945 = vcmp.lt.s32.totalorder %v815, %v930
  %vm946 = vcmp.lt.s32.totalorder %v816, %v930
  %vm947 = vcmp.lt.s32.totalorder %v817, %v930
  %vm948 = vcmp.lt.s32.totalorder %v818, %v930
  %vm949 = vcmp.lt.s32.totalorder %v819, %v930
  %vm950 = vcmp.lt.s32.totalorder %v820, %v930
  %vm951 = vcmp.lt.s32.totalorder %v821, %v930
  %vm952 = vcmp.lt.s32.totalorder %v822, %v930
  %vm953 = vcmp.lt.s32.totalorder %v823, %v930
  %vm954 = vcmp.lt.s32.totalorder %v824, %v930
  %vm955 = vcmp.lt.s32.totalorder %v825, %v930
  %vm956 = vcmp.lt.s32.totalorder %v826, %v930
  %vm957 = vcmp.lt.s32.totalorder %v827, %v930
  %vm958 = vcmp.lt.s32.totalorder %v828, %v930
  %vm959 = vcmp.lt.s32.totalorder %v829, %v930
  %vm960 = vcmp.lt.s32.totalorder %v830, %v930
  %vm961 = vcmp.lt.s32.totalorder %v831, %v930
  %vm962 = vcmp.lt.s32.totalorder %v832, %v930
  %vm963 = vcmp.lt.s32.totalorder %v833, %v930
  %vm964 = vcmp.lt.s32.totalorder %v834, %v930
  %vm965 = vcmp.lt.s32.totalorder %v835, %v930
  %vm966 = vcmp.lt.s32.totalorder %v836, %v930
  %vm967 = vcmp.lt.s32.totalorder %v837, %v930
  %vm968 = vcmp.lt.s32.totalorder %v838, %v930
  %vm969 = vcmp.lt.s32.totalorder %v839, %v930
  %vm970 = vcmp.lt.s32.totalorder %v840, %v930
  %vm971 = vcmp.lt.s32.totalorder %v841, %v930
  %vm972 = vcmp.lt.s32.totalorder %v842, %v930
  %vm973 = vcmp.lt.s32.totalorder %v843, %v930
  %vm974 = vcmp.lt.s32.totalorder %v844, %v930
  %vm975 = vcmp.lt.s32.totalorder %v845, %v930
  %vm976 = vcmp.lt.s32.totalorder %v846, %v930
  %vm977 = vcmp.lt.s32.totalorder %v847, %v930
  %vm978 = vcmp.lt.s32.totalorder %v848, %v930
  %vm979 = vcmp.lt.s32.totalorder %v849, %v930
  %vm980 = vcmp.lt.s32.totalorder %v850, %v930
  %vm981 = vcmp.lt.s32.totalorder %v851, %v930
  %vm982 = vcmp.lt.s32.totalorder %v852, %v930
  %vm983 = vcmp.lt.s32.totalorder %v853, %v930
  %vm984 = vcmp.lt.s32.totalorder %v854, %v930
  %vm985 = vcmp.lt.s32.totalorder %v855, %v930
  %vm986 = vcmp.lt.s32.totalorder %v856, %v930
  %vm987 = vcmp.lt.s32.totalorder %v857, %v930
  %vm988 = vcmp.lt.s32.totalorder %v858, %v930
  %vm989 = vcmp.lt.s32.totalorder %v859, %v930
  %vm990 = vcmp.lt.s32.totalorder %v860, %v930
  %vm991 = vcmp.lt.s32.totalorder %v861, %v930
  %vm992 = vcmp.lt.s32.totalorder %v862, %v930
  %vm993 = vcmp.lt.s32.totalorder %v863, %v930
  %vm994 = vcmp.lt.s32.totalorder %v864, %v930
  %vm995 = vcmp.lt.s32.totalorder %v865, %v930
  %vm996 = vcmp.lt.s32.totalorder %v866, %v930
  %vm997 = vcmp.lt.s32.totalorder %v867, %v930
  %vm998 = vcmp.lt.s32.totalorder %v868, %v930
  %vm999 = vcmp.lt.s32.totalorder %v869, %v930
  %vm1000 = vcmp.lt.s32.totalorder %v870, %v930
  %vm1001 = vcmp.lt.s32.totalorder %v871, %v930
  %vm1002 = vcmp.lt.s32.totalorder %v872, %v930
  %vm1003 = vcmp.lt.s32.totalorder %v873, %v930
  %vm1004 = vcmp.lt.s32.totalorder %v874, %v930
  %vm1005 = vcmp.lt.s32.totalorder %v875, %v930
  %vm1006 = vcmp.lt.s32.totalorder %v876, %v930
  %vm1007 = vcmp.lt.s32.totalorder %v877, %v930
  %vm1008 = vcmp.lt.s32.totalorder %v878, %v930
  %vm1009 = vcmp.lt.s32.totalorder %v879, %v930
  %vm1010 = vcmp.lt.s32.totalorder %v880, %v930
  %vm1011 = vcmp.lt.s32.totalorder %v881, %v930
  %vm1012 = vcmp.lt.s32.totalorder %v882, %v930
  %vm1013 = vcmp.lt.s32.totalorder %v883, %v930
  %vm1014 = vcmp.lt.s32.totalorder %v884, %v930
  %vm1015 = vcmp.lt.s32.totalorder %v885, %v930
  %vm1016 = vcmp.lt.s32.totalorder %v886, %v930
  %vm1017 = vcmp.lt.s32.totalorder %v887, %v930
  %vm1018 = vcmp.lt.s32.totalorder %v888, %v930
  %vm1019 = vcmp.lt.s32.totalorder %v889, %v930
  %vm1020 = vcmp.lt.s32.totalorder %v890, %v930
  %vm1021 = vcmp.lt.s32.totalorder %v891, %v930
  %vm1022 = vcmp.lt.s32.totalorder %v892, %v930
  %vm1023 = vcmp.lt.s32.totalorder %v893, %v930
  %vm1024 = vcmp.lt.s32.totalorder %v894, %v930
  %vm1025 = vcmp.lt.s32.totalorder %v895, %v930
  %vm1026 = vcmp.lt.s32.totalorder %v896, %v930
  %vm1027 = vcmp.lt.s32.totalorder %v897, %v930
  %vm1028 = vcmp.lt.s32.totalorder %v898, %v930
  %vm1029 = vcmp.lt.s32.totalorder %v899, %v930
  %vm1030 = vcmp.lt.s32.totalorder %v900, %v930
  %vm1031 = vcmp.lt.s32.totalorder %v901, %v930
  %vm1032 = vcmp.lt.s32.totalorder %v902, %v930
  %vm1033 = vcmp.lt.s32.totalorder %v903, %v930
  %vm1034 = vcmp.lt.s32.totalorder %v904, %v930
  %vm1035 = vcmp.lt.s32.totalorder %v905, %v930
  %vm1036 = vcmp.lt.s32.totalorder %v906, %v930
  %vm1037 = vcmp.lt.s32.totalorder %v907, %v930
  %vm1038 = vcmp.lt.s32.totalorder %v908, %v930
  %vm1039 = vcmp.lt.s32.totalorder %v909, %v930
  %vm1040 = vcmp.lt.s32.totalorder %v910, %v930
  %vm1041 = vcmp.lt.s32.totalorder %v911, %v930
  %vm1042 = vcmp.lt.s32.totalorder %v912, %v930
  %vm1043 = vcmp.lt.s32.totalorder %v913, %v930
  %vm1044 = vcmp.lt.s32.totalorder %v914, %v930
  %vm1045 = vcmp.lt.s32.totalorder %v915, %v930
  %vm1046 = vcmp.lt.s32.totalorder %v916, %v930
  %vm1047 = vcmp.lt.s32.totalorder %v917, %v930
  %vm1048 = vcmp.lt.s32.totalorder %v918, %v930
  %vm1049 = vcmp.lt.s32.totalorder %v919, %v930
  %vm1050 = vcmp.lt.s32.totalorder %v920, %v930
  %vm1051 = vcmp.lt.s32.totalorder %v921, %v930
  %vm1052 = vcmp.lt.s32.totalorder %v922, %v930
  %vm1053 = vcmp.lt.s32.totalorder %v923, %v930
  %vm1054 = vcmp.lt.s32.totalorder %v924, %v930
  %vm1055 = vcmp.lt.s32.totalorder %v925, %v930
  %vm1056 = vcmp.lt.s32.totalorder %v926, %v930
  %vm1057 = vcmp.lt.s32.totalorder %v927, %v930
  %vm1058 = vcmp.lt.s32.totalorder %v928, %v930
  %v1059 = vsel %vm931, %v542, 0.0
  %v1060 = vsel %vm932, %v543, 0.0
  %v1061 = vsel %vm933, %v544, 0.0
  %v1062 = vsel %vm934, %v545, 0.0
  %v1063 = vsel %vm935, %v546, 0.0
  %v1064 = vsel %vm936, %v547, 0.0
  %v1065 = vsel %vm937, %v548, 0.0
  %v1066 = vsel %vm938, %v549, 0.0
  %v1067 = vsel %vm939, %v550, 0.0
  %v1068 = vsel %vm940, %v551, 0.0
  %v1069 = vsel %vm941, %v552, 0.0
  %v1070 = vsel %vm942, %v553, 0.0
  %v1071 = vsel %vm943, %v554, 0.0
  %v1072 = vsel %vm944, %v555, 0.0
  %v1073 = vsel %vm945, %v556, 0.0
  %v1074 = vsel %vm946, %v557, 0.0
  %v1075 = vsel %vm947, %v558, 0.0
  %v1076 = vsel %vm948, %v559, 0.0
  %v1077 = vsel %vm949, %v560, 0.0
  %v1078 = vsel %vm950, %v561, 0.0
  %v1079 = vsel %vm951, %v562, 0.0
  %v1080 = vsel %vm952, %v563, 0.0
  %v1081 = vsel %vm953, %v564, 0.0
  %v1082 = vsel %vm954, %v565, 0.0
  %v1083 = vsel %vm955, %v566, 0.0
  %v1084 = vsel %vm956, %v567, 0.0
  %v1085 = vsel %vm957, %v568, 0.0
  %v1086 = vsel %vm958, %v569, 0.0
  %v1087 = vsel %vm959, %v570, 0.0
  %v1088 = vsel %vm960, %v571, 0.0
  %v1089 = vsel %vm961, %v572, 0.0
  %v1090 = vsel %vm962, %v573, 0.0
  %v1091 = vsel %vm963, %v574, 0.0
  %v1092 = vsel %vm964, %v575, 0.0
  %v1093 = vsel %vm965, %v576, 0.0
  %v1094 = vsel %vm966, %v577, 0.0
  %v1095 = vsel %vm967, %v578, 0.0
  %v1096 = vsel %vm968, %v579, 0.0
  %v1097 = vsel %vm969, %v580, 0.0
  %v1098 = vsel %vm970, %v581, 0.0
  %v1099 = vsel %vm971, %v582, 0.0
  %v1100 = vsel %vm972, %v583, 0.0
  %v1101 = vsel %vm973, %v584, 0.0
  %v1102 = vsel %vm974, %v585, 0.0
  %v1103 = vsel %vm975, %v586, 0.0
  %v1104 = vsel %vm976, %v587, 0.0
  %v1105 = vsel %vm977, %v588, 0.0
  %v1106 = vsel %vm978, %v589, 0.0
  %v1107 = vsel %vm979, %v590, 0.0
  %v1108 = vsel %vm980, %v591, 0.0
  %v1109 = vsel %vm981, %v592, 0.0
  %v1110 = vsel %vm982, %v593, 0.0
  %v1111 = vsel %vm983, %v594, 0.0
  %v1112 = vsel %vm984, %v595, 0.0
  %v1113 = vsel %vm985, %v596, 0.0
  %v1114 = vsel %vm986, %v597, 0.0
  %v1115 = vsel %vm987, %v598, 0.0
  %v1116 = vsel %vm988, %v599, 0.0
  %v1117 = vsel %vm989, %v600, 0.0
  %v1118 = vsel %vm990, %v601, 0.0
  %v1119 = vsel %vm991, %v602, 0.0
  %v1120 = vsel %vm992, %v603, 0.0
  %v1121 = vsel %vm993, %v604, 0.0
  %v1122 = vsel %vm994, %v605, 0.0
  %v1123 = vsel %vm995, %v606, 0.0
  %v1124 = vsel %vm996, %v607, 0.0
  %v1125 = vsel %vm997, %v608, 0.0
  %v1126 = vsel %vm998, %v609, 0.0
  %v1127 = vsel %vm999, %v610, 0.0
  %v1128 = vsel %vm1000, %v611, 0.0
  %v1129 = vsel %vm1001, %v612, 0.0
  %v1130 = vsel %vm1002, %v613, 0.0
  %v1131 = vsel %vm1003, %v614, 0.0
  %v1132 = vsel %vm1004, %v615, 0.0
  %v1133 = vsel %vm1005, %v616, 0.0
  %v1134 = vsel %vm1006, %v617, 0.0
  %v1135 = vsel %vm1007, %v618, 0.0
  %v1136 = vsel %vm1008, %v619, 0.0
  %v1137 = vsel %vm1009, %v620, 0.0
  %v1138 = vsel %vm1010, %v621, 0.0
  %v1139 = vsel %vm1011, %v622, 0.0
  %v1140 = vsel %vm1012, %v623, 0.0
  %v1141 = vsel %vm1013, %v624, 0.0
  %v1142 = vsel %vm1014, %v625, 0.0
  %v1143 = vsel %vm1015, %v626, 0.0
  %v1144 = vsel %vm1016, %v627, 0.0
  %v1145 = vsel %vm1017, %v628, 0.0
  %v1146 = vsel %vm1018, %v629, 0.0
  %v1147 = vsel %vm1019, %v630, 0.0
  %v1148 = vsel %vm1020, %v631, 0.0
  %v1149 = vsel %vm1021, %v632, 0.0
  %v1150 = vsel %vm1022, %v633, 0.0
  %v1151 = vsel %vm1023, %v634, 0.0
  %v1152 = vsel %vm1024, %v635, 0.0
  %v1153 = vsel %vm1025, %v636, 0.0
  %v1154 = vsel %vm1026, %v637, 0.0
  %v1155 = vsel %vm1027, %v638, 0.0
  %v1156 = vsel %vm1028, %v639, 0.0
  %v1157 = vsel %vm1029, %v640, 0.0
  %v1158 = vsel %vm1030, %v641, 0.0
  %v1159 = vsel %vm1031, %v642, 0.0
  %v1160 = vsel %vm1032, %v643, 0.0
  %v1161 = vsel %vm1033, %v644, 0.0
  %v1162 = vsel %vm1034, %v645, 0.0
  %v1163 = vsel %vm1035, %v646, 0.0
  %v1164 = vsel %vm1036, %v647, 0.0
  %v1165 = vsel %vm1037, %v648, 0.0
  %v1166 = vsel %vm1038, %v649, 0.0
  %v1167 = vsel %vm1039, %v650, 0.0
  %v1168 = vsel %vm1040, %v651, 0.0
  %v1169 = vsel %vm1041, %v652, 0.0
  %v1170 = vsel %vm1042, %v653, 0.0
  %v1171 = vsel %vm1043, %v654, 0.0
  %v1172 = vsel %vm1044, %v655, 0.0
  %v1173 = vsel %vm1045, %v656, 0.0
  %v1174 = vsel %vm1046, %v657, 0.0
  %v1175 = vsel %vm1047, %v658, 0.0
  %v1176 = vsel %vm1048, %v659, 0.0
  %v1177 = vsel %vm1049, %v660, 0.0
  %v1178 = vsel %vm1050, %v661, 0.0
  %v1179 = vsel %vm1051, %v662, 0.0
  %v1180 = vsel %vm1052, %v663, 0.0
  %v1181 = vsel %vm1053, %v664, 0.0
  %v1182 = vsel %vm1054, %v665, 0.0
  %v1183 = vsel %vm1055, %v666, 0.0
  %v1184 = vsel %vm1056, %v667, 0.0
  %v1185 = vsel %vm1057, %v668, 0.0
  %v1186 = vsel %vm1058, %v669, 0.0
  %v1187 = vpack.c.bf16 %v1060, %v1059
  %v1188 = vpack.c.bf16 %v1062, %v1061
  %v1189 = vpack.c.bf16 %v1064, %v1063
  %v1190 = vpack.c.bf16 %v1066, %v1065
  %v1191 = vpack.c.bf16 %v1068, %v1067
  %v1192 = vpack.c.bf16 %v1070, %v1069
  %v1193 = vpack.c.bf16 %v1072, %v1071
  %v1194 = vpack.c.bf16 %v1074, %v1073
  %v1195 = vpack.c.bf16 %v1076, %v1075
  %v1196 = vpack.c.bf16 %v1078, %v1077
  %v1197 = vpack.c.bf16 %v1080, %v1079
  %v1198 = vpack.c.bf16 %v1082, %v1081
  %v1199 = vpack.c.bf16 %v1084, %v1083
  %v1200 = vpack.c.bf16 %v1086, %v1085
  %v1201 = vpack.c.bf16 %v1088, %v1087
  %v1202 = vpack.c.bf16 %v1090, %v1089
  %v1203 = vpack.c.bf16 %v1092, %v1091
  %v1204 = vpack.c.bf16 %v1094, %v1093
  %v1205 = vpack.c.bf16 %v1096, %v1095
  %v1206 = vpack.c.bf16 %v1098, %v1097
  %v1207 = vpack.c.bf16 %v1100, %v1099
  %v1208 = vpack.c.bf16 %v1102, %v1101
  %v1209 = vpack.c.bf16 %v1104, %v1103
  %v1210 = vpack.c.bf16 %v1106, %v1105
  %v1211 = vpack.c.bf16 %v1108, %v1107
  %v1212 = vpack.c.bf16 %v1110, %v1109
  %v1213 = vpack.c.bf16 %v1112, %v1111
  %v1214 = vpack.c.bf16 %v1114, %v1113
  %v1215 = vpack.c.bf16 %v1116, %v1115
  %v1216 = vpack.c.bf16 %v1118, %v1117
  %v1217 = vpack.c.bf16 %v1120, %v1119
  %v1218 = vpack.c.bf16 %v1122, %v1121
  %v1219 = vpack.c.bf16 %v1124, %v1123
  %v1220 = vpack.c.bf16 %v1126, %v1125
  %v1221 = vpack.c.bf16 %v1128, %v1127
  %v1222 = vpack.c.bf16 %v1130, %v1129
  %v1223 = vpack.c.bf16 %v1132, %v1131
  %v1224 = vpack.c.bf16 %v1134, %v1133
  %v1225 = vpack.c.bf16 %v1136, %v1135
  %v1226 = vpack.c.bf16 %v1138, %v1137
  %v1227 = vpack.c.bf16 %v1140, %v1139
  %v1228 = vpack.c.bf16 %v1142, %v1141
  %v1229 = vpack.c.bf16 %v1144, %v1143
  %v1230 = vpack.c.bf16 %v1146, %v1145
  %v1231 = vpack.c.bf16 %v1148, %v1147
  %v1232 = vpack.c.bf16 %v1150, %v1149
  %v1233 = vpack.c.bf16 %v1152, %v1151
  %v1234 = vpack.c.bf16 %v1154, %v1153
  %v1235 = vpack.c.bf16 %v1156, %v1155
  %v1236 = vpack.c.bf16 %v1158, %v1157
  %v1237 = vpack.c.bf16 %v1160, %v1159
  %v1238 = vpack.c.bf16 %v1162, %v1161
  %v1239 = vpack.c.bf16 %v1164, %v1163
  %v1240 = vpack.c.bf16 %v1166, %v1165
  %v1241 = vpack.c.bf16 %v1168, %v1167
  %v1242 = vpack.c.bf16 %v1170, %v1169
  %v1243 = vpack.c.bf16 %v1172, %v1171
  %v1244 = vpack.c.bf16 %v1174, %v1173
  %v1245 = vpack.c.bf16 %v1176, %v1175
  %v1246 = vpack.c.bf16 %v1178, %v1177
  %v1247 = vpack.c.bf16 %v1180, %v1179
  %v1248 = vpack.c.bf16 %v1182, %v1181
  %v1249 = vpack.c.bf16 %v1184, %v1183
  %v1250 = vpack.c.bf16 %v1186, %v1185
  %v1315 = vunpack.c.l.b16 %v1187
  %v1316 = vunpack.c.h.b16 %v1187
  %v1317 = vunpack.c.l.b16 %v1188
  %v1318 = vunpack.c.h.b16 %v1188
  %v1319 = vunpack.c.l.b16 %v1189
  %v1320 = vunpack.c.h.b16 %v1189
  %v1321 = vunpack.c.l.b16 %v1190
  %v1322 = vunpack.c.h.b16 %v1190
  %v1323 = vunpack.c.l.b16 %v1191
  %v1324 = vunpack.c.h.b16 %v1191
  %v1325 = vunpack.c.l.b16 %v1192
  %v1326 = vunpack.c.h.b16 %v1192
  %v1327 = vunpack.c.l.b16 %v1193
  %v1328 = vunpack.c.h.b16 %v1193
  %v1329 = vunpack.c.l.b16 %v1194
  %v1330 = vunpack.c.h.b16 %v1194
  %v1331 = vunpack.c.l.b16 %v1195
  %v1332 = vunpack.c.h.b16 %v1195
  %v1333 = vunpack.c.l.b16 %v1196
  %v1334 = vunpack.c.h.b16 %v1196
  %v1335 = vunpack.c.l.b16 %v1197
  %v1336 = vunpack.c.h.b16 %v1197
  %v1337 = vunpack.c.l.b16 %v1198
  %v1338 = vunpack.c.h.b16 %v1198
  %v1339 = vunpack.c.l.b16 %v1199
  %v1340 = vunpack.c.h.b16 %v1199
  %v1341 = vunpack.c.l.b16 %v1200
  %v1342 = vunpack.c.h.b16 %v1200
  %v1343 = vunpack.c.l.b16 %v1201
  %v1344 = vunpack.c.h.b16 %v1201
  %v1345 = vunpack.c.l.b16 %v1202
  %v1346 = vunpack.c.h.b16 %v1202
  %v1347 = vunpack.c.l.b16 %v1203
  %v1348 = vunpack.c.h.b16 %v1203
  %v1349 = vunpack.c.l.b16 %v1204
  %v1350 = vunpack.c.h.b16 %v1204
  %v1351 = vunpack.c.l.b16 %v1205
  %v1352 = vunpack.c.h.b16 %v1205
  %v1353 = vunpack.c.l.b16 %v1206
  %v1354 = vunpack.c.h.b16 %v1206
  %v1355 = vunpack.c.l.b16 %v1207
  %v1356 = vunpack.c.h.b16 %v1207
  %v1357 = vunpack.c.l.b16 %v1208
  %v1358 = vunpack.c.h.b16 %v1208
  %v1359 = vunpack.c.l.b16 %v1209
  %v1360 = vunpack.c.h.b16 %v1209
  %v1361 = vunpack.c.l.b16 %v1210
  %v1362 = vunpack.c.h.b16 %v1210
  %v1363 = vunpack.c.l.b16 %v1211
  %v1364 = vunpack.c.h.b16 %v1211
  %v1365 = vunpack.c.l.b16 %v1212
  %v1366 = vunpack.c.h.b16 %v1212
  %v1367 = vunpack.c.l.b16 %v1213
  %v1368 = vunpack.c.h.b16 %v1213
  %v1369 = vunpack.c.l.b16 %v1214
  %v1370 = vunpack.c.h.b16 %v1214
  %v1371 = vunpack.c.l.b16 %v1215
  %v1372 = vunpack.c.h.b16 %v1215
  %v1373 = vunpack.c.l.b16 %v1216
  %v1374 = vunpack.c.h.b16 %v1216
  %v1375 = vunpack.c.l.b16 %v1217
  %v1376 = vunpack.c.h.b16 %v1217
  %v1377 = vunpack.c.l.b16 %v1218
  %v1378 = vunpack.c.h.b16 %v1218
  %v1379 = vunpack.c.l.b16 %v1219
  %v1380 = vunpack.c.h.b16 %v1219
  %v1381 = vunpack.c.l.b16 %v1220
  %v1382 = vunpack.c.h.b16 %v1220
  %v1383 = vunpack.c.l.b16 %v1221
  %v1384 = vunpack.c.h.b16 %v1221
  %v1385 = vunpack.c.l.b16 %v1222
  %v1386 = vunpack.c.h.b16 %v1222
  %v1387 = vunpack.c.l.b16 %v1223
  %v1388 = vunpack.c.h.b16 %v1223
  %v1389 = vunpack.c.l.b16 %v1224
  %v1390 = vunpack.c.h.b16 %v1224
  %v1391 = vunpack.c.l.b16 %v1225
  %v1392 = vunpack.c.h.b16 %v1225
  %v1393 = vunpack.c.l.b16 %v1226
  %v1394 = vunpack.c.h.b16 %v1226
  %v1395 = vunpack.c.l.b16 %v1227
  %v1396 = vunpack.c.h.b16 %v1227
  %v1397 = vunpack.c.l.b16 %v1228
  %v1398 = vunpack.c.h.b16 %v1228
  %v1399 = vunpack.c.l.b16 %v1229
  %v1400 = vunpack.c.h.b16 %v1229
  %v1401 = vunpack.c.l.b16 %v1230
  %v1402 = vunpack.c.h.b16 %v1230
  %v1403 = vunpack.c.l.b16 %v1231
  %v1404 = vunpack.c.h.b16 %v1231
  %v1405 = vunpack.c.l.b16 %v1232
  %v1406 = vunpack.c.h.b16 %v1232
  %v1407 = vunpack.c.l.b16 %v1233
  %v1408 = vunpack.c.h.b16 %v1233
  %v1409 = vunpack.c.l.b16 %v1234
  %v1410 = vunpack.c.h.b16 %v1234
  %v1411 = vunpack.c.l.b16 %v1235
  %v1412 = vunpack.c.h.b16 %v1235
  %v1413 = vunpack.c.l.b16 %v1236
  %v1414 = vunpack.c.h.b16 %v1236
  %v1415 = vunpack.c.l.b16 %v1237
  %v1416 = vunpack.c.h.b16 %v1237
  %v1417 = vunpack.c.l.b16 %v1238
  %v1418 = vunpack.c.h.b16 %v1238
  %v1419 = vunpack.c.l.b16 %v1239
  %v1420 = vunpack.c.h.b16 %v1239
  %v1421 = vunpack.c.l.b16 %v1240
  %v1422 = vunpack.c.h.b16 %v1240
  %v1423 = vunpack.c.l.b16 %v1241
  %v1424 = vunpack.c.h.b16 %v1241
  %v1425 = vunpack.c.l.b16 %v1242
  %v1426 = vunpack.c.h.b16 %v1242
  %v1427 = vunpack.c.l.b16 %v1243
  %v1428 = vunpack.c.h.b16 %v1243
  %v1429 = vunpack.c.l.b16 %v1244
  %v1430 = vunpack.c.h.b16 %v1244
  %v1431 = vunpack.c.l.b16 %v1245
  %v1432 = vunpack.c.h.b16 %v1245
  %v1433 = vunpack.c.l.b16 %v1246
  %v1434 = vunpack.c.h.b16 %v1246
  %v1435 = vunpack.c.l.b16 %v1247
  %v1436 = vunpack.c.h.b16 %v1247
  %v1437 = vunpack.c.l.b16 %v1248
  %v1438 = vunpack.c.h.b16 %v1248
  %v1439 = vunpack.c.l.b16 %v1249
  %v1440 = vunpack.c.h.b16 %v1249
  %v1441 = vunpack.c.l.b16 %v1250
  %v1442 = vunpack.c.h.b16 %v1250
  %v1443 = vpack.c.b16 %v1315, %v1315
  %v1444 = vpack.c.b16 %v1316, %v1316
  %v1445 = vpack.c.b16 %v1317, %v1317
  %v1446 = vpack.c.b16 %v1318, %v1318
  %v1447 = vpack.c.b16 %v1319, %v1319
  %v1448 = vpack.c.b16 %v1320, %v1320
  %v1449 = vpack.c.b16 %v1321, %v1321
  %v1450 = vpack.c.b16 %v1322, %v1322
  %v1451 = vpack.c.b16 %v1323, %v1323
  %v1452 = vpack.c.b16 %v1324, %v1324
  %v1453 = vpack.c.b16 %v1325, %v1325
  %v1454 = vpack.c.b16 %v1326, %v1326
  %v1455 = vpack.c.b16 %v1327, %v1327
  %v1456 = vpack.c.b16 %v1328, %v1328
  %v1457 = vpack.c.b16 %v1329, %v1329
  %v1458 = vpack.c.b16 %v1330, %v1330
  %v1459 = vpack.c.b16 %v1331, %v1331
  %v1460 = vpack.c.b16 %v1332, %v1332
  %v1461 = vpack.c.b16 %v1333, %v1333
  %v1462 = vpack.c.b16 %v1334, %v1334
  %v1463 = vpack.c.b16 %v1335, %v1335
  %v1464 = vpack.c.b16 %v1336, %v1336
  %v1465 = vpack.c.b16 %v1337, %v1337
  %v1466 = vpack.c.b16 %v1338, %v1338
  %v1467 = vpack.c.b16 %v1339, %v1339
  %v1468 = vpack.c.b16 %v1340, %v1340
  %v1469 = vpack.c.b16 %v1341, %v1341
  %v1470 = vpack.c.b16 %v1342, %v1342
  %v1471 = vpack.c.b16 %v1343, %v1343
  %v1472 = vpack.c.b16 %v1344, %v1344
  %v1473 = vpack.c.b16 %v1345, %v1345
  %v1474 = vpack.c.b16 %v1346, %v1346
  %v1475 = vpack.c.b16 %v1347, %v1347
  %v1476 = vpack.c.b16 %v1348, %v1348
  %v1477 = vpack.c.b16 %v1349, %v1349
  %v1478 = vpack.c.b16 %v1350, %v1350
  %v1479 = vpack.c.b16 %v1351, %v1351
  %v1480 = vpack.c.b16 %v1352, %v1352
  %v1481 = vpack.c.b16 %v1353, %v1353
  %v1482 = vpack.c.b16 %v1354, %v1354
  %v1483 = vpack.c.b16 %v1355, %v1355
  %v1484 = vpack.c.b16 %v1356, %v1356
  %v1485 = vpack.c.b16 %v1357, %v1357
  %v1486 = vpack.c.b16 %v1358, %v1358
  %v1487 = vpack.c.b16 %v1359, %v1359
  %v1488 = vpack.c.b16 %v1360, %v1360
  %v1489 = vpack.c.b16 %v1361, %v1361
  %v1490 = vpack.c.b16 %v1362, %v1362
  %v1491 = vpack.c.b16 %v1363, %v1363
  %v1492 = vpack.c.b16 %v1364, %v1364
  %v1493 = vpack.c.b16 %v1365, %v1365
  %v1494 = vpack.c.b16 %v1366, %v1366
  %v1495 = vpack.c.b16 %v1367, %v1367
  %v1496 = vpack.c.b16 %v1368, %v1368
  %v1497 = vpack.c.b16 %v1369, %v1369
  %v1498 = vpack.c.b16 %v1370, %v1370
  %v1499 = vpack.c.b16 %v1371, %v1371
  %v1500 = vpack.c.b16 %v1372, %v1372
  %v1501 = vpack.c.b16 %v1373, %v1373
  %v1502 = vpack.c.b16 %v1374, %v1374
  %v1503 = vpack.c.b16 %v1375, %v1375
  %v1504 = vpack.c.b16 %v1376, %v1376
  %v1505 = vpack.c.b16 %v1377, %v1377
  %v1506 = vpack.c.b16 %v1378, %v1378
  %v1507 = vpack.c.b16 %v1379, %v1379
  %v1508 = vpack.c.b16 %v1380, %v1380
  %v1509 = vpack.c.b16 %v1381, %v1381
  %v1510 = vpack.c.b16 %v1382, %v1382
  %v1511 = vpack.c.b16 %v1383, %v1383
  %v1512 = vpack.c.b16 %v1384, %v1384
  %v1513 = vpack.c.b16 %v1385, %v1385
  %v1514 = vpack.c.b16 %v1386, %v1386
  %v1515 = vpack.c.b16 %v1387, %v1387
  %v1516 = vpack.c.b16 %v1388, %v1388
  %v1517 = vpack.c.b16 %v1389, %v1389
  %v1518 = vpack.c.b16 %v1390, %v1390
  %v1519 = vpack.c.b16 %v1391, %v1391
  %v1520 = vpack.c.b16 %v1392, %v1392
  %v1521 = vpack.c.b16 %v1393, %v1393
  %v1522 = vpack.c.b16 %v1394, %v1394
  %v1523 = vpack.c.b16 %v1395, %v1395
  %v1524 = vpack.c.b16 %v1396, %v1396
  %v1525 = vpack.c.b16 %v1397, %v1397
  %v1526 = vpack.c.b16 %v1398, %v1398
  %v1527 = vpack.c.b16 %v1399, %v1399
  %v1528 = vpack.c.b16 %v1400, %v1400
  %v1529 = vpack.c.b16 %v1401, %v1401
  %v1530 = vpack.c.b16 %v1402, %v1402
  %v1531 = vpack.c.b16 %v1403, %v1403
  %v1532 = vpack.c.b16 %v1404, %v1404
  %v1533 = vpack.c.b16 %v1405, %v1405
  %v1534 = vpack.c.b16 %v1406, %v1406
  %v1535 = vpack.c.b16 %v1407, %v1407
  %v1536 = vpack.c.b16 %v1408, %v1408
  %v1537 = vpack.c.b16 %v1409, %v1409
  %v1538 = vpack.c.b16 %v1410, %v1410
  %v1539 = vpack.c.b16 %v1411, %v1411
  %v1540 = vpack.c.b16 %v1412, %v1412
  %v1541 = vpack.c.b16 %v1413, %v1413
  %v1542 = vpack.c.b16 %v1414, %v1414
  %v1543 = vpack.c.b16 %v1415, %v1415
  %v1544 = vpack.c.b16 %v1416, %v1416
  %v1545 = vpack.c.b16 %v1417, %v1417
  %v1546 = vpack.c.b16 %v1418, %v1418
  %v1547 = vpack.c.b16 %v1419, %v1419
  %v1548 = vpack.c.b16 %v1420, %v1420
  %v1549 = vpack.c.b16 %v1421, %v1421
  %v1550 = vpack.c.b16 %v1422, %v1422
  %v1551 = vpack.c.b16 %v1423, %v1423
  %v1552 = vpack.c.b16 %v1424, %v1424
  %v1553 = vpack.c.b16 %v1425, %v1425
  %v1554 = vpack.c.b16 %v1426, %v1426
  %v1555 = vpack.c.b16 %v1427, %v1427
  %v1556 = vpack.c.b16 %v1428, %v1428
  %v1557 = vpack.c.b16 %v1429, %v1429
  %v1558 = vpack.c.b16 %v1430, %v1430
  %v1559 = vpack.c.b16 %v1431, %v1431
  %v1560 = vpack.c.b16 %v1432, %v1432
  %v1561 = vpack.c.b16 %v1433, %v1433
  %v1562 = vpack.c.b16 %v1434, %v1434
  %v1563 = vpack.c.b16 %v1435, %v1435
  %v1564 = vpack.c.b16 %v1436, %v1436
  %v1565 = vpack.c.b16 %v1437, %v1437
  %v1566 = vpack.c.b16 %v1438, %v1438
  %v1567 = vpack.c.b16 %v1439, %v1439
  %v1568 = vpack.c.b16 %v1440, %v1440
  %v1569 = vpack.c.b16 %v1441, %v1441
  %v1570 = vpack.c.b16 %v1442, %v1442
  %vm1699 = vcmask 257024
  %1700 = vst.msk [vmem:[%s4] sm:$0xf] %vm1699, %v1443
  %1701 = vst.msk [vmem:[%s4 + $0x4] sm:$0xf] %vm1699, %v1444
  %1702 = vst.msk [vmem:[%s4 + $0x8] sm:$0xf] %vm1699, %v1445
  %1703 = vst.msk [vmem:[%s4 + $0xc] sm:$0xf] %vm1699, %v1446
  %1704 = vst.msk [vmem:[%s4 + $0x10] sm:$0xf] %vm1699, %v1447
  %1705 = vst.msk [vmem:[%s4 + $0x14] sm:$0xf] %vm1699, %v1448
  %1706 = vst.msk [vmem:[%s4 + $0x18] sm:$0xf] %vm1699, %v1449
  %1707 = vst.msk [vmem:[%s4 + $0x1c] sm:$0xf] %vm1699, %v1450
  %1708 = vst.msk [vmem:[%s4 + $0x20] sm:$0xf] %vm1699, %v1451
  %1709 = vst.msk [vmem:[%s4 + $0x24] sm:$0xf] %vm1699, %v1452
  %1710 = vst.msk [vmem:[%s4 + $0x28] sm:$0xf] %vm1699, %v1453
  %1711 = vst.msk [vmem:[%s4 + $0x2c] sm:$0xf] %vm1699, %v1454
  %1712 = vst.msk [vmem:[%s4 + $0x30] sm:$0xf] %vm1699, %v1455
  %1713 = vst.msk [vmem:[%s4 + $0x34] sm:$0xf] %vm1699, %v1456
  %1714 = vst.msk [vmem:[%s4 + $0x38] sm:$0xf] %vm1699, %v1457
  %1715 = vst.msk [vmem:[%s4 + $0x3c] sm:$0xf] %vm1699, %v1458
  %1716 = vst.msk [vmem:[%s4 + $0x40] sm:$0xf] %vm1699, %v1459
  %1717 = vst.msk [vmem:[%s4 + $0x44] sm:$0xf] %vm1699, %v1460
  %1718 = vst.msk [vmem:[%s4 + $0x48] sm:$0xf] %vm1699, %v1461
  %1719 = vst.msk [vmem:[%s4 + $0x4c] sm:$0xf] %vm1699, %v1462
  %1720 = vst.msk [vmem:[%s4 + $0x50] sm:$0xf] %vm1699, %v1463
  %1721 = vst.msk [vmem:[%s4 + $0x54] sm:$0xf] %vm1699, %v1464
  %1722 = vst.msk [vmem:[%s4 + $0x58] sm:$0xf] %vm1699, %v1465
  %1723 = vst.msk [vmem:[%s4 + $0x5c] sm:$0xf] %vm1699, %v1466
  %1724 = vst.msk [vmem:[%s4 + $0x60] sm:$0xf] %vm1699, %v1467
  %1725 = vst.msk [vmem:[%s4 + $0x64] sm:$0xf] %vm1699, %v1468
  %1726 = vst.msk [vmem:[%s4 + $0x68] sm:$0xf] %vm1699, %v1469
  %1727 = vst.msk [vmem:[%s4 + $0x6c] sm:$0xf] %vm1699, %v1470
  %1728 = vst.msk [vmem:[%s4 + $0x70] sm:$0xf] %vm1699, %v1471
  %1729 = vst.msk [vmem:[%s4 + $0x74] sm:$0xf] %vm1699, %v1472
  %1730 = vst.msk [vmem:[%s4 + $0x78] sm:$0xf] %vm1699, %v1473
  %1731 = vst.msk [vmem:[%s4 + $0x7c] sm:$0xf] %vm1699, %v1474
  %1732 = vst.msk [vmem:[%s4 + $0x80] sm:$0xf] %vm1699, %v1475
  %1733 = vst.msk [vmem:[%s4 + $0x84] sm:$0xf] %vm1699, %v1476
  %1734 = vst.msk [vmem:[%s4 + $0x88] sm:$0xf] %vm1699, %v1477
  %1735 = vst.msk [vmem:[%s4 + $0x8c] sm:$0xf] %vm1699, %v1478
  %1736 = vst.msk [vmem:[%s4 + $0x90] sm:$0xf] %vm1699, %v1479
  %1737 = vst.msk [vmem:[%s4 + $0x94] sm:$0xf] %vm1699, %v1480
  %1738 = vst.msk [vmem:[%s4 + $0x98] sm:$0xf] %vm1699, %v1481
  %1739 = vst.msk [vmem:[%s4 + $0x9c] sm:$0xf] %vm1699, %v1482
  %1740 = vst.msk [vmem:[%s4 + $0xa0] sm:$0xf] %vm1699, %v1483
  %1741 = vst.msk [vmem:[%s4 + $0xa4] sm:$0xf] %vm1699, %v1484
  %1742 = vst.msk [vmem:[%s4 + $0xa8] sm:$0xf] %vm1699, %v1485
  %1743 = vst.msk [vmem:[%s4 + $0xac] sm:$0xf] %vm1699, %v1486
  %1744 = vst.msk [vmem:[%s4 + $0xb0] sm:$0xf] %vm1699, %v1487
  %1745 = vst.msk [vmem:[%s4 + $0xb4] sm:$0xf] %vm1699, %v1488
  %1746 = vst.msk [vmem:[%s4 + $0xb8] sm:$0xf] %vm1699, %v1489
  %1747 = vst.msk [vmem:[%s4 + $0xbc] sm:$0xf] %vm1699, %v1490
  %1748 = vst.msk [vmem:[%s4 + $0xc0] sm:$0xf] %vm1699, %v1491
  %1749 = vst.msk [vmem:[%s4 + $0xc4] sm:$0xf] %vm1699, %v1492
  %1750 = vst.msk [vmem:[%s4 + $0xc8] sm:$0xf] %vm1699, %v1493
  %1751 = vst.msk [vmem:[%s4 + $0xcc] sm:$0xf] %vm1699, %v1494
  %1752 = vst.msk [vmem:[%s4 + $0xd0] sm:$0xf] %vm1699, %v1495
  %1753 = vst.msk [vmem:[%s4 + $0xd4] sm:$0xf] %vm1699, %v1496
  %1754 = vst.msk [vmem:[%s4 + $0xd8] sm:$0xf] %vm1699, %v1497
  %1755 = vst.msk [vmem:[%s4 + $0xdc] sm:$0xf] %vm1699, %v1498
  %1756 = vst.msk [vmem:[%s4 + $0xe0] sm:$0xf] %vm1699, %v1499
  %1757 = vst.msk [vmem:[%s4 + $0xe4] sm:$0xf] %vm1699, %v1500
  %1758 = vst.msk [vmem:[%s4 + $0xe8] sm:$0xf] %vm1699, %v1501
  %1759 = vst.msk [vmem:[%s4 + $0xec] sm:$0xf] %vm1699, %v1502
  %1760 = vst.msk [vmem:[%s4 + $0xf0] sm:$0xf] %vm1699, %v1503
  %1761 = vst.msk [vmem:[%s4 + $0xf4] sm:$0xf] %vm1699, %v1504
  %1762 = vst.msk [vmem:[%s4 + $0xf8] sm:$0xf] %vm1699, %v1505
  %1763 = vst.msk [vmem:[%s4 + $0xfc] sm:$0xf] %vm1699, %v1506
  %1764 = vst.msk [vmem:[%s4 + $0x100] sm:$0xf] %vm1699, %v1507
  %1765 = vst.msk [vmem:[%s4 + $0x104] sm:$0xf] %vm1699, %v1508
  %1766 = vst.msk [vmem:[%s4 + $0x108] sm:$0xf] %vm1699, %v1509
  %1767 = vst.msk [vmem:[%s4 + $0x10c] sm:$0xf] %vm1699, %v1510
  %1768 = vst.msk [vmem:[%s4 + $0x110] sm:$0xf] %vm1699, %v1511
  %1769 = vst.msk [vmem:[%s4 + $0x114] sm:$0xf] %vm1699, %v1512
  %1770 = vst.msk [vmem:[%s4 + $0x118] sm:$0xf] %vm1699, %v1513
  %1771 = vst.msk [vmem:[%s4 + $0x11c] sm:$0xf] %vm1699, %v1514
  %1772 = vst.msk [vmem:[%s4 + $0x120] sm:$0xf] %vm1699, %v1515
  %1773 = vst.msk [vmem:[%s4 + $0x124] sm:$0xf] %vm1699, %v1516
  %1774 = vst.msk [vmem:[%s4 + $0x128] sm:$0xf] %vm1699, %v1517
  %1775 = vst.msk [vmem:[%s4 + $0x12c] sm:$0xf] %vm1699, %v1518
  %1776 = vst.msk [vmem:[%s4 + $0x130] sm:$0xf] %vm1699, %v1519
  %1777 = vst.msk [vmem:[%s4 + $0x134] sm:$0xf] %vm1699, %v1520
  %1778 = vst.msk [vmem:[%s4 + $0x138] sm:$0xf] %vm1699, %v1521
  %1779 = vst.msk [vmem:[%s4 + $0x13c] sm:$0xf] %vm1699, %v1522
  %1780 = vst.msk [vmem:[%s4 + $0x140] sm:$0xf] %vm1699, %v1523
  %1781 = vst.msk [vmem:[%s4 + $0x144] sm:$0xf] %vm1699, %v1524
  %1782 = vst.msk [vmem:[%s4 + $0x148] sm:$0xf] %vm1699, %v1525
  %1783 = vst.msk [vmem:[%s4 + $0x14c] sm:$0xf] %vm1699, %v1526
  %1784 = vst.msk [vmem:[%s4 + $0x150] sm:$0xf] %vm1699, %v1527
  %1785 = vst.msk [vmem:[%s4 + $0x154] sm:$0xf] %vm1699, %v1528
  %1786 = vst.msk [vmem:[%s4 + $0x158] sm:$0xf] %vm1699, %v1529
  %1787 = vst.msk [vmem:[%s4 + $0x15c] sm:$0xf] %vm1699, %v1530
  %1788 = vst.msk [vmem:[%s4 + $0x160] sm:$0xf] %vm1699, %v1531
  %1789 = vst.msk [vmem:[%s4 + $0x164] sm:$0xf] %vm1699, %v1532
  %1790 = vst.msk [vmem:[%s4 + $0x168] sm:$0xf] %vm1699, %v1533
  %1791 = vst.msk [vmem:[%s4 + $0x16c] sm:$0xf] %vm1699, %v1534
  %1792 = vst.msk [vmem:[%s4 + $0x170] sm:$0xf] %vm1699, %v1535
  %1793 = vst.msk [vmem:[%s4 + $0x174] sm:$0xf] %vm1699, %v1536
  %1794 = vst.msk [vmem:[%s4 + $0x178] sm:$0xf] %vm1699, %v1537
  %1795 = vst.msk [vmem:[%s4 + $0x17c] sm:$0xf] %vm1699, %v1538
  %1796 = vst.msk [vmem:[%s4 + $0x180] sm:$0xf] %vm1699, %v1539
  %1797 = vst.msk [vmem:[%s4 + $0x184] sm:$0xf] %vm1699, %v1540
  %1798 = vst.msk [vmem:[%s4 + $0x188] sm:$0xf] %vm1699, %v1541
  %1799 = vst.msk [vmem:[%s4 + $0x18c] sm:$0xf] %vm1699, %v1542
  %1800 = vst.msk [vmem:[%s4 + $0x190] sm:$0xf] %vm1699, %v1543
  %1801 = vst.msk [vmem:[%s4 + $0x194] sm:$0xf] %vm1699, %v1544
  %1802 = vst.msk [vmem:[%s4 + $0x198] sm:$0xf] %vm1699, %v1545
  %1803 = vst.msk [vmem:[%s4 + $0x19c] sm:$0xf] %vm1699, %v1546
  %1804 = vst.msk [vmem:[%s4 + $0x1a0] sm:$0xf] %vm1699, %v1547
  %1805 = vst.msk [vmem:[%s4 + $0x1a4] sm:$0xf] %vm1699, %v1548
  %1806 = vst.msk [vmem:[%s4 + $0x1a8] sm:$0xf] %vm1699, %v1549
  %1807 = vst.msk [vmem:[%s4 + $0x1ac] sm:$0xf] %vm1699, %v1550
  %1808 = vst.msk [vmem:[%s4 + $0x1b0] sm:$0xf] %vm1699, %v1551
  %1809 = vst.msk [vmem:[%s4 + $0x1b4] sm:$0xf] %vm1699, %v1552
  %1810 = vst.msk [vmem:[%s4 + $0x1b8] sm:$0xf] %vm1699, %v1553
  %1811 = vst.msk [vmem:[%s4 + $0x1bc] sm:$0xf] %vm1699, %v1554
  %1812 = vst.msk [vmem:[%s4 + $0x1c0] sm:$0xf] %vm1699, %v1555
  %1813 = vst.msk [vmem:[%s4 + $0x1c4] sm:$0xf] %vm1699, %v1556
  %1814 = vst.msk [vmem:[%s4 + $0x1c8] sm:$0xf] %vm1699, %v1557
  %1815 = vst.msk [vmem:[%s4 + $0x1cc] sm:$0xf] %vm1699, %v1558
  %1816 = vst.msk [vmem:[%s4 + $0x1d0] sm:$0xf] %vm1699, %v1559
  %1817 = vst.msk [vmem:[%s4 + $0x1d4] sm:$0xf] %vm1699, %v1560
  %1818 = vst.msk [vmem:[%s4 + $0x1d8] sm:$0xf] %vm1699, %v1561
  %1819 = vst.msk [vmem:[%s4 + $0x1dc] sm:$0xf] %vm1699, %v1562
  %1820 = vst.msk [vmem:[%s4 + $0x1e0] sm:$0xf] %vm1699, %v1563
  %1821 = vst.msk [vmem:[%s4 + $0x1e4] sm:$0xf] %vm1699, %v1564
  %1822 = vst.msk [vmem:[%s4 + $0x1e8] sm:$0xf] %vm1699, %v1565
  %1823 = vst.msk [vmem:[%s4 + $0x1ec] sm:$0xf] %vm1699, %v1566
  %1824 = vst.msk [vmem:[%s4 + $0x1f0] sm:$0xf] %vm1699, %v1567
  %1825 = vst.msk [vmem:[%s4 + $0x1f4] sm:$0xf] %vm1699, %v1568
  %1826 = vst.msk [vmem:[%s4 + $0x1f8] sm:$0xf] %vm1699, %v1569
  %1827 = vst.msk [vmem:[%s4 + $0x1fc] sm:$0xf] %vm1699, %v1570
  // Predicated region
  $region14: #{conv_bn_act.3} parent=0 // pred_check
    _
  $region15: #{conv_bn_act.3} parent=0 // pred_check_branch
    %1829 = sbr.rel (0) target = $region17
  $region16: #{conv_bn_act.3} parent=0 // pred_region
    _
  $region17: #{conv_bn_act.3} parent=0 // pred_fallthru
    _
  // Predicated region
  $region18: #{conv_bn_act.3} parent=0 // pred_check
    _
  $region19: #{conv_bn_act.3} parent=0 // pred_check_branch
    %1831 = sbr.rel (0) target = $region21
  $region20: #{conv_bn_act.3} parent=0 // pred_region
    _
  $region21: #{conv_bn_act.3} parent=0 // pred_fallthru
    _

// kernel: conv_bn_act.2
$region0: #{conv_bn_act.2}
  #allocation0 [shape = 'u32[]', space=smem, size = 0x4, offset = 0x4, fixed_abs, tag = 'smem constant byte address 0x4 - core index']
  #allocation1 [shape = 'u32[144,128]{1,0:T(1,128)}', space=vmem, size = 0x12000, scoped, tag = 'internal scratch']
  #allocation2 [shape = 'f32[512,32]{1,0:T(8,128)}', space=vmem, size = 0x40000, scoped, tag = 'scratch operand']
  %s0 = inlined_call_operand.vmem [shape: bf16[1,1024,1000], index: 0, kind: input, shape index: {}]
  %s1 = inlined_call_operand.vmem [shape: bf16[1,1000,32], index: 1, kind: input, shape index: {}]
  %s2 = inlined_call_operand.vmem [shape: bf16[1024,32], index: 2, kind: output, shape index: {0}]
  %s3 = inlined_call_operand.vmem [shape: f32[2,1,32], index: 3, kind: output, shape index: {1}]
  %s4 = inlined_call_operand.vmem [shape: f32[2,1,32], index: 4, kind: output, shape index: {2}]
  %5 = xla_tuple %s2, %s3, %s4
  %s6 = sld [smem:[#allocation0]]
  $region65: #{conv_bn_act.2} parent=0
    _
  %s8 = ssub.s32 1, %s6
  %s9 = scalar_select 0, %s8, %s6
  loop: start=0, step=1, limit=4
  $region2: #{conv_bn_act.2} parent=0 // loop_pre_header
    _
  $region3: #{conv_bn_act.2} parent=0 // loop_header
    %s11 = sphi 0, %s15
    %p12 = scmp.ge.s32.totalorder %s11, 4
    %s18 = sphi 0, %s30
    %s19 = sphi 0, %s26
    %s20 = sphi 0, %s18
    %s21 = sphi 0, %s19
    %s22 = sphi 0, %s20
    %s23 = sphi 0, %s21
    %s35 = sphi 0, %s37
    %s38 = sphi 0, %s35
    %s39 = sphi 0, %s38
    %s55 = sphi 0, %s39
    %s59 = sphi 0, %s59
    %s61 = sphi 0, %s59
    %s62 = sphi 0, %s61
    %s76 = sphi 0, %s62
    %s82 = sphi 0, %s84
    %s85 = sphi 0, %s82
    %s86 = sphi 0, %s85
    %s102 = sphi 0, %s86
    %s108 = sphi 0, %s110
    %s111 = sphi 0, %s108
    %s112 = sphi 0, %s111
    %s128 = sphi 0, %s112
    %s134 = sphi 0, %s136
    %s137 = sphi 0, %s134
    %s138 = sphi 0, %s137
    %s154 = sphi 0, %s138
  $region4: #{conv_bn_act.2} parent=0 // loop_header_branch
    %14 = sbr.rel (%p12) target = $region8
  $region5: #{conv_bn_act.2} parent=0 // loop_body
    %s16 = ssub.s32 %s11, 1
    %s17 = ssub.s32 %s11, 2
    %s24 = sadd.s32 1, %s19
    %p25 = scmp.ge.s32.totalorder %s24, 1
    %s26 = scalar_select %p25, 0, %s24
    %s27 = sadd.s32 1, %s18
    %s28 = scalar_select %p25, %s27, %s18
    %p29 = scmp.ge.s32.totalorder %s28, 2
    %s30 = scalar_select %p29, 0, %s28
    %s31 = ssub.s32 %s19, %s26
    %s32 = ssub.s32 %s18, %s30
    %s33 = sor.u32 %s31, %s32
    %p34 = scmp.eq.s32.totalorder %s33, 0
    %s36 = sadd.s32 %s35, 1
    %s37 = scalar_select %p34, %s35, %s36
    %p40 = pneg %p34
    %p41 = scmp.eq.s32.totalorder %s11, 1
    %p42 = por %p40, %p41
    %p43 = scmp.ne.s32.totalorder %s35, %s38
    %p44 = scmp.eq.s32.totalorder %s11, 0
    %p45 = por %p43, %p44
    %p46 = scmp.ne.s32.totalorder %s35, %s38
    %p47 = scmp.eq.s32.totalorder %s16, 1
    %p48 = por %p46, %p47
    %p49 = scmp.ne.s32.totalorder %s38, %s39
    %p50 = scmp.eq.s32.totalorder %s16, 0
    %p51 = por %p49, %p50
    %p52 = scmp.ne.s32.totalorder %s38, %s39
    %p53 = scmp.eq.s32.totalorder %s17, 1
    %p54 = por %p52, %p53
    %p56 = scmp.ne.s32.totalorder %s39, %s55
    %p57 = scmp.eq.s32.totalorder %s17, 0
    %p58 = por %p56, %p57
    %s60 = sadd.s32 %s59, 1
    %p63 = scmp.eq.s32.totalorder %s11, 1
    %p64 = scmp.ne.s32.totalorder %s59, %s61
    %p65 = scmp.eq.s32.totalorder %s11, 0
    %p66 = por %p64, %p65
    %p67 = scmp.ne.s32.totalorder %s59, %s61
    %p68 = scmp.eq.s32.totalorder %s16, 1
    %p69 = por %p67, %p68
    %p70 = scmp.ne.s32.totalorder %s61, %s62
    %p71 = scmp.eq.s32.totalorder %s16, 0
    %p72 = por %p70, %p71
    %p73 = scmp.ne.s32.totalorder %s61, %s62
    %p74 = scmp.eq.s32.totalorder %s17, 1
    %p75 = por %p73, %p74
    %p77 = scmp.ne.s32.totalorder %s62, %s76
    %p78 = scmp.eq.s32.totalorder %s17, 0
    %p79 = por %p77, %p78
    %s80 = ssub.s32 %s18, %s30
    %p81 = scmp.eq.s32.totalorder %s80, 0
    %s83 = sadd.s32 %s82, 1
    %s84 = scalar_select %p81, %s82, %s83
    %p87 = pneg %p81
    %p88 = scmp.eq.s32.totalorder %s11, 1
    %p89 = por %p87, %p88
    %p90 = scmp.ne.s32.totalorder %s82, %s85
    %p91 = scmp.eq.s32.totalorder %s11, 0
    %p92 = por %p90, %p91
    %p93 = scmp.ne.s32.totalorder %s82, %s85
    %p94 = scmp.eq.s32.totalorder %s16, 1
    %p95 = por %p93, %p94
    %p96 = scmp.ne.s32.totalorder %s85, %s86
    %p97 = scmp.eq.s32.totalorder %s16, 0
    %p98 = por %p96, %p97
    %p99 = scmp.ne.s32.totalorder %s85, %s86
    %p100 = scmp.eq.s32.totalorder %s17, 1
    %p101 = por %p99, %p100
    %p103 = scmp.ne.s32.totalorder %s86, %s102
    %p104 = scmp.eq.s32.totalorder %s17, 0
    %p105 = por %p103, %p104
    %s106 = ssub.s32 %s18, %s30
    %p107 = scmp.eq.s32.totalorder %s106, 0
    %s109 = sadd.s32 %s108, 1
    %s110 = scalar_select %p107, %s108, %s109
    %p113 = pneg %p107
    %p114 = scmp.eq.s32.totalorder %s11, 1
    %p115 = por %p113, %p114
    %p116 = scmp.ne.s32.totalorder %s108, %s111
    %p117 = scmp.eq.s32.totalorder %s11, 0
    %p118 = por %p116, %p117
    %p119 = scmp.ne.s32.totalorder %s108, %s111
    %p120 = scmp.eq.s32.totalorder %s16, 1
    %p121 = por %p119, %p120
    %p122 = scmp.ne.s32.totalorder %s111, %s112
    %p123 = scmp.eq.s32.totalorder %s16, 0
    %p124 = por %p122, %p123
    %p125 = scmp.ne.s32.totalorder %s111, %s112
    %p126 = scmp.eq.s32.totalorder %s17, 1
    %p127 = por %p125, %p126
    %p129 = scmp.ne.s32.totalorder %s112, %s128
    %p130 = scmp.eq.s32.totalorder %s17, 0
    %p131 = por %p129, %p130
    %s132 = ssub.s32 %s18, %s30
    %p133 = scmp.eq.s32.totalorder %s132, 0
    %s135 = sadd.s32 %s134, 1
    %s136 = scalar_select %p133, %s134, %s135
    %p139 = pneg %p133
    %p140 = scmp.eq.s32.totalorder %s11, 1
    %p141 = por %p139, %p140
    %p142 = scmp.ne.s32.totalorder %s134, %s137
    %p143 = scmp.eq.s32.totalorder %s11, 0
    %p144 = por %p142, %p143
    %p145 = scmp.ne.s32.totalorder %s134, %s137
    %p146 = scmp.eq.s32.totalorder %s16, 1
    %p147 = por %p145, %p146
    %p148 = scmp.ne.s32.totalorder %s137, %s138
    %p149 = scmp.eq.s32.totalorder %s16, 0
    %p150 = por %p148, %p149
    %p151 = scmp.ne.s32.totalorder %s137, %s138
    %p152 = scmp.eq.s32.totalorder %s17, 1
    %p153 = por %p151, %p152
    %p155 = scmp.ne.s32.totalorder %s138, %s154
    %p156 = scmp.eq.s32.totalorder %s17, 0
    %p157 = por %p155, %p156
    %p158 = scmp.le.s32.totalorder 1, %s11
    %p159 = scmp.lt.s32.totalorder %s11, 3
    %p160 = pnand %p158, %p159
    %p161 = pneg %p160
    // Predicated region
    $region9: #{conv_bn_act.2} parent=5 // pred_check
      _
    $region10: #{conv_bn_act.2} parent=5 // pred_check_branch
      %163 = sbr.rel (%p160) target = $region12
    $region11: #{conv_bn_act.2} parent=5 // pred_region
      %s164 = ssub.s32 %s11, 1
      // Predicated region
      $region13: #{conv_bn_act.2} parent=11 // pred_check
        %p165 = pneg %p72
      $region14: #{conv_bn_act.2} parent=11 // pred_check_branch
        %167 = sbr.rel (%p165) target = $region16
      $region15: #{conv_bn_act.2} parent=11 // pred_region
        _
      $region16: #{conv_bn_act.2} parent=11 // pred_fallthru
        _
    $region12: #{conv_bn_act.2} parent=5 // pred_fallthru
      _
    %p168 = scmp.lt.s32.totalorder %s11, 2
    // Predicated region
    $region17: #{conv_bn_act.2} parent=5 // pred_check
      %p169 = pneg %p168
    $region18: #{conv_bn_act.2} parent=5 // pred_check_branch
      %171 = sbr.rel (%p169) target = $region20
    $region19: #{conv_bn_act.2} parent=5 // pred_region
      // Predicated region
      $region21: #{conv_bn_act.2} parent=19 // pred_check
        %p172 = pneg %p45
      $region22: #{conv_bn_act.2} parent=19 // pred_check_branch
        %174 = sbr.rel (%p172) target = $region24
      $region23: #{conv_bn_act.2} parent=19 // pred_region
        %s175 = smul.u32 64, %s18
        %p176 = scmp.lt.s32.totalorder %s19, 0
        %s177 = scalar_select %p176, %s19, 0
        %p178 = scmp.lt.s32.totalorder %s175, 127
        %s179 = scalar_select %p178, %s175, 127
        %s180 = smul.addr %s179, 8
        %s181 = smul.addr %s177, 1024
        %s182 = sadd.s32 %s180, %s181
        %s183 = smul.addr %s182, 4
        %s184 = scalar_lea.vmem %s0, %s183
        %s185 = smul.u32 64, %s18
      $region24: #{conv_bn_act.2} parent=19 // pred_fallthru
        _
    $region20: #{conv_bn_act.2} parent=5 // pred_fallthru
      _
    %p186 = scmp.le.s32.totalorder 1, %s11
    %p187 = scmp.lt.s32.totalorder %s11, 3
    %p188 = pnand %p186, %p187
    %p189 = pneg %p188
    // Predicated region
    $region25: #{conv_bn_act.2} parent=5 // pred_check
      _
    $region26: #{conv_bn_act.2} parent=5 // pred_check_branch
      %191 = sbr.rel (%p188) target = $region28
    $region27: #{conv_bn_act.2} parent=5 // pred_region
      %s192 = ssub.s32 %s11, 1
      %s193 = smul.u32 64, %s20
      %p194 = scmp.lt.s32.totalorder %s21, 0
      %s195 = scalar_select %p194, %s21, 0
      %p196 = scmp.lt.s32.totalorder %s193, 127
      %s197 = scalar_select %p196, %s193, 127
      %s198 = smul.addr %s197, 8
      %s199 = smul.addr %s195, 1024
      %s200 = sadd.s32 %s198, %s199
      %s201 = smul.addr %s200, 4
      %s202 = scalar_lea.vmem %s0, %s201
      %p203 = pneg %p51
      %p204 = pneg %p48
      %p205 = pneg %p72
      %p206 = pneg %p69
      %p207 = pneg %p98
      %p208 = pneg %p95
      %s209 = smul.u32 64, %s20
      %p210 = scmp.lt.s32.totalorder %s209, 127
      %s211 = scalar_select %p210, %s209, 127
      %s212 = smul.addr %s211, 4
      %s213 = scalar_lea.vmem %s2, %s212
      %p214 = pneg %p124
      %p215 = pneg %p121
      %p216 = scmp.lt.s32.totalorder %s20, 1
      %s217 = scalar_select %p216, %s20, 1
      %s218 = scalar_lea.vmem %s3, %s217
      %p219 = pneg %p150
      %p220 = pneg %p147
      %p221 = scmp.lt.s32.totalorder %s20, 1
      %s222 = scalar_select %p221, %s20, 1
      %s223 = scalar_lea.vmem %s4, %s222
      %s224 = smul.u32 64, %s20
      %p225 = scmp.lt.s32.totalorder %s21, 0
      %s226 = scalar_select %p225, %s21, 0
      %p227 = scmp.lt.s32.totalorder %s224, 127
      %s228 = scalar_select %p227, %s224, 127
      %s229 = smul.addr %s228, 8
      %s230 = smul.addr %s226, 1024
      %s231 = sadd.s32 %s229, %s230
      %s232 = smul.addr %s231, 4
      %s233 = scalar_lea.vmem %s0, %s232
      %s234 = smul.u32 64, %s20
      %s235 = smul.u32 64, %s20
      %p236 = scmp.lt.s32.totalorder %s235, 127
      %s237 = scalar_select %p236, %s235, 127
      %s238 = smul.addr %s237, 4
      %s239 = scalar_lea.vmem %s2, %s238
      %s240 = smul.u32 64, %s20
      %p241 = scmp.lt.s32.totalorder %s20, 1
      %s242 = scalar_select %p241, %s20, 1
      %s243 = scalar_lea.vmem %s3, %s242
      %p244 = scmp.lt.s32.totalorder %s20, 1
      %s245 = scalar_select %p244, %s20, 1
      %s246 = scalar_lea.vmem %s4, %s245
      %p248 = scmp.eq.s32.totalorder %s21, 0
      // Predicated region
      $region29: #{conv_bn_act.2} parent=27 // pred_check
        %p249 = pneg %p248
      $region30: #{conv_bn_act.2} parent=27 // pred_check_branch
        %251 = sbr.rel (%p249) target = $region32
      $region31: #{conv_bn_act.2} parent=27 // pred_region
        %vm252 = vcmask 261120
        %253 = vst.msk [vmem:[#allocation2] sm:$0xff] %vm252, 0.0
        %254 = vst.msk [vmem:[#allocation2 + $0x8] sm:$0xff] %vm252, 0.0
        %255 = vst.msk [vmem:[#allocation2 + $0x10] sm:$0xff] %vm252, 0.0
        %256 = vst.msk [vmem:[#allocation2 + $0x18] sm:$0xff] %vm252, 0.0
        %257 = vst.msk [vmem:[#allocation2 + $0x20] sm:$0xff] %vm252, 0.0
        %258 = vst.msk [vmem:[#allocation2 + $0x28] sm:$0xff] %vm252, 0.0
        %259 = vst.msk [vmem:[#allocation2 + $0x30] sm:$0xff] %vm252, 0.0
        %260 = vst.msk [vmem:[#allocation2 + $0x38] sm:$0xff] %vm252, 0.0
        %261 = vst.msk [vmem:[#allocation2 + $0x40] sm:$0xff] %vm252, 0.0
        %262 = vst.msk [vmem:[#allocation2 + $0x48] sm:$0xff] %vm252, 0.0
        %263 = vst.msk [vmem:[#allocation2 + $0x50] sm:$0xff] %vm252, 0.0
        %264 = vst.msk [vmem:[#allocation2 + $0x58] sm:$0xff] %vm252, 0.0
        %265 = vst.msk [vmem:[#allocation2 + $0x60] sm:$0xff] %vm252, 0.0
        %266 = vst.msk [vmem:[#allocation2 + $0x68] sm:$0xff] %vm252, 0.0
        %267 = vst.msk [vmem:[#allocation2 + $0x70] sm:$0xff] %vm252, 0.0
        %268 = vst.msk [vmem:[#allocation2 + $0x78] sm:$0xff] %vm252, 0.0
        %269 = vst.msk [vmem:[#allocation2 + $0x80] sm:$0xff] %vm252, 0.0
        %270 = vst.msk [vmem:[#allocation2 + $0x88] sm:$0xff] %vm252, 0.0
        %271 = vst.msk [vmem:[#allocation2 + $0x90] sm:$0xff] %vm252, 0.0
        %272 = vst.msk [vmem:[#allocation2 + $0x98] sm:$0xff] %vm252, 0.0
        %273 = vst.msk [vmem:[#allocation2 + $0xa0] sm:$0xff] %vm252, 0.0
        %274 = vst.msk [vmem:[#allocation2 + $0xa8] sm:$0xff] %vm252, 0.0
        %275 = vst.msk [vmem:[#allocation2 + $0xb0] sm:$0xff] %vm252, 0.0
        %276 = vst.msk [vmem:[#allocation2 + $0xb8] sm:$0xff] %vm252, 0.0
        %277 = vst.msk [vmem:[#allocation2 + $0xc0] sm:$0xff] %vm252, 0.0
        %278 = vst.msk [vmem:[#allocation2 + $0xc8] sm:$0xff] %vm252, 0.0
        %279 = vst.msk [vmem:[#allocation2 + $0xd0] sm:$0xff] %vm252, 0.0
        %280 = vst.msk [vmem:[#allocation2 + $0xd8] sm:$0xff] %vm252, 0.0
        %281 = vst.msk [vmem:[#allocation2 + $0xe0] sm:$0xff] %vm252, 0.0
        %282 = vst.msk [vmem:[#allocation2 + $0xe8] sm:$0xff] %vm252, 0.0
        %283 = vst.msk [vmem:[#allocation2 + $0xf0] sm:$0xff] %vm252, 0.0
        %284 = vst.msk [vmem:[#allocation2 + $0xf8] sm:$0xff] %vm252, 0.0
        %285 = vst.msk [vmem:[#allocation2 + $0x100] sm:$0xff] %vm252, 0.0
        %286 = vst.msk [vmem:[#allocation2 + $0x108] sm:$0xff] %vm252, 0.0
        %287 = vst.msk [vmem:[#allocation2 + $0x110] sm:$0xff] %vm252, 0.0
        %288 = vst.msk [vmem:[#allocation2 + $0x118] sm:$0xff] %vm252, 0.0
        %289 = vst.msk [vmem:[#allocation2 + $0x120] sm:$0xff] %vm252, 0.0
        %290 = vst.msk [vmem:[#allocation2 + $0x128] sm:$0xff] %vm252, 0.0
        %291 = vst.msk [vmem:[#allocation2 + $0x130] sm:$0xff] %vm252, 0.0
        %292 = vst.msk [vmem:[#allocation2 + $0x138] sm:$0xff] %vm252, 0.0
        %293 = vst.msk [vmem:[#allocation2 + $0x140] sm:$0xff] %vm252, 0.0
        %294 = vst.msk [vmem:[#allocation2 + $0x148] sm:$0xff] %vm252, 0.0
        %295 = vst.msk [vmem:[#allocation2 + $0x150] sm:$0xff] %vm252, 0.0
        %296 = vst.msk [vmem:[#allocation2 + $0x158] sm:$0xff] %vm252, 0.0
        %297 = vst.msk [vmem:[#allocation2 + $0x160] sm:$0xff] %vm252, 0.0
        %298 = vst.msk [vmem:[#allocation2 + $0x168] sm:$0xff] %vm252, 0.0
        %299 = vst.msk [vmem:[#allocation2 + $0x170] sm:$0xff] %vm252, 0.0
        %300 = vst.msk [vmem:[#allocation2 + $0x178] sm:$0xff] %vm252, 0.0
        %301 = vst.msk [vmem:[#allocation2 + $0x180] sm:$0xff] %vm252, 0.0
        %302 = vst.msk [vmem:[#allocation2 + $0x188] sm:$0xff] %vm252, 0.0
        %303 = vst.msk [vmem:[#allocation2 + $0x190] sm:$0xff] %vm252, 0.0
        %304 = vst.msk [vmem:[#allocation2 + $0x198] sm:$0xff] %vm252, 0.0
        %305 = vst.msk [vmem:[#allocation2 + $0x1a0] sm:$0xff] %vm252, 0.0
        %306 = vst.msk [vmem:[#allocation2 + $0x1a8] sm:$0xff] %vm252, 0.0
        %307 = vst.msk [vmem:[#allocation2 + $0x1b0] sm:$0xff] %vm252, 0.0
        %308 = vst.msk [vmem:[#allocation2 + $0x1b8] sm:$0xff] %vm252, 0.0
        %309 = vst.msk [vmem:[#allocation2 + $0x1c0] sm:$0xff] %vm252, 0.0
        %310 = vst.msk [vmem:[#allocation2 + $0x1c8] sm:$0xff] %vm252, 0.0
        %311 = vst.msk [vmem:[#allocation2 + $0x1d0] sm:$0xff] %vm252, 0.0
        %312 = vst.msk [vmem:[#allocation2 + $0x1d8] sm:$0xff] %vm252, 0.0
        %313 = vst.msk [vmem:[#allocation2 + $0x1e0] sm:$0xff] %vm252, 0.0
        %314 = vst.msk [vmem:[#allocation2 + $0x1e8] sm:$0xff] %vm252, 0.0
        %315 = vst.msk [vmem:[#allocation2 + $0x1f0] sm:$0xff] %vm252, 0.0
        %316 = vst.msk [vmem:[#allocation2 + $0x1f8] sm:$0xff] %vm252, 0.0
      $region32: #{conv_bn_act.2} parent=27 // pred_fallthru
        _
      %v317 = vld [vmem:[#allocation2] sm:$0xff]
      %v318 = vld [vmem:[#allocation2 + $0x8] sm:$0xff]
      %v319 = vld [vmem:[#allocation2 + $0x10] sm:$0xff]
      %v320 = vld [vmem:[#allocation2 + $0x18] sm:$0xff]
      %v321 = vld [vmem:[#allocation2 + $0x20] sm:$0xff]
      %v322 = vld [vmem:[#allocation2 + $0x28] sm:$0xff]
      %v323 = vld [vmem:[#allocation2 + $0x30] sm:$0xff]
      %v324 = vld [vmem:[#allocation2 + $0x38] sm:$0xff]
      %v325 = vld [vmem:[#allocation2 + $0x40] sm:$0xff]
      %v326 = vld [vmem:[#allocation2 + $0x48] sm:$0xff]
      %v327 = vld [vmem:[#allocation2 + $0x50] sm:$0xff]
      %v328 = vld [vmem:[#allocation2 + $0x58] sm:$0xff]
      %v329 = vld [vmem:[#allocation2 + $0x60] sm:$0xff]
      %v330 = vld [vmem:[#allocation2 + $0x68] sm:$0xff]
      %v331 = vld [vmem:[#allocation2 + $0x70] sm:$0xff]
      %v332 = vld [vmem:[#allocation2 + $0x78] sm:$0xff]
      %v333 = vld [vmem:[#allocation2 + $0x80] sm:$0xff]
      %v334 = vld [vmem:[#allocation2 + $0x88] sm:$0xff]
      %v335 = vld [vmem:[#allocation2 + $0x90] sm:$0xff]
      %v336 = vld [vmem:[#allocation2 + $0x98] sm:$0xff]
      %v337 = vld [vmem:[#allocation2 + $0xa0] sm:$0xff]
      %v338 = vld [vmem:[#allocation2 + $0xa8] sm:$0xff]
      %v339 = vld [vmem:[#allocation2 + $0xb0] sm:$0xff]
      %v340 = vld [vmem:[#allocation2 + $0xb8] sm:$0xff]
      %v341 = vld [vmem:[#allocation2 + $0xc0] sm:$0xff]
      %v342 = vld [vmem:[#allocation2 + $0xc8] sm:$0xff]
      %v343 = vld [vmem:[#allocation2 + $0xd0] sm:$0xff]
      %v344 = vld [vmem:[#allocation2 + $0xd8] sm:$0xff]
      %v345 = vld [vmem:[#allocation2 + $0xe0] sm:$0xff]
      %v346 = vld [vmem:[#allocation2 + $0xe8] sm:$0xff]
      %v347 = vld [vmem:[#allocation2 + $0xf0] sm:$0xff]
      %v348 = vld [vmem:[#allocation2 + $0xf8] sm:$0xff]
      %v349 = vld [vmem:[#allocation2 + $0x100] sm:$0xff]
      %v350 = vld [vmem:[#allocation2 + $0x108] sm:$0xff]
      %v351 = vld [vmem:[#allocation2 + $0x110] sm:$0xff]
      %v352 = vld [vmem:[#allocation2 + $0x118] sm:$0xff]
      %v353 = vld [vmem:[#allocation2 + $0x120] sm:$0xff]
      %v354 = vld [vmem:[#allocation2 + $0x128] sm:$0xff]
      %v355 = vld [vmem:[#allocation2 + $0x130] sm:$0xff]
      %v356 = vld [vmem:[#allocation2 + $0x138] sm:$0xff]
      %v357 = vld [vmem:[#allocation2 + $0x140] sm:$0xff]
      %v358 = vld [vmem:[#allocation2 + $0x148] sm:$0xff]
      %v359 = vld [vmem:[#allocation2 + $0x150] sm:$0xff]
      %v360 = vld [vmem:[#allocation2 + $0x158] sm:$0xff]
      %v361 = vld [vmem:[#allocation2 + $0x160] sm:$0xff]
      %v362 = vld [vmem:[#allocation2 + $0x168] sm:$0xff]
      %v363 = vld [vmem:[#allocation2 + $0x170] sm:$0xff]
      %v364 = vld [vmem:[#allocation2 + $0x178] sm:$0xff]
      %v365 = vld [vmem:[#allocation2 + $0x180] sm:$0xff]
      %v366 = vld [vmem:[#allocation2 + $0x188] sm:$0xff]
      %v367 = vld [vmem:[#allocation2 + $0x190] sm:$0xff]
      %v368 = vld [vmem:[#allocation2 + $0x198] sm:$0xff]
      %v369 = vld [vmem:[#allocation2 + $0x1a0] sm:$0xff]
      %v370 = vld [vmem:[#allocation2 + $0x1a8] sm:$0xff]
      %v371 = vld [vmem:[#allocation2 + $0x1b0] sm:$0xff]
      %v372 = vld [vmem:[#allocation2 + $0x1b8] sm:$0xff]
      %v373 = vld [vmem:[#allocation2 + $0x1c0] sm:$0xff]
      %v374 = vld [vmem:[#allocation2 + $0x1c8] sm:$0xff]
      %v375 = vld [vmem:[#allocation2 + $0x1d0] sm:$0xff]
      %v376 = vld [vmem:[#allocation2 + $0x1d8] sm:$0xff]
      %v377 = vld [vmem:[#allocation2 + $0x1e0] sm:$0xff]
      %v378 = vld [vmem:[#allocation2 + $0x1e8] sm:$0xff]
      %v379 = vld [vmem:[#allocation2 + $0x1f0] sm:$0xff]
      %v380 = vld [vmem:[#allocation2 + $0x1f8] sm:$0xff]
      %v381 = vld [vmem:[%s233] sm:$0xff]
      %v382 = vld [vmem:[%s233 + $0x8] sm:$0xff]
      %v383 = vld [vmem:[%s233 + $0x10] sm:$0xff]
      %v384 = vld [vmem:[%s233 + $0x18] sm:$0xff]
      %v385 = vld [vmem:[%s233 + $0x20] sm:$0xff]
      %v386 = vld [vmem:[%s233 + $0x28] sm:$0xff]
      %v387 = vld [vmem:[%s233 + $0x30] sm:$0xff]
      %v388 = vld [vmem:[%s233 + $0x38] sm:$0xff]
      %v389 = vld [vmem:[%s233 + $0x40] sm:$0xff]
      %v390 = vld [vmem:[%s233 + $0x48] sm:$0xff]
      %v391 = vld [vmem:[%s233 + $0x50] sm:$0xff]
      %v392 = vld [vmem:[%s233 + $0x58] sm:$0xff]
      %v393 = vld [vmem:[%s233 + $0x60] sm:$0xff]
      %v394 = vld [vmem:[%s233 + $0x68] sm:$0xff]
      %v395 = vld [vmem:[%s233 + $0x70] sm:$0xff]
      %v396 = vld [vmem:[%s233 + $0x78] sm:$0xff]
      %v397 = vld [vmem:[%s233 + $0x80] sm:$0xff]
      %v398 = vld [vmem:[%s233 + $0x88] sm:$0xff]
      %v399 = vld [vmem:[%s233 + $0x90] sm:$0xff]
      %v400 = vld [vmem:[%s233 + $0x98] sm:$0xff]
      %v401 = vld [vmem:[%s233 + $0xa0] sm:$0xff]
      %v402 = vld [vmem:[%s233 + $0xa8] sm:$0xff]
      %v403 = vld [vmem:[%s233 + $0xb0] sm:$0xff]
      %v404 = vld [vmem:[%s233 + $0xb8] sm:$0xff]
      %v405 = vld [vmem:[%s233 + $0xc0] sm:$0xff]
      %v406 = vld [vmem:[%s233 + $0xc8] sm:$0xff]
      %v407 = vld [vmem:[%s233 + $0xd0] sm:$0xff]
      %v408 = vld [vmem:[%s233 + $0xd8] sm:$0xff]
      %v409 = vld [vmem:[%s233 + $0xe0] sm:$0xff]
      %v410 = vld [vmem:[%s233 + $0xe8] sm:$0xff]
      %v411 = vld [vmem:[%s233 + $0xf0] sm:$0xff]
      %v412 = vld [vmem:[%s233 + $0xf8] sm:$0xff]
      %v413 = vld [vmem:[%s233 + $0x100] sm:$0xff]
      %v414 = vld [vmem:[%s233 + $0x108] sm:$0xff]
      %v415 = vld [vmem:[%s233 + $0x110] sm:$0xff]
      %v416 = vld [vmem:[%s233 + $0x118] sm:$0xff]
      %v417 = vld [vmem:[%s233 + $0x120] sm:$0xff]
      %v418 = vld [vmem:[%s233 + $0x128] sm:$0xff]
      %v419 = vld [vmem:[%s233 + $0x130] sm:$0xff]
      %v420 = vld [vmem:[%s233 + $0x138] sm:$0xff]
      %v421 = vld [vmem:[%s233 + $0x140] sm:$0xff]
      %v422 = vld [vmem:[%s233 + $0x148] sm:$0xff]
      %v423 = vld [vmem:[%s233 + $0x150] sm:$0xff]
      %v424 = vld [vmem:[%s233 + $0x158] sm:$0xff]
      %v425 = vld [vmem:[%s233 + $0x160] sm:$0xff]
      %v426 = vld [vmem:[%s233 + $0x168] sm:$0xff]
      %v427 = vld [vmem:[%s233 + $0x170] sm:$0xff]
      %v428 = vld [vmem:[%s233 + $0x178] sm:$0xff]
      %v429 = vld [vmem:[%s233 + $0x180] sm:$0xff]
      %v430 = vld [vmem:[%s233 + $0x188] sm:$0xff]
      %v431 = vld [vmem:[%s233 + $0x190] sm:$0xff]
      %v432 = vld [vmem:[%s233 + $0x198] sm:$0xff]
      %v433 = vld [vmem:[%s233 + $0x1a0] sm:$0xff]
      %v434 = vld [vmem:[%s233 + $0x1a8] sm:$0xff]
      %v435 = vld [vmem:[%s233 + $0x1b0] sm:$0xff]
      %v436 = vld [vmem:[%s233 + $0x1b8] sm:$0xff]
      %v437 = vld [vmem:[%s233 + $0x1c0] sm:$0xff]
      %v438 = vld [vmem:[%s233 + $0x1c8] sm:$0xff]
      %v439 = vld [vmem:[%s233 + $0x1d0] sm:$0xff]
      %v440 = vld [vmem:[%s233 + $0x1d8] sm:$0xff]
      %v441 = vld [vmem:[%s233 + $0x1e0] sm:$0xff]
      %v442 = vld [vmem:[%s233 + $0x1e8] sm:$0xff]
      %v443 = vld [vmem:[%s233 + $0x1f0] sm:$0xff]
      %v444 = vld [vmem:[%s233 + $0x1f8] sm:$0xff]
      %v445 = vld [vmem:[%s233 + $0x200] sm:$0xff]
      %v446 = vld [vmem:[%s233 + $0x208] sm:$0xff]
      %v447 = vld [vmem:[%s233 + $0x210] sm:$0xff]
      %v448 = vld [vmem:[%s233 + $0x218] sm:$0xff]
      %v449 = vld [vmem:[%s233 + $0x220] sm:$0xff]
      %v450 = vld [vmem:[%s233 + $0x228] sm:$0xff]
      %v451 = vld [vmem:[%s233 + $0x230] sm:$0xff]
      %v452 = vld [vmem:[%s233 + $0x238] sm:$0xff]
      %v453 = vld [vmem:[%s233 + $0x240] sm:$0xff]
      %v454 = vld [vmem:[%s233 + $0x248] sm:$0xff]
      %v455 = vld [vmem:[%s233 + $0x250] sm:$0xff]
      %v456 = vld [vmem:[%s233 + $0x258] sm:$0xff]
      %v457 = vld [vmem:[%s233 + $0x260] sm:$0xff]
      %v458 = vld [vmem:[%s233 + $0x268] sm:$0xff]
      %v459 = vld [vmem:[%s233 + $0x270] sm:$0xff]
      %v460 = vld [vmem:[%s233 + $0x278] sm:$0xff]
      %v461 = vld [vmem:[%s233 + $0x280] sm:$0xff]
      %v462 = vld [vmem:[%s233 + $0x288] sm:$0xff]
      %v463 = vld [vmem:[%s233 + $0x290] sm:$0xff]
      %v464 = vld [vmem:[%s233 + $0x298] sm:$0xff]
      %v465 = vld [vmem:[%s233 + $0x2a0] sm:$0xff]
      %v466 = vld [vmem:[%s233 + $0x2a8] sm:$0xff]
      %v467 = vld [vmem:[%s233 + $0x2b0] sm:$0xff]
      %v468 = vld [vmem:[%s233 + $0x2b8] sm:$0xff]
      %v469 = vld [vmem:[%s233 + $0x2c0] sm:$0xff]
      %v470 = vld [vmem:[%s233 + $0x2c8] sm:$0xff]
      %v471 = vld [vmem:[%s233 + $0x2d0] sm:$0xff]
      %v472 = vld [vmem:[%s233 + $0x2d8] sm:$0xff]
      %v473 = vld [vmem:[%s233 + $0x2e0] sm:$0xff]
      %v474 = vld [vmem:[%s233 + $0x2e8] sm:$0xff]
      %v475 = vld [vmem:[%s233 + $0x2f0] sm:$0xff]
      %v476 = vld [vmem:[%s233 + $0x2f8] sm:$0xff]
      %v477 = vld [vmem:[%s233 + $0x300] sm:$0xff]
      %v478 = vld [vmem:[%s233 + $0x308] sm:$0xff]
      %v479 = vld [vmem:[%s233 + $0x310] sm:$0xff]
      %v480 = vld [vmem:[%s233 + $0x318] sm:$0xff]
      %v481 = vld [vmem:[%s233 + $0x320] sm:$0xff]
      %v482 = vld [vmem:[%s233 + $0x328] sm:$0xff]
      %v483 = vld [vmem:[%s233 + $0x330] sm:$0xff]
      %v484 = vld [vmem:[%s233 + $0x338] sm:$0xff]
      %v485 = vld [vmem:[%s233 + $0x340] sm:$0xff]
      %v486 = vld [vmem:[%s233 + $0x348] sm:$0xff]
      %v487 = vld [vmem:[%s233 + $0x350] sm:$0xff]
      %v488 = vld [vmem:[%s233 + $0x358] sm:$0xff]
      %v489 = vld [vmem:[%s233 + $0x360] sm:$0xff]
      %v490 = vld [vmem:[%s233 + $0x368] sm:$0xff]
      %v491 = vld [vmem:[%s233 + $0x370] sm:$0xff]
      %v492 = vld [vmem:[%s233 + $0x378] sm:$0xff]
      %v493 = vld [vmem:[%s233 + $0x380] sm:$0xff]
      %v494 = vld [vmem:[%s233 + $0x388] sm:$0xff]
      %v495 = vld [vmem:[%s233 + $0x390] sm:$0xff]
      %v496 = vld [vmem:[%s233 + $0x398] sm:$0xff]
      %v497 = vld [vmem:[%s233 + $0x3a0] sm:$0xff]
      %v498 = vld [vmem:[%s233 + $0x3a8] sm:$0xff]
      %v499 = vld [vmem:[%s233 + $0x3b0] sm:$0xff]
      %v500 = vld [vmem:[%s233 + $0x3b8] sm:$0xff]
      %v501 = vld [vmem:[%s233 + $0x3c0] sm:$0xff]
      %v502 = vld [vmem:[%s233 + $0x3c8] sm:$0xff]
      %v503 = vld [vmem:[%s233 + $0x3d0] sm:$0xff]
      %v504 = vld [vmem:[%s233 + $0x3d8] sm:$0xff]
      %v505 = vld [vmem:[%s233 + $0x3e0] sm:$0xff]
      %v506 = vld [vmem:[%s233 + $0x3e8] sm:$0xff]
      %v507 = vld [vmem:[%s233 + $0x3f0] sm:$0xff]
      %v508 = vld [vmem:[%s233 + $0x3f8] sm:$0xff]
      %v509 = vld [vmem:[%s233 + $0x400] sm:$0xff]
      %v510 = vld [vmem:[%s233 + $0x408] sm:$0xff]
      %v511 = vld [vmem:[%s233 + $0x410] sm:$0xff]
      %v512 = vld [vmem:[%s233 + $0x418] sm:$0xff]
      %v513 = vld [vmem:[%s233 + $0x420] sm:$0xff]
      %v514 = vld [vmem:[%s233 + $0x428] sm:$0xff]
      %v515 = vld [vmem:[%s233 + $0x430] sm:$0xff]
      %v516 = vld [vmem:[%s233 + $0x438] sm:$0xff]
      %v517 = vld [vmem:[%s233 + $0x440] sm:$0xff]
      %v518 = vld [vmem:[%s233 + $0x448] sm:$0xff]
      %v519 = vld [vmem:[%s233 + $0x450] sm:$0xff]
      %v520 = vld [vmem:[%s233 + $0x458] sm:$0xff]
      %v521 = vld [vmem:[%s233 + $0x460] sm:$0xff]
      %v522 = vld [vmem:[%s233 + $0x468] sm:$0xff]
      %v523 = vld [vmem:[%s233 + $0x470] sm:$0xff]
      %v524 = vld [vmem:[%s233 + $0x478] sm:$0xff]
      %v525 = vld [vmem:[%s233 + $0x480] sm:$0xff]
      %v526 = vld [vmem:[%s233 + $0x488] sm:$0xff]
      %v527 = vld [vmem:[%s233 + $0x490] sm:$0xff]
      %v528 = vld [vmem:[%s233 + $0x498] sm:$0xff]
      %v529 = vld [vmem:[%s233 + $0x4a0] sm:$0xff]
      %v530 = vld [vmem:[%s233 + $0x4a8] sm:$0xff]
      %v531 = vld [vmem:[%s233 + $0x4b0] sm:$0xff]
      %v532 = vld [vmem:[%s233 + $0x4b8] sm:$0xff]
      %v533 = vld [vmem:[%s233 + $0x4c0] sm:$0xff]
      %v534 = vld [vmem:[%s233 + $0x4c8] sm:$0xff]
      %v535 = vld [vmem:[%s233 + $0x4d0] sm:$0xff]
      %v536 = vld [vmem:[%s233 + $0x4d8] sm:$0xff]
      %v537 = vld [vmem:[%s233 + $0x4e0] sm:$0xff]
      %v538 = vld [vmem:[%s233 + $0x4e8] sm:$0xff]
      %v539 = vld [vmem:[%s233 + $0x4f0] sm:$0xff]
      %v540 = vld [vmem:[%s233 + $0x4f8] sm:$0xff]
      %v541 = vld [vmem:[%s233 + $0x500] sm:$0xff]
      %v542 = vld [vmem:[%s233 + $0x508] sm:$0xff]
      %v543 = vld [vmem:[%s233 + $0x510] sm:$0xff]
      %v544 = vld [vmem:[%s233 + $0x518] sm:$0xff]
      %v545 = vld [vmem:[%s233 + $0x520] sm:$0xff]
      %v546 = vld [vmem:[%s233 + $0x528] sm:$0xff]
      %v547 = vld [vmem:[%s233 + $0x530] sm:$0xff]
      %v548 = vld [vmem:[%s233 + $0x538] sm:$0xff]
      %v549 = vld [vmem:[%s233 + $0x540] sm:$0xff]
      %v550 = vld [vmem:[%s233 + $0x548] sm:$0xff]
      %v551 = vld [vmem:[%s233 + $0x550] sm:$0xff]
      %v552 = vld [vmem:[%s233 + $0x558] sm:$0xff]
      %v553 = vld [vmem:[%s233 + $0x560] sm:$0xff]
      %v554 = vld [vmem:[%s233 + $0x568] sm:$0xff]
      %v555 = vld [vmem:[%s233 + $0x570] sm:$0xff]
      %v556 = vld [vmem:[%s233 + $0x578] sm:$0xff]
      %v557 = vld [vmem:[%s233 + $0x580] sm:$0xff]
      %v558 = vld [vmem:[%s233 + $0x588] sm:$0xff]
      %v559 = vld [vmem:[%s233 + $0x590] sm:$0xff]
      %v560 = vld [vmem:[%s233 + $0x598] sm:$0xff]
      %v561 = vld [vmem:[%s233 + $0x5a0] sm:$0xff]
      %v562 = vld [vmem:[%s233 + $0x5a8] sm:$0xff]
      %v563 = vld [vmem:[%s233 + $0x5b0] sm:$0xff]
      %v564 = vld [vmem:[%s233 + $0x5b8] sm:$0xff]
      %v565 = vld [vmem:[%s233 + $0x5c0] sm:$0xff]
      %v566 = vld [vmem:[%s233 + $0x5c8] sm:$0xff]
      %v567 = vld [vmem:[%s233 + $0x5d0] sm:$0xff]
      %v568 = vld [vmem:[%s233 + $0x5d8] sm:$0xff]
      %v569 = vld [vmem:[%s233 + $0x5e0] sm:$0xff]
      %v570 = vld [vmem:[%s233 + $0x5e8] sm:$0xff]
      %v571 = vld [vmem:[%s233 + $0x5f0] sm:$0xff]
      %v572 = vld [vmem:[%s233 + $0x5f8] sm:$0xff]
      %v573 = vld [vmem:[%s233 + $0x600] sm:$0xff]
      %v574 = vld [vmem:[%s233 + $0x608] sm:$0xff]
      %v575 = vld [vmem:[%s233 + $0x610] sm:$0xff]
      %v576 = vld [vmem:[%s233 + $0x618] sm:$0xff]
      %v577 = vld [vmem:[%s233 + $0x620] sm:$0xff]
      %v578 = vld [vmem:[%s233 + $0x628] sm:$0xff]
      %v579 = vld [vmem:[%s233 + $0x630] sm:$0xff]
      %v580 = vld [vmem:[%s233 + $0x638] sm:$0xff]
      %v581 = vld [vmem:[%s233 + $0x640] sm:$0xff]
      %v582 = vld [vmem:[%s233 + $0x648] sm:$0xff]
      %v583 = vld [vmem:[%s233 + $0x650] sm:$0xff]
      %v584 = vld [vmem:[%s233 + $0x658] sm:$0xff]
      %v585 = vld [vmem:[%s233 + $0x660] sm:$0xff]
      %v586 = vld [vmem:[%s233 + $0x668] sm:$0xff]
      %v587 = vld [vmem:[%s233 + $0x670] sm:$0xff]
      %v588 = vld [vmem:[%s233 + $0x678] sm:$0xff]
      %v589 = vld [vmem:[%s233 + $0x680] sm:$0xff]
      %v590 = vld [vmem:[%s233 + $0x688] sm:$0xff]
      %v591 = vld [vmem:[%s233 + $0x690] sm:$0xff]
      %v592 = vld [vmem:[%s233 + $0x698] sm:$0xff]
      %v593 = vld [vmem:[%s233 + $0x6a0] sm:$0xff]
      %v594 = vld [vmem:[%s233 + $0x6a8] sm:$0xff]
      %v595 = vld [vmem:[%s233 + $0x6b0] sm:$0xff]
      %v596 = vld [vmem:[%s233 + $0x6b8] sm:$0xff]
      %v597 = vld [vmem:[%s233 + $0x6c0] sm:$0xff]
      %v598 = vld [vmem:[%s233 + $0x6c8] sm:$0xff]
      %v599 = vld [vmem:[%s233 + $0x6d0] sm:$0xff]
      %v600 = vld [vmem:[%s233 + $0x6d8] sm:$0xff]
      %v601 = vld [vmem:[%s233 + $0x6e0] sm:$0xff]
      %v602 = vld [vmem:[%s233 + $0x6e8] sm:$0xff]
      %v603 = vld [vmem:[%s233 + $0x6f0] sm:$0xff]
      %v604 = vld [vmem:[%s233 + $0x6f8] sm:$0xff]
      %v605 = vld [vmem:[%s233 + $0x700] sm:$0xff]
      %v606 = vld [vmem:[%s233 + $0x708] sm:$0xff]
      %v607 = vld [vmem:[%s233 + $0x710] sm:$0xff]
      %v608 = vld [vmem:[%s233 + $0x718] sm:$0xff]
      %v609 = vld [vmem:[%s233 + $0x720] sm:$0xff]
      %v610 = vld [vmem:[%s233 + $0x728] sm:$0xff]
      %v611 = vld [vmem:[%s233 + $0x730] sm:$0xff]
      %v612 = vld [vmem:[%s233 + $0x738] sm:$0xff]
      %v613 = vld [vmem:[%s233 + $0x740] sm:$0xff]
      %v614 = vld [vmem:[%s233 + $0x748] sm:$0xff]
      %v615 = vld [vmem:[%s233 + $0x750] sm:$0xff]
      %v616 = vld [vmem:[%s233 + $0x758] sm:$0xff]
      %v617 = vld [vmem:[%s233 + $0x760] sm:$0xff]
      %v618 = vld [vmem:[%s233 + $0x768] sm:$0xff]
      %v619 = vld [vmem:[%s233 + $0x770] sm:$0xff]
      %v620 = vld [vmem:[%s233 + $0x778] sm:$0xff]
      %v621 = vld [vmem:[%s233 + $0x780] sm:$0xff]
      %v622 = vld [vmem:[%s233 + $0x788] sm:$0xff]
      %v623 = vld [vmem:[%s233 + $0x790] sm:$0xff]
      %v624 = vld [vmem:[%s233 + $0x798] sm:$0xff]
      %v625 = vld [vmem:[%s233 + $0x7a0] sm:$0xff]
      %v626 = vld [vmem:[%s233 + $0x7a8] sm:$0xff]
      %v627 = vld [vmem:[%s233 + $0x7b0] sm:$0xff]
      %v628 = vld [vmem:[%s233 + $0x7b8] sm:$0xff]
      %v629 = vld [vmem:[%s233 + $0x7c0] sm:$0xff]
      %v630 = vld [vmem:[%s233 + $0x7c8] sm:$0xff]
      %v631 = vld [vmem:[%s233 + $0x7d0] sm:$0xff]
      %v632 = vld [vmem:[%s233 + $0x7d8] sm:$0xff]
      %v633 = vld [vmem:[%s233 + $0x7e0] sm:$0xff]
      %v634 = vld [vmem:[%s233 + $0x7e8] sm:$0xff]
      %v635 = vld [vmem:[%s233 + $0x7f0] sm:$0xff]
      %v636 = vld [vmem:[%s233 + $0x7f8] sm:$0xff]
      %s637 = smul.u32 %s21, 125
      %s638 = smul.addr %s637, 4
      %s639 = scalar_lea.vmem %s1, %s638
      %v640 = vld [vmem:[%s639] sm:$0xf]
      %v641 = vld [vmem:[%s639 + $0x4] sm:$0xf]
      %v642 = vld [vmem:[%s639 + $0x8] sm:$0xf]
      %v643 = vld [vmem:[%s639 + $0xc] sm:$0xf]
      %v644 = vld [vmem:[%s639 + $0x10] sm:$0xf]
      %v645 = vld [vmem:[%s639 + $0x14] sm:$0xf]
      %v646 = vld [vmem:[%s639 + $0x18] sm:$0xf]
      %v647 = vld [vmem:[%s639 + $0x1c] sm:$0xf]
      %v648 = vld [vmem:[%s639 + $0x20] sm:$0xf]
      %v649 = vld [vmem:[%s639 + $0x24] sm:$0xf]
      %v650 = vld [vmem:[%s639 + $0x28] sm:$0xf]
      %v651 = vld [vmem:[%s639 + $0x2c] sm:$0xf]
      %v652 = vld [vmem:[%s639 + $0x30] sm:$0xf]
      %v653 = vld [vmem:[%s639 + $0x34] sm:$0xf]
      %v654 = vld [vmem:[%s639 + $0x38] sm:$0xf]
      %v655 = vld [vmem:[%s639 + $0x3c] sm:$0xf]
      %v656 = vld [vmem:[%s639 + $0x40] sm:$0xf]
      %v657 = vld [vmem:[%s639 + $0x44] sm:$0xf]
      %v658 = vld [vmem:[%s639 + $0x48] sm:$0xf]
      %v659 = vld [vmem:[%s639 + $0x4c] sm:$0xf]
      %v660 = vld [vmem:[%s639 + $0x50] sm:$0xf]
      %v661 = vld [vmem:[%s639 + $0x54] sm:$0xf]
      %v662 = vld [vmem:[%s639 + $0x58] sm:$0xf]
      %v663 = vld [vmem:[%s639 + $0x5c] sm:$0xf]
      %v664 = vld [vmem:[%s639 + $0x60] sm:$0xf]
      %v665 = vld [vmem:[%s639 + $0x64] sm:$0xf]
      %v666 = vld [vmem:[%s639 + $0x68] sm:$0xf]
      %v667 = vld [vmem:[%s639 + $0x6c] sm:$0xf]
      %v668 = vld [vmem:[%s639 + $0x70] sm:$0xf]
      %v669 = vld [vmem:[%s639 + $0x74] sm:$0xf]
      %v670 = vld [vmem:[%s639 + $0x78] sm:$0xf]
      %v671 = vld [vmem:[%s639 + $0x7c] sm:$0xf]
      %v672 = vld [vmem:[%s639 + $0x80] sm:$0xf]
      %v673 = vld [vmem:[%s639 + $0x84] sm:$0xf]
      %v674 = vld [vmem:[%s639 + $0x88] sm:$0xf]
      %v675 = vld [vmem:[%s639 + $0x8c] sm:$0xf]
      %v676 = vld [vmem:[%s639 + $0x90] sm:$0xf]
      %v677 = vld [vmem:[%s639 + $0x94] sm:$0xf]
      %v678 = vld [vmem:[%s639 + $0x98] sm:$0xf]
      %v679 = vld [vmem:[%s639 + $0x9c] sm:$0xf]
      %v680 = vld [vmem:[%s639 + $0xa0] sm:$0xf]
      %v681 = vld [vmem:[%s639 + $0xa4] sm:$0xf]
      %v682 = vld [vmem:[%s639 + $0xa8] sm:$0xf]
      %v683 = vld [vmem:[%s639 + $0xac] sm:$0xf]
      %v684 = vld [vmem:[%s639 + $0xb0] sm:$0xf]
      %v685 = vld [vmem:[%s639 + $0xb4] sm:$0xf]
      %v686 = vld [vmem:[%s639 + $0xb8] sm:$0xf]
      %v687 = vld [vmem:[%s639 + $0xbc] sm:$0xf]
      %v688 = vld [vmem:[%s639 + $0xc0] sm:$0xf]
      %v689 = vld [vmem:[%s639 + $0xc4] sm:$0xf]
      %v690 = vld [vmem:[%s639 + $0xc8] sm:$0xf]
      %v691 = vld [vmem:[%s639 + $0xcc] sm:$0xf]
      %v692 = vld [vmem:[%s639 + $0xd0] sm:$0xf]
      %v693 = vld [vmem:[%s639 + $0xd4] sm:$0xf]
      %v694 = vld [vmem:[%s639 + $0xd8] sm:$0xf]
      %v695 = vld [vmem:[%s639 + $0xdc] sm:$0xf]
      %v696 = vld [vmem:[%s639 + $0xe0] sm:$0xf]
      %v697 = vld [vmem:[%s639 + $0xe4] sm:$0xf]
      %v698 = vld [vmem:[%s639 + $0xe8] sm:$0xf]
      %v699 = vld [vmem:[%s639 + $0xec] sm:$0xf]
      %v700 = vld [vmem:[%s639 + $0xf0] sm:$0xf]
      %v701 = vld [vmem:[%s639 + $0xf4] sm:$0xf]
      %v702 = vld [vmem:[%s639 + $0xf8] sm:$0xf]
      %v703 = vld [vmem:[%s639 + $0xfc] sm:$0xf]
      %v704 = vld [vmem:[%s639 + $0x100] sm:$0xf]
      %v705 = vld [vmem:[%s639 + $0x104] sm:$0xf]
      %v706 = vld [vmem:[%s639 + $0x108] sm:$0xf]
      %v707 = vld [vmem:[%s639 + $0x10c] sm:$0xf]
      %v708 = vld [vmem:[%s639 + $0x110] sm:$0xf]
      %v709 = vld [vmem:[%s639 + $0x114] sm:$0xf]
      %v710 = vld [vmem:[%s639 + $0x118] sm:$0xf]
      %v711 = vld [vmem:[%s639 + $0x11c] sm:$0xf]
      %v712 = vld [vmem:[%s639 + $0x120] sm:$0xf]
      %v713 = vld [vmem:[%s639 + $0x124] sm:$0xf]
      %v714 = vld [vmem:[%s639 + $0x128] sm:$0xf]
      %v715 = vld [vmem:[%s639 + $0x12c] sm:$0xf]
      %v716 = vld [vmem:[%s639 + $0x130] sm:$0xf]
      %v717 = vld [vmem:[%s639 + $0x134] sm:$0xf]
      %v718 = vld [vmem:[%s639 + $0x138] sm:$0xf]
      %v719 = vld [vmem:[%s639 + $0x13c] sm:$0xf]
      %v720 = vld [vmem:[%s639 + $0x140] sm:$0xf]
      %v721 = vld [vmem:[%s639 + $0x144] sm:$0xf]
      %v722 = vld [vmem:[%s639 + $0x148] sm:$0xf]
      %v723 = vld [vmem:[%s639 + $0x14c] sm:$0xf]
      %v724 = vld [vmem:[%s639 + $0x150] sm:$0xf]
      %v725 = vld [vmem:[%s639 + $0x154] sm:$0xf]
      %v726 = vld [vmem:[%s639 + $0x158] sm:$0xf]
      %v727 = vld [vmem:[%s639 + $0x15c] sm:$0xf]
      %v728 = vld [vmem:[%s639 + $0x160] sm:$0xf]
      %v729 = vld [vmem:[%s639 + $0x164] sm:$0xf]
      %v730 = vld [vmem:[%s639 + $0x168] sm:$0xf]
      %v731 = vld [vmem:[%s639 + $0x16c] sm:$0xf]
      %v732 = vld [vmem:[%s639 + $0x170] sm:$0xf]
      %v733 = vld [vmem:[%s639 + $0x174] sm:$0xf]
      %v734 = vld [vmem:[%s639 + $0x178] sm:$0xf]
      %v735 = vld [vmem:[%s639 + $0x17c] sm:$0xf]
      %v736 = vld [vmem:[%s639 + $0x180] sm:$0xf]
      %v737 = vld [vmem:[%s639 + $0x184] sm:$0xf]
      %v738 = vld [vmem:[%s639 + $0x188] sm:$0xf]
      %v739 = vld [vmem:[%s639 + $0x18c] sm:$0xf]
      %v740 = vld [vmem:[%s639 + $0x190] sm:$0xf]
      %v741 = vld [vmem:[%s639 + $0x194] sm:$0xf]
      %v742 = vld [vmem:[%s639 + $0x198] sm:$0xf]
      %v743 = vld [vmem:[%s639 + $0x19c] sm:$0xf]
      %v744 = vld [vmem:[%s639 + $0x1a0] sm:$0xf]
      %v745 = vld [vmem:[%s639 + $0x1a4] sm:$0xf]
      %v746 = vld [vmem:[%s639 + $0x1a8] sm:$0xf]
      %v747 = vld [vmem:[%s639 + $0x1ac] sm:$0xf]
      %v748 = vld [vmem:[%s639 + $0x1b0] sm:$0xf]
      %v749 = vld [vmem:[%s639 + $0x1b4] sm:$0xf]
      %v750 = vld [vmem:[%s639 + $0x1b8] sm:$0xf]
      %v751 = vld [vmem:[%s639 + $0x1bc] sm:$0xf]
      %v752 = vld [vmem:[%s639 + $0x1c0] sm:$0xf]
      %v753 = vld [vmem:[%s639 + $0x1c4] sm:$0xf]
      %v754 = vld [vmem:[%s639 + $0x1c8] sm:$0xf]
      %v755 = vld [vmem:[%s639 + $0x1cc] sm:$0xf]
      %v756 = vld [vmem:[%s639 + $0x1d0] sm:$0xf]
      %v757 = vld [vmem:[%s639 + $0x1d4] sm:$0xf]
      %v758 = vld [vmem:[%s639 + $0x1d8] sm:$0xf]
      %v759 = vld [vmem:[%s639 + $0x1dc] sm:$0xf]
      %v760 = vld [vmem:[%s639 + $0x1e0] sm:$0xf]
      %v761 = vld [vmem:[%s639 + $0x1e4] sm:$0xf]
      %v762 = vld [vmem:[%s639 + $0x1e8] sm:$0xf]
      %v763 = vld [vmem:[%s639 + $0x1ec] sm:$0xf]
      %v764 = vld [vmem:[%s639 + $0x1f0] sm:$0xf]
      %v1021 = vunpack.c.l.b16 %v381
      %v1022 = vunpack.c.h.b16 %v381
      %v1023 = vunpack.c.l.b16 %v382
      %v1024 = vunpack.c.h.b16 %v382
      %v1025 = vunpack.c.l.b16 %v383
      %v1026 = vunpack.c.h.b16 %v383
      %v1027 = vunpack.c.l.b16 %v384
      %v1028 = vunpack.c.h.b16 %v384
      %v1029 = vunpack.c.l.b16 %v385
      %v1030 = vunpack.c.h.b16 %v385
      %v1031 = vunpack.c.l.b16 %v386
      %v1032 = vunpack.c.h.b16 %v386
      %v1033 = vunpack.c.l.b16 %v387
      %v1034 = vunpack.c.h.b16 %v387
      %v1035 = vunpack.c.l.b16 %v388
      %v1036 = vunpack.c.h.b16 %v388
      %v1037 = vunpack.c.l.b16 %v389
      %v1038 = vunpack.c.h.b16 %v389
      %v1039 = vunpack.c.l.b16 %v390
      %v1040 = vunpack.c.h.b16 %v390
      %v1041 = vunpack.c.l.b16 %v391
      %v1042 = vunpack.c.h.b16 %v391
      %v1043 = vunpack.c.l.b16 %v392
      %v1044 = vunpack.c.h.b16 %v392
      %v1045 = vunpack.c.l.b16 %v393
      %v1046 = vunpack.c.h.b16 %v393
      %v1047 = vunpack.c.l.b16 %v394
      %v1048 = vunpack.c.h.b16 %v394
      %v1049 = vunpack.c.l.b16 %v395
      %v1050 = vunpack.c.h.b16 %v395
      %v1051 = vunpack.c.l.b16 %v396
      %v1052 = vunpack.c.h.b16 %v396
      %v1053 = vunpack.c.l.b16 %v397
      %v1054 = vunpack.c.h.b16 %v397
      %v1055 = vunpack.c.l.b16 %v398
      %v1056 = vunpack.c.h.b16 %v398
      %v1057 = vunpack.c.l.b16 %v399
      %v1058 = vunpack.c.h.b16 %v399
      %v1059 = vunpack.c.l.b16 %v400
      %v1060 = vunpack.c.h.b16 %v400
      %v1061 = vunpack.c.l.b16 %v401
      %v1062 = vunpack.c.h.b16 %v401
      %v1063 = vunpack.c.l.b16 %v402
      %v1064 = vunpack.c.h.b16 %v402
      %v1065 = vunpack.c.l.b16 %v403
      %v1066 = vunpack.c.h.b16 %v403
      %v1067 = vunpack.c.l.b16 %v404
      %v1068 = vunpack.c.h.b16 %v404
      %v1069 = vunpack.c.l.b16 %v405
      %v1070 = vunpack.c.h.b16 %v405
      %v1071 = vunpack.c.l.b16 %v406
      %v1072 = vunpack.c.h.b16 %v406
      %v1073 = vunpack.c.l.b16 %v407
      %v1074 = vunpack.c.h.b16 %v407
      %v1075 = vunpack.c.l.b16 %v408
      %v1076 = vunpack.c.h.b16 %v408
      %v1077 = vunpack.c.l.b16 %v409
      %v1078 = vunpack.c.h.b16 %v409
      %v1079 = vunpack.c.l.b16 %v410
      %v1080 = vunpack.c.h.b16 %v410
      %v1081 = vunpack.c.l.b16 %v411
      %v1082 = vunpack.c.h.b16 %v411
      %v1083 = vunpack.c.l.b16 %v412
      %v1084 = vunpack.c.h.b16 %v412
      %v1085 = vunpack.c.l.b16 %v413
      %v1086 = vunpack.c.h.b16 %v413
      %v1087 = vunpack.c.l.b16 %v414
      %v1088 = vunpack.c.h.b16 %v414
      %v1089 = vunpack.c.l.b16 %v415
      %v1090 = vunpack.c.h.b16 %v415
      %v1091 = vunpack.c.l.b16 %v416
      %v1092 = vunpack.c.h.b16 %v416
      %v1093 = vunpack.c.l.b16 %v417
      %v1094 = vunpack.c.h.b16 %v417
      %v1095 = vunpack.c.l.b16 %v418
      %v1096 = vunpack.c.h.b16 %v418
      %v1097 = vunpack.c.l.b16 %v419
      %v1098 = vunpack.c.h.b16 %v419
      %v1099 = vunpack.c.l.b16 %v420
      %v1100 = vunpack.c.h.b16 %v420
      %v1101 = vunpack.c.l.b16 %v421
      %v1102 = vunpack.c.h.b16 %v421
      %v1103 = vunpack.c.l.b16 %v422
      %v1104 = vunpack.c.h.b16 %v422
      %v1105 = vunpack.c.l.b16 %v423
      %v1106 = vunpack.c.h.b16 %v423
      %v1107 = vunpack.c.l.b16 %v424
      %v1108 = vunpack.c.h.b16 %v424
      %v1109 = vunpack.c.l.b16 %v425
      %v1110 = vunpack.c.h.b16 %v425
      %v1111 = vunpack.c.l.b16 %v426
      %v1112 = vunpack.c.h.b16 %v426
      %v1113 = vunpack.c.l.b16 %v427
      %v1114 = vunpack.c.h.b16 %v427
      %v1115 = vunpack.c.l.b16 %v428
      %v1116 = vunpack.c.h.b16 %v428
      %v1117 = vunpack.c.l.b16 %v429
      %v1118 = vunpack.c.h.b16 %v429
      %v1119 = vunpack.c.l.b16 %v430
      %v1120 = vunpack.c.h.b16 %v430
      %v1121 = vunpack.c.l.b16 %v431
      %v1122 = vunpack.c.h.b16 %v431
      %v1123 = vunpack.c.l.b16 %v432
      %v1124 = vunpack.c.h.b16 %v432
      %v1125 = vunpack.c.l.b16 %v433
      %v1126 = vunpack.c.h.b16 %v433
      %v1127 = vunpack.c.l.b16 %v434
      %v1128 = vunpack.c.h.b16 %v434
      %v1129 = vunpack.c.l.b16 %v435
      %v1130 = vunpack.c.h.b16 %v435
      %v1131 = vunpack.c.l.b16 %v436
      %v1132 = vunpack.c.h.b16 %v436
      %v1133 = vunpack.c.l.b16 %v437
      %v1134 = vunpack.c.h.b16 %v437
      %v1135 = vunpack.c.l.b16 %v438
      %v1136 = vunpack.c.h.b16 %v438
      %v1137 = vunpack.c.l.b16 %v439
      %v1138 = vunpack.c.h.b16 %v439
      %v1139 = vunpack.c.l.b16 %v440
      %v1140 = vunpack.c.h.b16 %v440
      %v1141 = vunpack.c.l.b16 %v441
      %v1142 = vunpack.c.h.b16 %v441
      %v1143 = vunpack.c.l.b16 %v442
      %v1144 = vunpack.c.h.b16 %v442
      %v1145 = vunpack.c.l.b16 %v443
      %v1146 = vunpack.c.h.b16 %v443
      %v1147 = vunpack.c.l.b16 %v444
      %v1148 = vunpack.c.h.b16 %v444
      %v1149 = vunpack.c.l.b16 %v445
      %v1150 = vunpack.c.h.b16 %v445
      %v1151 = vunpack.c.l.b16 %v446
      %v1152 = vunpack.c.h.b16 %v446
      %v1153 = vunpack.c.l.b16 %v447
      %v1154 = vunpack.c.h.b16 %v447
      %v1155 = vunpack.c.l.b16 %v448
      %v1156 = vunpack.c.h.b16 %v448
      %v1157 = vunpack.c.l.b16 %v449
      %v1158 = vunpack.c.h.b16 %v449
      %v1159 = vunpack.c.l.b16 %v450
      %v1160 = vunpack.c.h.b16 %v450
      %v1161 = vunpack.c.l.b16 %v451
      %v1162 = vunpack.c.h.b16 %v451
      %v1163 = vunpack.c.l.b16 %v452
      %v1164 = vunpack.c.h.b16 %v452
      %v1165 = vunpack.c.l.b16 %v453
      %v1166 = vunpack.c.h.b16 %v453
      %v1167 = vunpack.c.l.b16 %v454
      %v1168 = vunpack.c.h.b16 %v454
      %v1169 = vunpack.c.l.b16 %v455
      %v1170 = vunpack.c.h.b16 %v455
      %v1171 = vunpack.c.l.b16 %v456
      %v1172 = vunpack.c.h.b16 %v456
      %v1173 = vunpack.c.l.b16 %v457
      %v1174 = vunpack.c.h.b16 %v457
      %v1175 = vunpack.c.l.b16 %v458
      %v1176 = vunpack.c.h.b16 %v458
      %v1177 = vunpack.c.l.b16 %v459
      %v1178 = vunpack.c.h.b16 %v459
      %v1179 = vunpack.c.l.b16 %v460
      %v1180 = vunpack.c.h.b16 %v460
      %v1181 = vunpack.c.l.b16 %v461
      %v1182 = vunpack.c.h.b16 %v461
      %v1183 = vunpack.c.l.b16 %v462
      %v1184 = vunpack.c.h.b16 %v462
      %v1185 = vunpack.c.l.b16 %v463
      %v1186 = vunpack.c.h.b16 %v463
      %v1187 = vunpack.c.l.b16 %v464
      %v1188 = vunpack.c.h.b16 %v464
      %v1189 = vunpack.c.l.b16 %v465
      %v1190 = vunpack.c.h.b16 %v465
      %v1191 = vunpack.c.l.b16 %v466
      %v1192 = vunpack.c.h.b16 %v466
      %v1193 = vunpack.c.l.b16 %v467
      %v1194 = vunpack.c.h.b16 %v467
      %v1195 = vunpack.c.l.b16 %v468
      %v1196 = vunpack.c.h.b16 %v468
      %v1197 = vunpack.c.l.b16 %v469
      %v1198 = vunpack.c.h.b16 %v469
      %v1199 = vunpack.c.l.b16 %v470
      %v1200 = vunpack.c.h.b16 %v470
      %v1201 = vunpack.c.l.b16 %v471
      %v1202 = vunpack.c.h.b16 %v471
      %v1203 = vunpack.c.l.b16 %v472
      %v1204 = vunpack.c.h.b16 %v472
      %v1205 = vunpack.c.l.b16 %v473
      %v1206 = vunpack.c.h.b16 %v473
      %v1207 = vunpack.c.l.b16 %v474
      %v1208 = vunpack.c.h.b16 %v474
      %v1209 = vunpack.c.l.b16 %v475
      %v1210 = vunpack.c.h.b16 %v475
      %v1211 = vunpack.c.l.b16 %v476
      %v1212 = vunpack.c.h.b16 %v476
      %v1213 = vunpack.c.l.b16 %v477
      %v1214 = vunpack.c.h.b16 %v477
      %v1215 = vunpack.c.l.b16 %v478
      %v1216 = vunpack.c.h.b16 %v478
      %v1217 = vunpack.c.l.b16 %v479
      %v1218 = vunpack.c.h.b16 %v479
      %v1219 = vunpack.c.l.b16 %v480
      %v1220 = vunpack.c.h.b16 %v480
      %v1221 = vunpack.c.l.b16 %v481
      %v1222 = vunpack.c.h.b16 %v481
      %v1223 = vunpack.c.l.b16 %v482
      %v1224 = vunpack.c.h.b16 %v482
      %v1225 = vunpack.c.l.b16 %v483
      %v1226 = vunpack.c.h.b16 %v483
      %v1227 = vunpack.c.l.b16 %v484
      %v1228 = vunpack.c.h.b16 %v484
      %v1229 = vunpack.c.l.b16 %v485
      %v1230 = vunpack.c.h.b16 %v485
      %v1231 = vunpack.c.l.b16 %v486
      %v1232 = vunpack.c.h.b16 %v486
      %v1233 = vunpack.c.l.b16 %v487
      %v1234 = vunpack.c.h.b16 %v487
      %v1235 = vunpack.c.l.b16 %v488
      %v1236 = vunpack.c.h.b16 %v488
      %v1237 = vunpack.c.l.b16 %v489
      %v1238 = vunpack.c.h.b16 %v489
      %v1239 = vunpack.c.l.b16 %v490
      %v1240 = vunpack.c.h.b16 %v490
      %v1241 = vunpack.c.l.b16 %v491
      %v1242 = vunpack.c.h.b16 %v491
      %v1243 = vunpack.c.l.b16 %v492
      %v1244 = vunpack.c.h.b16 %v492
      %v1245 = vunpack.c.l.b16 %v493
      %v1246 = vunpack.c.h.b16 %v493
      %v1247 = vunpack.c.l.b16 %v494
      %v1248 = vunpack.c.h.b16 %v494
      %v1249 = vunpack.c.l.b16 %v495
      %v1250 = vunpack.c.h.b16 %v495
      %v1251 = vunpack.c.l.b16 %v496
      %v1252 = vunpack.c.h.b16 %v496
      %v1253 = vunpack.c.l.b16 %v497
      %v1254 = vunpack.c.h.b16 %v497
      %v1255 = vunpack.c.l.b16 %v498
      %v1256 = vunpack.c.h.b16 %v498
      %v1257 = vunpack.c.l.b16 %v499
      %v1258 = vunpack.c.h.b16 %v499
      %v1259 = vunpack.c.l.b16 %v500
      %v1260 = vunpack.c.h.b16 %v500
      %v1261 = vunpack.c.l.b16 %v501
      %v1262 = vunpack.c.h.b16 %v501
      %v1263 = vunpack.c.l.b16 %v502
      %v1264 = vunpack.c.h.b16 %v502
      %v1265 = vunpack.c.l.b16 %v503
      %v1266 = vunpack.c.h.b16 %v503
      %v1267 = vunpack.c.l.b16 %v504
      %v1268 = vunpack.c.h.b16 %v504
      %v1269 = vunpack.c.l.b16 %v505
      %v1270 = vunpack.c.h.b16 %v505
      %v1271 = vunpack.c.l.b16 %v506
      %v1272 = vunpack.c.h.b16 %v506
      %v1273 = vunpack.c.l.b16 %v507
      %v1274 = vunpack.c.h.b16 %v507
      %v1275 = vunpack.c.l.b16 %v508
      %v1276 = vunpack.c.h.b16 %v508
      %v1277 = vunpack.c.l.b16 %v509
      %v1278 = vunpack.c.h.b16 %v509
      %v1279 = vunpack.c.l.b16 %v510
      %v1280 = vunpack.c.h.b16 %v510
      %v1281 = vunpack.c.l.b16 %v511
      %v1282 = vunpack.c.h.b16 %v511
      %v1283 = vunpack.c.l.b16 %v512
      %v1284 = vunpack.c.h.b16 %v512
      %v1285 = vunpack.c.l.b16 %v513
      %v1286 = vunpack.c.h.b16 %v513
      %v1287 = vunpack.c.l.b16 %v514
      %v1288 = vunpack.c.h.b16 %v514
      %v1289 = vunpack.c.l.b16 %v515
      %v1290 = vunpack.c.h.b16 %v515
      %v1291 = vunpack.c.l.b16 %v516
      %v1292 = vunpack.c.h.b16 %v516
      %v1293 = vunpack.c.l.b16 %v517
      %v1294 = vunpack.c.h.b16 %v517
      %v1295 = vunpack.c.l.b16 %v518
      %v1296 = vunpack.c.h.b16 %v518
      %v1297 = vunpack.c.l.b16 %v519
      %v1298 = vunpack.c.h.b16 %v519
      %v1299 = vunpack.c.l.b16 %v520
      %v1300 = vunpack.c.h.b16 %v520
      %v1301 = vunpack.c.l.b16 %v521
      %v1302 = vunpack.c.h.b16 %v521
      %v1303 = vunpack.c.l.b16 %v522
      %v1304 = vunpack.c.h.b16 %v522
      %v1305 = vunpack.c.l.b16 %v523
      %v1306 = vunpack.c.h.b16 %v523
      %v1307 = vunpack.c.l.b16 %v524
      %v1308 = vunpack.c.h.b16 %v524
      %v1309 = vunpack.c.l.b16 %v525
      %v1310 = vunpack.c.h.b16 %v525
      %v1311 = vunpack.c.l.b16 %v526
      %v1312 = vunpack.c.h.b16 %v526
      %v1313 = vunpack.c.l.b16 %v527
      %v1314 = vunpack.c.h.b16 %v527
      %v1315 = vunpack.c.l.b16 %v528
      %v1316 = vunpack.c.h.b16 %v528
      %v1317 = vunpack.c.l.b16 %v529
      %v1318 = vunpack.c.h.b16 %v529
      %v1319 = vunpack.c.l.b16 %v530
      %v1320 = vunpack.c.h.b16 %v530
      %v1321 = vunpack.c.l.b16 %v531
      %v1322 = vunpack.c.h.b16 %v531
      %v1323 = vunpack.c.l.b16 %v532
      %v1324 = vunpack.c.h.b16 %v532
      %v1325 = vunpack.c.l.b16 %v533
      %v1326 = vunpack.c.h.b16 %v533
      %v1327 = vunpack.c.l.b16 %v534
      %v1328 = vunpack.c.h.b16 %v534
      %v1329 = vunpack.c.l.b16 %v535
      %v1330 = vunpack.c.h.b16 %v535
      %v1331 = vunpack.c.l.b16 %v536
      %v1332 = vunpack.c.h.b16 %v536
      %v1333 = vunpack.c.l.b16 %v537
      %v1334 = vunpack.c.h.b16 %v537
      %v1335 = vunpack.c.l.b16 %v538
      %v1336 = vunpack.c.h.b16 %v538
      %v1337 = vunpack.c.l.b16 %v539
      %v1338 = vunpack.c.h.b16 %v539
      %v1339 = vunpack.c.l.b16 %v540
      %v1340 = vunpack.c.h.b16 %v540
      %v1341 = vunpack.c.l.b16 %v541
      %v1342 = vunpack.c.h.b16 %v541
      %v1343 = vunpack.c.l.b16 %v542
      %v1344 = vunpack.c.h.b16 %v542
      %v1345 = vunpack.c.l.b16 %v543
      %v1346 = vunpack.c.h.b16 %v543
      %v1347 = vunpack.c.l.b16 %v544
      %v1348 = vunpack.c.h.b16 %v544
      %v1349 = vunpack.c.l.b16 %v545
      %v1350 = vunpack.c.h.b16 %v545
      %v1351 = vunpack.c.l.b16 %v546
      %v1352 = vunpack.c.h.b16 %v546
      %v1353 = vunpack.c.l.b16 %v547
      %v1354 = vunpack.c.h.b16 %v547
      %v1355 = vunpack.c.l.b16 %v548
      %v1356 = vunpack.c.h.b16 %v548
      %v1357 = vunpack.c.l.b16 %v549
      %v1358 = vunpack.c.h.b16 %v549
      %v1359 = vunpack.c.l.b16 %v550
      %v1360 = vunpack.c.h.b16 %v550
      %v1361 = vunpack.c.l.b16 %v551
      %v1362 = vunpack.c.h.b16 %v551
      %v1363 = vunpack.c.l.b16 %v552
      %v1364 = vunpack.c.h.b16 %v552
      %v1365 = vunpack.c.l.b16 %v553
      %v1366 = vunpack.c.h.b16 %v553
      %v1367 = vunpack.c.l.b16 %v554
      %v1368 = vunpack.c.h.b16 %v554
      %v1369 = vunpack.c.l.b16 %v555
      %v1370 = vunpack.c.h.b16 %v555
      %v1371 = vunpack.c.l.b16 %v556
      %v1372 = vunpack.c.h.b16 %v556
      %v1373 = vunpack.c.l.b16 %v557
      %v1374 = vunpack.c.h.b16 %v557
      %v1375 = vunpack.c.l.b16 %v558
      %v1376 = vunpack.c.h.b16 %v558
      %v1377 = vunpack.c.l.b16 %v559
      %v1378 = vunpack.c.h.b16 %v559
      %v1379 = vunpack.c.l.b16 %v560
      %v1380 = vunpack.c.h.b16 %v560
      %v1381 = vunpack.c.l.b16 %v561
      %v1382 = vunpack.c.h.b16 %v561
      %v1383 = vunpack.c.l.b16 %v562
      %v1384 = vunpack.c.h.b16 %v562
      %v1385 = vunpack.c.l.b16 %v563
      %v1386 = vunpack.c.h.b16 %v563
      %v1387 = vunpack.c.l.b16 %v564
      %v1388 = vunpack.c.h.b16 %v564
      %v1389 = vunpack.c.l.b16 %v565
      %v1390 = vunpack.c.h.b16 %v565
      %v1391 = vunpack.c.l.b16 %v566
      %v1392 = vunpack.c.h.b16 %v566
      %v1393 = vunpack.c.l.b16 %v567
      %v1394 = vunpack.c.h.b16 %v567
      %v1395 = vunpack.c.l.b16 %v568
      %v1396 = vunpack.c.h.b16 %v568
      %v1397 = vunpack.c.l.b16 %v569
      %v1398 = vunpack.c.h.b16 %v569
      %v1399 = vunpack.c.l.b16 %v570
      %v1400 = vunpack.c.h.b16 %v570
      %v1401 = vunpack.c.l.b16 %v571
      %v1402 = vunpack.c.h.b16 %v571
      %v1403 = vunpack.c.l.b16 %v572
      %v1404 = vunpack.c.h.b16 %v572
      %v1405 = vunpack.c.l.b16 %v573
      %v1406 = vunpack.c.h.b16 %v573
      %v1407 = vunpack.c.l.b16 %v574
      %v1408 = vunpack.c.h.b16 %v574
      %v1409 = vunpack.c.l.b16 %v575
      %v1410 = vunpack.c.h.b16 %v575
      %v1411 = vunpack.c.l.b16 %v576
      %v1412 = vunpack.c.h.b16 %v576
      %v1413 = vunpack.c.l.b16 %v577
      %v1414 = vunpack.c.h.b16 %v577
      %v1415 = vunpack.c.l.b16 %v578
      %v1416 = vunpack.c.h.b16 %v578
      %v1417 = vunpack.c.l.b16 %v579
      %v1418 = vunpack.c.h.b16 %v579
      %v1419 = vunpack.c.l.b16 %v580
      %v1420 = vunpack.c.h.b16 %v580
      %v1421 = vunpack.c.l.b16 %v581
      %v1422 = vunpack.c.h.b16 %v581
      %v1423 = vunpack.c.l.b16 %v582
      %v1424 = vunpack.c.h.b16 %v582
      %v1425 = vunpack.c.l.b16 %v583
      %v1426 = vunpack.c.h.b16 %v583
      %v1427 = vunpack.c.l.b16 %v584
      %v1428 = vunpack.c.h.b16 %v584
      %v1429 = vunpack.c.l.b16 %v585
      %v1430 = vunpack.c.h.b16 %v585
      %v1431 = vunpack.c.l.b16 %v586
      %v1432 = vunpack.c.h.b16 %v586
      %v1433 = vunpack.c.l.b16 %v587
      %v1434 = vunpack.c.h.b16 %v587
      %v1435 = vunpack.c.l.b16 %v588
      %v1436 = vunpack.c.h.b16 %v588
      %v1437 = vunpack.c.l.b16 %v589
      %v1438 = vunpack.c.h.b16 %v589
      %v1439 = vunpack.c.l.b16 %v590
      %v1440 = vunpack.c.h.b16 %v590
      %v1441 = vunpack.c.l.b16 %v591
      %v1442 = vunpack.c.h.b16 %v591
      %v1443 = vunpack.c.l.b16 %v592
      %v1444 = vunpack.c.h.b16 %v592
      %v1445 = vunpack.c.l.b16 %v593
      %v1446 = vunpack.c.h.b16 %v593
      %v1447 = vunpack.c.l.b16 %v594
      %v1448 = vunpack.c.h.b16 %v594
      %v1449 = vunpack.c.l.b16 %v595
      %v1450 = vunpack.c.h.b16 %v595
      %v1451 = vunpack.c.l.b16 %v596
      %v1452 = vunpack.c.h.b16 %v596
      %v1453 = vunpack.c.l.b16 %v597
      %v1454 = vunpack.c.h.b16 %v597
      %v1455 = vunpack.c.l.b16 %v598
      %v1456 = vunpack.c.h.b16 %v598
      %v1457 = vunpack.c.l.b16 %v599
      %v1458 = vunpack.c.h.b16 %v599
      %v1459 = vunpack.c.l.b16 %v600
      %v1460 = vunpack.c.h.b16 %v600
      %v1461 = vunpack.c.l.b16 %v601
      %v1462 = vunpack.c.h.b16 %v601
      %v1463 = vunpack.c.l.b16 %v602
      %v1464 = vunpack.c.h.b16 %v602
      %v1465 = vunpack.c.l.b16 %v603
      %v1466 = vunpack.c.h.b16 %v603
      %v1467 = vunpack.c.l.b16 %v604
      %v1468 = vunpack.c.h.b16 %v604
      %v1469 = vunpack.c.l.b16 %v605
      %v1470 = vunpack.c.h.b16 %v605
      %v1471 = vunpack.c.l.b16 %v606
      %v1472 = vunpack.c.h.b16 %v606
      %v1473 = vunpack.c.l.b16 %v607
      %v1474 = vunpack.c.h.b16 %v607
      %v1475 = vunpack.c.l.b16 %v608
      %v1476 = vunpack.c.h.b16 %v608
      %v1477 = vunpack.c.l.b16 %v609
      %v1478 = vunpack.c.h.b16 %v609
      %v1479 = vunpack.c.l.b16 %v610
      %v1480 = vunpack.c.h.b16 %v610
      %v1481 = vunpack.c.l.b16 %v611
      %v1482 = vunpack.c.h.b16 %v611
      %v1483 = vunpack.c.l.b16 %v612
      %v1484 = vunpack.c.h.b16 %v612
      %v1485 = vunpack.c.l.b16 %v613
      %v1486 = vunpack.c.h.b16 %v613
      %v1487 = vunpack.c.l.b16 %v614
      %v1488 = vunpack.c.h.b16 %v614
      %v1489 = vunpack.c.l.b16 %v615
      %v1490 = vunpack.c.h.b16 %v615
      %v1491 = vunpack.c.l.b16 %v616
      %v1492 = vunpack.c.h.b16 %v616
      %v1493 = vunpack.c.l.b16 %v617
      %v1494 = vunpack.c.h.b16 %v617
      %v1495 = vunpack.c.l.b16 %v618
      %v1496 = vunpack.c.h.b16 %v618
      %v1497 = vunpack.c.l.b16 %v619
      %v1498 = vunpack.c.h.b16 %v619
      %v1499 = vunpack.c.l.b16 %v620
      %v1500 = vunpack.c.h.b16 %v620
      %v1501 = vunpack.c.l.b16 %v621
      %v1502 = vunpack.c.h.b16 %v621
      %v1503 = vunpack.c.l.b16 %v622
      %v1504 = vunpack.c.h.b16 %v622
      %v1505 = vunpack.c.l.b16 %v623
      %v1506 = vunpack.c.h.b16 %v623
      %v1507 = vunpack.c.l.b16 %v624
      %v1508 = vunpack.c.h.b16 %v624
      %v1509 = vunpack.c.l.b16 %v625
      %v1510 = vunpack.c.h.b16 %v625
      %v1511 = vunpack.c.l.b16 %v626
      %v1512 = vunpack.c.h.b16 %v626
      %v1513 = vunpack.c.l.b16 %v627
      %v1514 = vunpack.c.h.b16 %v627
      %v1515 = vunpack.c.l.b16 %v628
      %v1516 = vunpack.c.h.b16 %v628
      %v1517 = vunpack.c.l.b16 %v629
      %v1518 = vunpack.c.h.b16 %v629
      %v1519 = vunpack.c.l.b16 %v630
      %v1520 = vunpack.c.h.b16 %v630
      %v1521 = vunpack.c.l.b16 %v631
      %v1522 = vunpack.c.h.b16 %v631
      %v1523 = vunpack.c.l.b16 %v632
      %v1524 = vunpack.c.h.b16 %v632
      %v1525 = vunpack.c.l.b16 %v633
      %v1526 = vunpack.c.h.b16 %v633
      %v1527 = vunpack.c.l.b16 %v634
      %v1528 = vunpack.c.h.b16 %v634
      %v1529 = vunpack.c.l.b16 %v635
      %v1530 = vunpack.c.h.b16 %v635
      %v1531 = vunpack.c.l.b16 %v636
      %v1532 = vunpack.c.h.b16 %v636
      %v1533 = vpack.c.b16 %v1029, %v1021
      %v1534 = vpack.c.b16 %v1030, %v1022
      %v1535 = vpack.c.b16 %v1031, %v1023
      %v1536 = vpack.c.b16 %v1032, %v1024
      %v1537 = vpack.c.b16 %v1033, %v1025
      %v1538 = vpack.c.b16 %v1034, %v1026
      %v1539 = vpack.c.b16 %v1035, %v1027
      %v1540 = vpack.c.b16 %v1036, %v1028
      %v1541 = vpack.c.b16 %v1045, %v1037
      %v1542 = vpack.c.b16 %v1046, %v1038
      %v1543 = vpack.c.b16 %v1047, %v1039
      %v1544 = vpack.c.b16 %v1048, %v1040
      %v1545 = vpack.c.b16 %v1049, %v1041
      %v1546 = vpack.c.b16 %v1050, %v1042
      %v1547 = vpack.c.b16 %v1051, %v1043
      %v1548 = vpack.c.b16 %v1052, %v1044
      %v1549 = vpack.c.b16 %v1061, %v1053
      %v1550 = vpack.c.b16 %v1062, %v1054
      %v1551 = vpack.c.b16 %v1063, %v1055
      %v1552 = vpack.c.b16 %v1064, %v1056
      %v1553 = vpack.c.b16 %v1065, %v1057
      %v1554 = vpack.c.b16 %v1066, %v1058
      %v1555 = vpack.c.b16 %v1067, %v1059
      %v1556 = vpack.c.b16 %v1068, %v1060
      %v1557 = vpack.c.b16 %v1077, %v1069
      %v1558 = vpack.c.b16 %v1078, %v1070
      %v1559 = vpack.c.b16 %v1079, %v1071
      %v1560 = vpack.c.b16 %v1080, %v1072
      %v1561 = vpack.c.b16 %v1081, %v1073
      %v1562 = vpack.c.b16 %v1082, %v1074
      %v1563 = vpack.c.b16 %v1083, %v1075
      %v1564 = vpack.c.b16 %v1084, %v1076
      %v1565 = vpack.c.b16 %v1093, %v1085
      %v1566 = vpack.c.b16 %v1094, %v1086
      %v1567 = vpack.c.b16 %v1095, %v1087
      %v1568 = vpack.c.b16 %v1096, %v1088
      %v1569 = vpack.c.b16 %v1097, %v1089
      %v1570 = vpack.c.b16 %v1098, %v1090
      %v1571 = vpack.c.b16 %v1099, %v1091
      %v1572 = vpack.c.b16 %v1100, %v1092
      %v1573 = vpack.c.b16 %v1109, %v1101
      %v1574 = vpack.c.b16 %v1110, %v1102
      %v1575 = vpack.c.b16 %v1111, %v1103
      %v1576 = vpack.c.b16 %v1112, %v1104
      %v1577 = vpack.c.b16 %v1113, %v1105
      %v1578 = vpack.c.b16 %v1114, %v1106
      %v1579 = vpack.c.b16 %v1115, %v1107
      %v1580 = vpack.c.b16 %v1116, %v1108
      %v1581 = vpack.c.b16 %v1125, %v1117
      %v1582 = vpack.c.b16 %v1126, %v1118
      %v1583 = vpack.c.b16 %v1127, %v1119
      %v1584 = vpack.c.b16 %v1128, %v1120
      %v1585 = vpack.c.b16 %v1129, %v1121
      %v1586 = vpack.c.b16 %v1130, %v1122
      %v1587 = vpack.c.b16 %v1131, %v1123
      %v1588 = vpack.c.b16 %v1132, %v1124
      %v1589 = vpack.c.b16 %v1141, %v1133
      %v1590 = vpack.c.b16 %v1142, %v1134
      %v1591 = vpack.c.b16 %v1143, %v1135
      %v1592 = vpack.c.b16 %v1144, %v1136
      %v1593 = vpack.c.b16 %v1145, %v1137
      %v1594 = vpack.c.b16 %v1146, %v1138
      %v1595 = vpack.c.b16 %v1147, %v1139
      %v1596 = vpack.c.b16 %v1148, %v1140
      %v1597 = vpack.c.b16 %v1157, %v1149
      %v1598 = vpack.c.b16 %v1158, %v1150
      %v1599 = vpack.c.b16 %v1159, %v1151
      %v1600 = vpack.c.b16 %v1160, %v1152
      %v1601 = vpack.c.b16 %v1161, %v1153
      %v1602 = vpack.c.b16 %v1162, %v1154
      %v1603 = vpack.c.b16 %v1163, %v1155
      %v1604 = vpack.c.b16 %v1164, %v1156
      %v1605 = vpack.c.b16 %v1173, %v1165
      %v1606 = vpack.c.b16 %v1174, %v1166
      %v1607 = vpack.c.b16 %v1175, %v1167
      %v1608 = vpack.c.b16 %v1176, %v1168
      %v1609 = vpack.c.b16 %v1177, %v1169
      %v1610 = vpack.c.b16 %v1178, %v1170
      %v1611 = vpack.c.b16 %v1179, %v1171
      %v1612 = vpack.c.b16 %v1180, %v1172
      %v1613 = vpack.c.b16 %v1189, %v1181
      %v1614 = vpack.c.b16 %v1190, %v1182
      %v1615 = vpack.c.b16 %v1191, %v1183
      %v1616 = vpack.c.b16 %v1192, %v1184
      %v1617 = vpack.c.b16 %v1193, %v1185
      %v1618 = vpack.c.b16 %v1194, %v1186
      %v1619 = vpack.c.b16 %v1195, %v1187
      %v1620 = vpack.c.b16 %v1196, %v1188
      %v1621 = vpack.c.b16 %v1205, %v1197
      %v1622 = vpack.c.b16 %v1206, %v1198
      %v1623 = vpack.c.b16 %v1207, %v1199
      %v1624 = vpack.c.b16 %v1208, %v1200
      %v1625 = vpack.c.b16 %v1209, %v1201
      %v1626 = vpack.c.b16 %v1210, %v1202
      %v1627 = vpack.c.b16 %v1211, %v1203
      %v1628 = vpack.c.b16 %v1212, %v1204
      %v1629 = vpack.c.b16 %v1221, %v1213
      %v1630 = vpack.c.b16 %v1222, %v1214
      %v1631 = vpack.c.b16 %v1223, %v1215
      %v1632 = vpack.c.b16 %v1224, %v1216
      %v1633 = vpack.c.b16 %v1225, %v1217
      %v1634 = vpack.c.b16 %v1226, %v1218
      %v1635 = vpack.c.b16 %v1227, %v1219
      %v1636 = vpack.c.b16 %v1228, %v1220
      %v1637 = vpack.c.b16 %v1237, %v1229
      %v1638 = vpack.c.b16 %v1238, %v1230
      %v1639 = vpack.c.b16 %v1239, %v1231
      %v1640 = vpack.c.b16 %v1240, %v1232
      %v1641 = vpack.c.b16 %v1241, %v1233
      %v1642 = vpack.c.b16 %v1242, %v1234
      %v1643 = vpack.c.b16 %v1243, %v1235
      %v1644 = vpack.c.b16 %v1244, %v1236
      %v1645 = vpack.c.b16 %v1253, %v1245
      %v1646 = vpack.c.b16 %v1254, %v1246
      %v1647 = vpack.c.b16 %v1255, %v1247
      %v1648 = vpack.c.b16 %v1256, %v1248
      %v1649 = vpack.c.b16 %v1257, %v1249
      %v1650 = vpack.c.b16 %v1258, %v1250
      %v1651 = vpack.c.b16 %v1259, %v1251
      %v1652 = vpack.c.b16 %v1260, %v1252
      %v1653 = vpack.c.b16 %v1269, %v1261
      %v1654 = vpack.c.b16 %v1270, %v1262
      %v1655 = vpack.c.b16 %v1271, %v1263
      %v1656 = vpack.c.b16 %v1272, %v1264
      %v1657 = vpack.c.b16 %v1273, %v1265
      %v1658 = vpack.c.b16 %v1274, %v1266
      %v1659 = vpack.c.b16 %v1275, %v1267
      %v1660 = vpack.c.b16 %v1276, %v1268
      %v1661 = vpack.c.b16 %v1285, %v1277
      %v1662 = vpack.c.b16 %v1286, %v1278
      %v1663 = vpack.c.b16 %v1287, %v1279
      %v1664 = vpack.c.b16 %v1288, %v1280
      %v1665 = vpack.c.b16 %v1289, %v1281
      %v1666 = vpack.c.b16 %v1290, %v1282
      %v1667 = vpack.c.b16 %v1291, %v1283
      %v1668 = vpack.c.b16 %v1292, %v1284
      %v1669 = vpack.c.b16 %v1301, %v1293
      %v1670 = vpack.c.b16 %v1302, %v1294
      %v1671 = vpack.c.b16 %v1303, %v1295
      %v1672 = vpack.c.b16 %v1304, %v1296
      %v1673 = vpack.c.b16 %v1305, %v1297
      %v1674 = vpack.c.b16 %v1306, %v1298
      %v1675 = vpack.c.b16 %v1307, %v1299
      %v1676 = vpack.c.b16 %v1308, %v1300
      %v1677 = vpack.c.b16 %v1317, %v1309
      %v1678 = vpack.c.b16 %v1318, %v1310
      %v1679 = vpack.c.b16 %v1319, %v1311
      %v1680 = vpack.c.b16 %v1320, %v1312
      %v1681 = vpack.c.b16 %v1321, %v1313
      %v1682 = vpack.c.b16 %v1322, %v1314
      %v1683 = vpack.c.b16 %v1323, %v1315
      %v1684 = vpack.c.b16 %v1324, %v1316
      %v1685 = vpack.c.b16 %v1333, %v1325
      %v1686 = vpack.c.b16 %v1334, %v1326
      %v1687 = vpack.c.b16 %v1335, %v1327
      %v1688 = vpack.c.b16 %v1336, %v1328
      %v1689 = vpack.c.b16 %v1337, %v1329
      %v1690 = vpack.c.b16 %v1338, %v1330
      %v1691 = vpack.c.b16 %v1339, %v1331
      %v1692 = vpack.c.b16 %v1340, %v1332
      %v1693 = vpack.c.b16 %v1349, %v1341
      %v1694 = vpack.c.b16 %v1350, %v1342
      %v1695 = vpack.c.b16 %v1351, %v1343
      %v1696 = vpack.c.b16 %v1352, %v1344
      %v1697 = vpack.c.b16 %v1353, %v1345
      %v1698 = vpack.c.b16 %v1354, %v1346
      %v1699 = vpack.c.b16 %v1355, %v1347
      %v1700 = vpack.c.b16 %v1356, %v1348
      %v1701 = vpack.c.b16 %v1365, %v1357
      %v1702 = vpack.c.b16 %v1366, %v1358
      %v1703 = vpack.c.b16 %v1367, %v1359
      %v1704 = vpack.c.b16 %v1368, %v1360
      %v1705 = vpack.c.b16 %v1369, %v1361
      %v1706 = vpack.c.b16 %v1370, %v1362
      %v1707 = vpack.c.b16 %v1371, %v1363
      %v1708 = vpack.c.b16 %v1372, %v1364
      %v1709 = vpack.c.b16 %v1381, %v1373
      %v1710 = vpack.c.b16 %v1382, %v1374
      %v1711 = vpack.c.b16 %v1383, %v1375
      %v1712 = vpack.c.b16 %v1384, %v1376
      %v1713 = vpack.c.b16 %v1385, %v1377
      %v1714 = vpack.c.b16 %v1386, %v1378
      %v1715 = vpack.c.b16 %v1387, %v1379
      %v1716 = vpack.c.b16 %v1388, %v1380
      %v1717 = vpack.c.b16 %v1397, %v1389
      %v1718 = vpack.c.b16 %v1398, %v1390
      %v1719 = vpack.c.b16 %v1399, %v1391
      %v1720 = vpack.c.b16 %v1400, %v1392
      %v1721 = vpack.c.b16 %v1401, %v1393
      %v1722 = vpack.c.b16 %v1402, %v1394
      %v1723 = vpack.c.b16 %v1403, %v1395
      %v1724 = vpack.c.b16 %v1404, %v1396
      %v1725 = vpack.c.b16 %v1413, %v1405
      %v1726 = vpack.c.b16 %v1414, %v1406
      %v1727 = vpack.c.b16 %v1415, %v1407
      %v1728 = vpack.c.b16 %v1416, %v1408
      %v1729 = vpack.c.b16 %v1417, %v1409
      %v1730 = vpack.c.b16 %v1418, %v1410
      %v1731 = vpack.c.b16 %v1419, %v1411
      %v1732 = vpack.c.b16 %v1420, %v1412
      %v1733 = vpack.c.b16 %v1429, %v1421
      %v1734 = vpack.c.b16 %v1430, %v1422
      %v1735 = vpack.c.b16 %v1431, %v1423
      %v1736 = vpack.c.b16 %v1432, %v1424
      %v1737 = vpack.c.b16 %v1433, %v1425
      %v1738 = vpack.c.b16 %v1434, %v1426
      %v1739 = vpack.c.b16 %v1435, %v1427
      %v1740 = vpack.c.b16 %v1436, %v1428
      %v1741 = vpack.c.b16 %v1445, %v1437
      %v1742 = vpack.c.b16 %v1446, %v1438
      %v1743 = vpack.c.b16 %v1447, %v1439
      %v1744 = vpack.c.b16 %v1448, %v1440
      %v1745 = vpack.c.b16 %v1449, %v1441
      %v1746 = vpack.c.b16 %v1450, %v1442
      %v1747 = vpack.c.b16 %v1451, %v1443
      %v1748 = vpack.c.b16 %v1452, %v1444
      %v1749 = vpack.c.b16 %v1461, %v1453
      %v1750 = vpack.c.b16 %v1462, %v1454
      %v1751 = vpack.c.b16 %v1463, %v1455
      %v1752 = vpack.c.b16 %v1464, %v1456
      %v1753 = vpack.c.b16 %v1465, %v1457
      %v1754 = vpack.c.b16 %v1466, %v1458
      %v1755 = vpack.c.b16 %v1467, %v1459
      %v1756 = vpack.c.b16 %v1468, %v1460
      %v1757 = vpack.c.b16 %v1477, %v1469
      %v1758 = vpack.c.b16 %v1478, %v1470
      %v1759 = vpack.c.b16 %v1479, %v1471
      %v1760 = vpack.c.b16 %v1480, %v1472
      %v1761 = vpack.c.b16 %v1481, %v1473
      %v1762 = vpack.c.b16 %v1482, %v1474
      %v1763 = vpack.c.b16 %v1483, %v1475
      %v1764 = vpack.c.b16 %v1484, %v1476
      %v1765 = vpack.c.b16 %v1493, %v1485
      %v1766 = vpack.c.b16 %v1494, %v1486
      %v1767 = vpack.c.b16 %v1495, %v1487
      %v1768 = vpack.c.b16 %v1496, %v1488
      %v1769 = vpack.c.b16 %v1497, %v1489
      %v1770 = vpack.c.b16 %v1498, %v1490
      %v1771 = vpack.c.b16 %v1499, %v1491
      %v1772 = vpack.c.b16 %v1500, %v1492
      %v1773 = vpack.c.b16 %v1509, %v1501
      %v1774 = vpack.c.b16 %v1510, %v1502
      %v1775 = vpack.c.b16 %v1511, %v1503
      %v1776 = vpack.c.b16 %v1512, %v1504
      %v1777 = vpack.c.b16 %v1513, %v1505
      %v1778 = vpack.c.b16 %v1514, %v1506
      %v1779 = vpack.c.b16 %v1515, %v1507
      %v1780 = vpack.c.b16 %v1516, %v1508
      %v1781 = vpack.c.b16 %v1525, %v1517
      %v1782 = vpack.c.b16 %v1526, %v1518
      %v1783 = vpack.c.b16 %v1527, %v1519
      %v1784 = vpack.c.b16 %v1528, %v1520
      %v1785 = vpack.c.b16 %v1529, %v1521
      %v1786 = vpack.c.b16 %v1530, %v1522
      %v1787 = vpack.c.b16 %v1531, %v1523
      %v1788 = vpack.c.b16 %v1532, %v1524
      %v2138 = vunpack.c.l.b16 %v640
      %v2139 = vunpack.c.l.b16 %v641
      %v2140 = vunpack.c.l.b16 %v642
      %v2141 = vunpack.c.l.b16 %v643
      %v2142 = vunpack.c.l.b16 %v644
      %v2143 = vunpack.c.l.b16 %v645
      %v2144 = vunpack.c.l.b16 %v646
      %v2145 = vunpack.c.l.b16 %v647
      %v2146 = vunpack.c.l.b16 %v648
      %v2147 = vunpack.c.l.b16 %v649
      %v2148 = vunpack.c.l.b16 %v650
      %v2149 = vunpack.c.l.b16 %v651
      %v2150 = vunpack.c.l.b16 %v652
      %v2151 = vunpack.c.l.b16 %v653
      %v2152 = vunpack.c.l.b16 %v654
      %v2153 = vunpack.c.l.b16 %v655
      %v2154 = vunpack.c.l.b16 %v656
      %v2155 = vunpack.c.l.b16 %v657
      %v2156 = vunpack.c.l.b16 %v658
      %v2157 = vunpack.c.l.b16 %v659
      %v2158 = vunpack.c.l.b16 %v660
      %v2159 = vunpack.c.l.b16 %v661
      %v2160 = vunpack.c.l.b16 %v662
      %v2161 = vunpack.c.l.b16 %v663
      %v2162 = vunpack.c.l.b16 %v664
      %v2163 = vunpack.c.l.b16 %v665
      %v2164 = vunpack.c.l.b16 %v666
      %v2165 = vunpack.c.l.b16 %v667
      %v2166 = vunpack.c.l.b16 %v668
      %v2167 = vunpack.c.l.b16 %v669
      %v2168 = vunpack.c.l.b16 %v670
      %v2169 = vunpack.c.l.b16 %v671
      %v2170 = vunpack.c.l.b16 %v672
      %v2171 = vunpack.c.l.b16 %v673
      %v2172 = vunpack.c.l.b16 %v674
      %v2173 = vunpack.c.l.b16 %v675
      %v2174 = vunpack.c.l.b16 %v676
      %v2175 = vunpack.c.l.b16 %v677
      %v2176 = vunpack.c.l.b16 %v678
      %v2177 = vunpack.c.l.b16 %v679
      %v2178 = vunpack.c.l.b16 %v680
      %v2179 = vunpack.c.l.b16 %v681
      %v2180 = vunpack.c.l.b16 %v682
      %v2181 = vunpack.c.l.b16 %v683
      %v2182 = vunpack.c.l.b16 %v684
      %v2183 = vunpack.c.l.b16 %v685
      %v2184 = vunpack.c.l.b16 %v686
      %v2185 = vunpack.c.l.b16 %v687
      %v2186 = vunpack.c.l.b16 %v688
      %v2187 = vunpack.c.l.b16 %v689
      %v2188 = vunpack.c.l.b16 %v690
      %v2189 = vunpack.c.l.b16 %v691
      %v2190 = vunpack.c.l.b16 %v692
      %v2191 = vunpack.c.l.b16 %v693
      %v2192 = vunpack.c.l.b16 %v694
      %v2193 = vunpack.c.l.b16 %v695
      %v2194 = vunpack.c.l.b16 %v696
      %v2195 = vunpack.c.l.b16 %v697
      %v2196 = vunpack.c.l.b16 %v698
      %v2197 = vunpack.c.l.b16 %v699
      %v2198 = vunpack.c.l.b16 %v700
      %v2199 = vunpack.c.l.b16 %v701
      %v2200 = vunpack.c.l.b16 %v702
      %v2201 = vunpack.c.l.b16 %v703
      %v2202 = vunpack.c.l.b16 %v704
      %v2203 = vunpack.c.l.b16 %v705
      %v2204 = vunpack.c.l.b16 %v706
      %v2205 = vunpack.c.l.b16 %v707
      %v2206 = vunpack.c.l.b16 %v708
      %v2207 = vunpack.c.l.b16 %v709
      %v2208 = vunpack.c.l.b16 %v710
      %v2209 = vunpack.c.l.b16 %v711
      %v2210 = vunpack.c.l.b16 %v712
      %v2211 = vunpack.c.l.b16 %v713
      %v2212 = vunpack.c.l.b16 %v714
      %v2213 = vunpack.c.l.b16 %v715
      %v2214 = vunpack.c.l.b16 %v716
      %v2215 = vunpack.c.l.b16 %v717
      %v2216 = vunpack.c.l.b16 %v718
      %v2217 = vunpack.c.l.b16 %v719
      %v2218 = vunpack.c.l.b16 %v720
      %v2219 = vunpack.c.l.b16 %v721
      %v2220 = vunpack.c.l.b16 %v722
      %v2221 = vunpack.c.l.b16 %v723
      %v2222 = vunpack.c.l.b16 %v724
      %v2223 = vunpack.c.l.b16 %v725
      %v2224 = vunpack.c.l.b16 %v726
      %v2225 = vunpack.c.l.b16 %v727
      %v2226 = vunpack.c.l.b16 %v728
      %v2227 = vunpack.c.l.b16 %v729
      %v2228 = vunpack.c.l.b16 %v730
      %v2229 = vunpack.c.l.b16 %v731
      %v2230 = vunpack.c.l.b16 %v732
      %v2231 = vunpack.c.l.b16 %v733
      %v2232 = vunpack.c.l.b16 %v734
      %v2233 = vunpack.c.l.b16 %v735
      %v2234 = vunpack.c.l.b16 %v736
      %v2235 = vunpack.c.l.b16 %v737
      %v2236 = vunpack.c.l.b16 %v738
      %v2237 = vunpack.c.l.b16 %v739
      %v2238 = vunpack.c.l.b16 %v740
      %v2239 = vunpack.c.l.b16 %v741
      %v2240 = vunpack.c.l.b16 %v742
      %v2241 = vunpack.c.l.b16 %v743
      %v2242 = vunpack.c.l.b16 %v744
      %v2243 = vunpack.c.l.b16 %v745
      %v2244 = vunpack.c.l.b16 %v746
      %v2245 = vunpack.c.l.b16 %v747
      %v2246 = vunpack.c.l.b16 %v748
      %v2247 = vunpack.c.l.b16 %v749
      %v2248 = vunpack.c.l.b16 %v750
      %v2249 = vunpack.c.l.b16 %v751
      %v2250 = vunpack.c.l.b16 %v752
      %v2251 = vunpack.c.l.b16 %v753
      %v2252 = vunpack.c.l.b16 %v754
      %v2253 = vunpack.c.l.b16 %v755
      %v2254 = vunpack.c.l.b16 %v756
      %v2255 = vunpack.c.l.b16 %v757
      %v2256 = vunpack.c.l.b16 %v758
      %v2257 = vunpack.c.l.b16 %v759
      %v2258 = vunpack.c.l.b16 %v760
      %v2259 = vunpack.c.l.b16 %v761
      %v2260 = vunpack.c.l.b16 %v762
      %v2261 = vunpack.c.l.b16 %v763
      %v2262 = vunpack.c.l.b16 %v764
      %v2263 = vpack.c.b16 %v2139, %v2138
      %v2264 = vpack.c.b16 %v2141, %v2140
      %v2265 = vpack.c.b16 %v2143, %v2142
      %v2266 = vpack.c.b16 %v2145, %v2144
      %v2267 = vpack.c.b16 %v2147, %v2146
      %v2268 = vpack.c.b16 %v2149, %v2148
      %v2269 = vpack.c.b16 %v2151, %v2150
      %v2270 = vpack.c.b16 %v2153, %v2152
      %v2271 = vpack.c.b16 %v2155, %v2154
      %v2272 = vpack.c.b16 %v2157, %v2156
      %v2273 = vpack.c.b16 %v2159, %v2158
      %v2274 = vpack.c.b16 %v2161, %v2160
      %v2275 = vpack.c.b16 %v2163, %v2162
      %v2276 = vpack.c.b16 %v2165, %v2164
      %v2277 = vpack.c.b16 %v2167, %v2166
      %v2278 = vpack.c.b16 %v2169, %v2168
      %v2279 = vpack.c.b16 %v2171, %v2170
      %v2280 = vpack.c.b16 %v2173, %v2172
      %v2281 = vpack.c.b16 %v2175, %v2174
      %v2282 = vpack.c.b16 %v2177, %v2176
      %v2283 = vpack.c.b16 %v2179, %v2178
      %v2284 = vpack.c.b16 %v2181, %v2180
      %v2285 = vpack.c.b16 %v2183, %v2182
      %v2286 = vpack.c.b16 %v2185, %v2184
      %v2287 = vpack.c.b16 %v2187, %v2186
      %v2288 = vpack.c.b16 %v2189, %v2188
      %v2289 = vpack.c.b16 %v2191, %v2190
      %v2290 = vpack.c.b16 %v2193, %v2192
      %v2291 = vpack.c.b16 %v2195, %v2194
      %v2292 = vpack.c.b16 %v2197, %v2196
      %v2293 = vpack.c.b16 %v2199, %v2198
      %v2294 = vpack.c.b16 %v2201, %v2200
      %v2295 = vpack.c.b16 %v2203, %v2202
      %v2296 = vpack.c.b16 %v2205, %v2204
      %v2297 = vpack.c.b16 %v2207, %v2206
      %v2298 = vpack.c.b16 %v2209, %v2208
      %v2299 = vpack.c.b16 %v2211, %v2210
      %v2300 = vpack.c.b16 %v2213, %v2212
      %v2301 = vpack.c.b16 %v2215, %v2214
      %v2302 = vpack.c.b16 %v2217, %v2216
      %v2303 = vpack.c.b16 %v2219, %v2218
      %v2304 = vpack.c.b16 %v2221, %v2220
      %v2305 = vpack.c.b16 %v2223, %v2222
      %v2306 = vpack.c.b16 %v2225, %v2224
      %v2307 = vpack.c.b16 %v2227, %v2226
      %v2308 = vpack.c.b16 %v2229, %v2228
      %v2309 = vpack.c.b16 %v2231, %v2230
      %v2310 = vpack.c.b16 %v2233, %v2232
      %v2311 = vpack.c.b16 %v2235, %v2234
      %v2312 = vpack.c.b16 %v2237, %v2236
      %v2313 = vpack.c.b16 %v2239, %v2238
      %v2314 = vpack.c.b16 %v2241, %v2240
      %v2315 = vpack.c.b16 %v2243, %v2242
      %v2316 = vpack.c.b16 %v2245, %v2244
      %v2317 = vpack.c.b16 %v2247, %v2246
      %v2318 = vpack.c.b16 %v2249, %v2248
      %v2319 = vpack.c.b16 %v2251, %v2250
      %v2320 = vpack.c.b16 %v2253, %v2252
      %v2321 = vpack.c.b16 %v2255, %v2254
      %v2322 = vpack.c.b16 %v2257, %v2256
      %v2323 = vpack.c.b16 %v2259, %v2258
      %v2324 = vpack.c.b16 %v2261, %v2260
      %v2325 = vpack.c.b16 %v2262, %v2262
      %vm2388 = vcmask 850944
      %v2390 = vsel %vm2388, %v1540, 0
      %v2393 = vsel %vm2388, %v1548, 0
      %v2396 = vsel %vm2388, %v1556, 0
      %v2399 = vsel %vm2388, %v1564, 0
      %v2402 = vsel %vm2388, %v1572, 0
      %v2405 = vsel %vm2388, %v1580, 0
      %v2408 = vsel %vm2388, %v1588, 0
      %v2411 = vsel %vm2388, %v1596, 0
      %v2414 = vsel %vm2388, %v1604, 0
      %v2417 = vsel %vm2388, %v1612, 0
      %v2420 = vsel %vm2388, %v1620, 0
      %v2423 = vsel %vm2388, %v1628, 0
      %v2426 = vsel %vm2388, %v1636, 0
      %v2429 = vsel %vm2388, %v1644, 0
      %v2432 = vsel %vm2388, %v1652, 0
      %v2435 = vsel %vm2388, %v1660, 0
      %v2438 = vsel %vm2388, %v1668, 0
      %v2441 = vsel %vm2388, %v1676, 0
      %v2444 = vsel %vm2388, %v1684, 0
      %v2447 = vsel %vm2388, %v1692, 0
      %v2450 = vsel %vm2388, %v1700, 0
      %v2453 = vsel %vm2388, %v1708, 0
      %v2456 = vsel %vm2388, %v1716, 0
      %v2459 = vsel %vm2388, %v1724, 0
      %v2462 = vsel %vm2388, %v1732, 0
      %v2465 = vsel %vm2388, %v1740, 0
      %v2468 = vsel %vm2388, %v1748, 0
      %v2471 = vsel %vm2388, %v1756, 0
      %v2474 = vsel %vm2388, %v1764, 0
      %v2477 = vsel %vm2388, %v1772, 0
      %v2480 = vsel %vm2388, %v1780, 0
      %v2483 = vsel %vm2388, %v1788, 0
      %vm2485 = vcmask 1043456
      %v2487 = vsel %vm2485, %v2325, 0
      %2489 = vmatprep.subr.bf16.mxu0 0
      %2490 = vmatpush1.bf16.msra.mxu0 %v2263
      %2491 = vmatprep.subr.bf16.mxu0 0
      %2492 = vmatpush1.bf16.msra.mxu0 %v2264
      %2493 = vmatprep.subr.bf16.mxu0 0
      %2494 = vmatpush1.bf16.msra.mxu0 %v2265
      %2495 = vmatprep.subr.bf16.mxu0 0
      %2496 = vmatpush1.bf16.msra.mxu0 %v2266
      %2497 = vmatprep.subr.bf16.mxu0 0
      %2498 = vmatpush1.bf16.msra.mxu0 %v2267
      %2499 = vmatprep.subr.bf16.mxu0 0
      %2500 = vmatpush1.bf16.msra.mxu0 %v2268
      %2501 = vmatprep.subr.bf16.mxu0 0
      %2502 = vmatpush1.bf16.msra.mxu0 %v2269
      %2503 = vmatprep.subr.bf16.mxu0 0
      %2504 = vmatpush1.bf16.msra.mxu0 %v2270
      %2505 = vmatprep.subr.bf16.mxu0 0
      %2506 = vmatpush1.bf16.msra.mxu0 %v2271
      %2507 = vmatprep.subr.bf16.mxu0 0
      %2508 = vmatpush1.bf16.msra.mxu0 %v2272
      %2509 = vmatprep.subr.bf16.mxu0 0
      %2510 = vmatpush1.bf16.msra.mxu0 %v2273
      %2511 = vmatprep.subr.bf16.mxu0 0
      %2512 = vmatpush1.bf16.msra.mxu0 %v2274
      %2513 = vmatprep.subr.bf16.mxu0 0
      %2514 = vmatpush1.bf16.msra.mxu0 %v2275
      %2515 = vmatprep.subr.bf16.mxu0 0
      %2516 = vmatpush1.bf16.msra.mxu0 %v2276
      %2517 = vmatprep.subr.bf16.mxu0 0
      %2518 = vmatpush1.bf16.msra.mxu0 %v2277
      %2519 = vmatprep.subr.bf16.mxu0 0
      %2520 = vmatpush1.bf16.msra.mxu0 %v2278
      %2521 = vmatprep.mubr.bf16.mxu0 %v1534
      %2522 = vmatmul.mubr.bf16.gmra.mrb[0].mxu0 %v1533
      %v2523 = vpop.f32.mrb[0].mxu0
      %v2524 = vadd.f32 0.0, %v2523
      %v2525 = vpop.f32.mrb[0].mxu0
      %v2526 = vpop.f32.mrb[0].mxu0
      %v2527 = vadd.f32 0.0, %v2526
      %v2528 = vpop.f32.mrb[0].mxu0
      %2529 = vmatprep.mubr.bf16.mxu0 %v1542
      %2530 = vmatmul.mubr.bf16.gmra.mrb[0].mxu0 %v1541
      %v2531 = vpop.f32.mrb[0].mxu0
      %v2532 = vadd.f32 0.0, %v2531
      %v2533 = vpop.f32.mrb[0].mxu0
      %v2534 = vpop.f32.mrb[0].mxu0
      %v2535 = vadd.f32 0.0, %v2534
      %v2536 = vpop.f32.mrb[0].mxu0
      %2537 = vmatprep.mubr.bf16.mxu0 %v1550
      %2538 = vmatmul.mubr.bf16.gmra.mrb[0].mxu0 %v1549
      %v2539 = vpop.f32.mrb[0].mxu0
      %v2540 = vadd.f32 0.0, %v2539
      %v2541 = vpop.f32.mrb[0].mxu0
      %v2542 = vpop.f32.mrb[0].mxu0
      %v2543 = vadd.f32 0.0, %v2542
      %v2544 = vpop.f32.mrb[0].mxu0
      %2545 = vmatprep.mubr.bf16.mxu0 %v1558
      %2546 = vmatmul.mubr.bf16.gmra.mrb[0].mxu0 %v1557
      %v2547 = vpop.f32.mrb[0].mxu0
      %v2548 = vadd.f32 0.0, %v2547
      %v2549 = vpop.f32.mrb[0].mxu0
      %v2550 = vpop.f32.mrb[0].mxu0
      %v2551 = vadd.f32 0.0, %v2550
      %v2552 = vpop.f32.mrb[0].mxu0
      %2553 = vmatprep.mubr.bf16.mxu0 %v1566
      %2554 = vmatmul.mubr.bf16.gmra.mrb[0].mxu0 %v1565
      %v2555 = vpop.f32.mrb[0].mxu0
      %v2556 = vadd.f32 0.0, %v2555
      %v2557 = vpop.f32.mrb[0].mxu0
      %v2558 = vpop.f32.mrb[0].mxu0
      %v2559 = vadd.f32 0.0, %v2558
      %v2560 = vpop.f32.mrb[0].mxu0
      %2561 = vmatprep.mubr.bf16.mxu0 %v1574
      %2562 = vmatmul.mubr.bf16.gmra.mrb[0].mxu0 %v1573
      %v2563 = vpop.f32.mrb[0].mxu0
      %v2564 = vadd.f32 0.0, %v2563
      %v2565 = vpop.f32.mrb[0].mxu0
      %v2566 = vpop.f32.mrb[0].mxu0
      %v2567 = vadd.f32 0.0, %v2566
      %v2568 = vpop.f32.mrb[0].mxu0
      %2569 = vmatprep.mubr.bf16.mxu0 %v1582
      %2570 = vmatmul.mubr.bf16.gmra.mrb[0].mxu0 %v1581
      %v2571 = vpop.f32.mrb[0].mxu0
      %v2572 = vadd.f32 0.0, %v2571
      %v2573 = vpop.f32.mrb[0].mxu0
      %v2574 = vpop.f32.mrb[0].mxu0
      %v2575 = vadd.f32 0.0, %v2574
      %v2576 = vpop.f32.mrb[0].mxu0
      %2577 = vmatprep.mubr.bf16.mxu0 %v1590
      %2578 = vmatmul.mubr.bf16.gmra.mrb[0].mxu0 %v1589
      %v2579 = vpop.f32.mrb[0].mxu0
      %v2580 = vadd.f32 0.0, %v2579
      %v2581 = vpop.f32.mrb[0].mxu0
      %v2582 = vpop.f32.mrb[0].mxu0
      %v2583 = vadd.f32 0.0, %v2582
      %v2584 = vpop.f32.mrb[0].mxu0
      %2585 = vmatprep.mubr.bf16.mxu0 %v1598
      %2586 = vmatmul.mubr.bf16.gmra.mrb[0].mxu0 %v1597
      %v2587 = vpop.f32.mrb[0].mxu0
      %v2588 = vadd.f32 0.0, %v2587
      %v2589 = vpop.f32.mrb[0].mxu0
      %v2590 = vpop.f32.mrb[0].mxu0
      %v2591 = vadd.f32 0.0, %v2590
      %v2592 = vpop.f32.mrb[0].mxu0
      %2593 = vmatprep.mubr.bf16.mxu0 %v1606
      %2594 = vmatmul.mubr.bf16.gmra.mrb[0].mxu0 %v1605
      %v2595 = vpop.f32.mrb[0].mxu0
      %v2596 = vadd.f32 0.0, %v2595
      %v2597 = vpop.f32.mrb[0].mxu0
      %v2598 = vpop.f32.mrb[0].mxu0
      %v2599 = vadd.f32 0.0, %v2598
      %v2600 = vpop.f32.mrb[0].mxu0
      %2601 = vmatprep.mubr.bf16.mxu0 %v1614
      %2602 = vmatmul.mubr.bf16.gmra.mrb[0].mxu0 %v1613
      %v2603 = vpop.f32.mrb[0].mxu0
      %v2604 = vadd.f32 0.0, %v2603
      %v2605 = vpop.f32.mrb[0].mxu0
      %v2606 = vpop.f32.mrb[0].mxu0
      %v2607 = vadd.f32 0.0, %v2606
      %v2608 = vpop.f32.mrb[0].mxu0
      %2609 = vmatprep.mubr.bf16.mxu0 %v1622
      %2610 = vmatmul.mubr.bf16.gmra.mrb[0].mxu0 %v1621
      %v2611 = vpop.f32.mrb[0].mxu0
      %v2612 = vadd.f32 0.0, %v2611
      %v2613 = vpop.f32.mrb[0].mxu0
      %v2614 = vpop.f32.mrb[0].mxu0
      %v2615 = vadd.f32 0.0, %v2614
      %v2616 = vpop.f32.mrb[0].mxu0
      %2617 = vmatprep.mubr.bf16.mxu0 %v1630
      %2618 = vmatmul.mubr.bf16.gmra.mrb[0].mxu0 %v1629
      %v2619 = vpop.f32.mrb[0].mxu0
      %v2620 = vadd.f32 0.0, %v2619
      %v2621 = vpop.f32.mrb[0].mxu0
      %v2622 = vpop.f32.mrb[0].mxu0
      %v2623 = vadd.f32 0.0, %v2622
      %v2624 = vpop.f32.mrb[0].mxu0
      %2625 = vmatprep.mubr.bf16.mxu0 %v1638
      %2626 = vmatmul.mubr.bf16.gmra.mrb[0].mxu0 %v1637
      %v2627 = vpop.f32.mrb[0].mxu0
      %v2628 = vadd.f32 0.0, %v2627
      %v2629 = vpop.f32.mrb[0].mxu0
      %v2630 = vpop.f32.mrb[0].mxu0
      %v2631 = vadd.f32 0.0, %v2630
      %v2632 = vpop.f32.mrb[0].mxu0
      %2633 = vmatprep.mubr.bf16.mxu0 %v1646
      %2634 = vmatmul.mubr.bf16.gmra.mrb[0].mxu0 %v1645
      %v2635 = vpop.f32.mrb[0].mxu0
      %v2636 = vadd.f32 0.0, %v2635
      %v2637 = vpop.f32.mrb[0].mxu0
      %v2638 = vpop.f32.mrb[0].mxu0
      %v2639 = vadd.f32 0.0, %v2638
      %v2640 = vpop.f32.mrb[0].mxu0
      %2641 = vmatprep.mubr.bf16.mxu0 %v1654
      %2642 = vmatmul.mubr.bf16.gmra.mrb[0].mxu0 %v1653
      %v2643 = vpop.f32.mrb[0].mxu0
      %v2644 = vadd.f32 0.0, %v2643
      %v2645 = vpop.f32.mrb[0].mxu0
      %v2646 = vpop.f32.mrb[0].mxu0
      %v2647 = vadd.f32 0.0, %v2646
      %v2648 = vpop.f32.mrb[0].mxu0
      %2649 = vmatprep.mubr.bf16.mxu0 %v1662
      %2650 = vmatmul.mubr.bf16.gmra.mrb[0].mxu0 %v1661
      %v2651 = vpop.f32.mrb[0].mxu0
      %v2652 = vadd.f32 0.0, %v2651
      %v2653 = vpop.f32.mrb[0].mxu0
      %v2654 = vpop.f32.mrb[0].mxu0
      %v2655 = vadd.f32 0.0, %v2654
      %v2656 = vpop.f32.mrb[0].mxu0
      %2657 = vmatprep.mubr.bf16.mxu0 %v1670
      %2658 = vmatmul.mubr.bf16.gmra.mrb[0].mxu0 %v1669
      %v2659 = vpop.f32.mrb[0].mxu0
      %v2660 = vadd.f32 0.0, %v2659
      %v2661 = vpop.f32.mrb[0].mxu0
      %v2662 = vpop.f32.mrb[0].mxu0
      %v2663 = vadd.f32 0.0, %v2662
      %v2664 = vpop.f32.mrb[0].mxu0
      %2665 = vmatprep.mubr.bf16.mxu0 %v1678
      %2666 = vmatmul.mubr.bf16.gmra.mrb[0].mxu0 %v1677
      %v2667 = vpop.f32.mrb[0].mxu0
      %v2668 = vadd.f32 0.0, %v2667
      %v2669 = vpop.f32.mrb[0].mxu0
      %v2670 = vpop.f32.mrb[0].mxu0
      %v2671 = vadd.f32 0.0, %v2670
      %v2672 = vpop.f32.mrb[0].mxu0
      %2673 = vmatprep.mubr.bf16.mxu0 %v1686
      %2674 = vmatmul.mubr.bf16.gmra.mrb[0].mxu0 %v1685
      %v2675 = vpop.f32.mrb[0].mxu0
      %v2676 = vadd.f32 0.0, %v2675
      %v2677 = vpop.f32.mrb[0].mxu0
      %v2678 = vpop.f32.mrb[0].mxu0
      %v2679 = vadd.f32 0.0, %v2678
      %v2680 = vpop.f32.mrb[0].mxu0
      %2681 = vmatprep.mubr.bf16.mxu0 %v1694
      %2682 = vmatmul.mubr.bf16.gmra.mrb[0].mxu0 %v1693
      %v2683 = vpop.f32.mrb[0].mxu0
      %v2684 = vadd.f32 0.0, %v2683
      %v2685 = vpop.f32.mrb[0].mxu0
      %v2686 = vpop.f32.mrb[0].mxu0
      %v2687 = vadd.f32 0.0, %v2686
      %v2688 = vpop.f32.mrb[0].mxu0
      %2689 = vmatprep.mubr.bf16.mxu0 %v1702
      %2690 = vmatmul.mubr.bf16.gmra.mrb[0].mxu0 %v1701
      %v2691 = vpop.f32.mrb[0].mxu0
      %v2692 = vadd.f32 0.0, %v2691
      %v2693 = vpop.f32.mrb[0].mxu0
      %v2694 = vpop.f32.mrb[0].mxu0
      %v2695 = vadd.f32 0.0, %v2694
      %v2696 = vpop.f32.mrb[0].mxu0
      %2697 = vmatprep.mubr.bf16.mxu0 %v1710
      %2698 = vmatmul.mubr.bf16.gmra.mrb[0].mxu0 %v1709
      %v2699 = vpop.f32.mrb[0].mxu0
      %v2700 = vadd.f32 0.0, %v2699
      %v2701 = vpop.f32.mrb[0].mxu0
      %v2702 = vpop.f32.mrb[0].mxu0
      %v2703 = vadd.f32 0.0, %v2702
      %v2704 = vpop.f32.mrb[0].mxu0
      %2705 = vmatprep.mubr.bf16.mxu0 %v1718
      %2706 = vmatmul.mubr.bf16.gmra.mrb[0].mxu0 %v1717
      %v2707 = vpop.f32.mrb[0].mxu0
      %v2708 = vadd.f32 0.0, %v2707
      %v2709 = vpop.f32.mrb[0].mxu0
      %v2710 = vpop.f32.mrb[0].mxu0
      %v2711 = vadd.f32 0.0, %v2710
      %v2712 = vpop.f32.mrb[0].mxu0
      %2713 = vmatprep.mubr.bf16.mxu0 %v1726
      %2714 = vmatmul.mubr.bf16.gmra.mrb[0].mxu0 %v1725
      %v2715 = vpop.f32.mrb[0].mxu0
      %v2716 = vadd.f32 0.0, %v2715
      %v2717 = vpop.f32.mrb[0].mxu0
      %v2718 = vpop.f32.mrb[0].mxu0
      %v2719 = vadd.f32 0.0, %v2718
      %v2720 = vpop.f32.mrb[0].mxu0
      %2721 = vmatprep.mubr.bf16.mxu0 %v1734
      %2722 = vmatmul.mubr.bf16.gmra.mrb[0].mxu0 %v1733
      %v2723 = vpop.f32.mrb[0].mxu0
      %v2724 = vadd.f32 0.0, %v2723
      %v2725 = vpop.f32.mrb[0].mxu0
      %v2726 = vpop.f32.mrb[0].mxu0
      %v2727 = vadd.f32 0.0, %v2726
      %v2728 = vpop.f32.mrb[0].mxu0
      %2729 = vmatprep.mubr.bf16.mxu0 %v1742
      %2730 = vmatmul.mubr.bf16.gmra.mrb[0].mxu0 %v1741
      %v2731 = vpop.f32.mrb[0].mxu0
      %v2732 = vadd.f32 0.0, %v2731
      %v2733 = vpop.f32.mrb[0].mxu0
      %v2734 = vpop.f32.mrb[0].mxu0
      %v2735 = vadd.f32 0.0, %v2734
      %v2736 = vpop.f32.mrb[0].mxu0
      %2737 = vmatprep.mubr.bf16.mxu0 %v1750
      %2738 = vmatmul.mubr.bf16.gmra.mrb[0].mxu0 %v1749
      %v2739 = vpop.f32.mrb[0].mxu0
      %v2740 = vadd.f32 0.0, %v2739
      %v2741 = vpop.f32.mrb[0].mxu0
      %v2742 = vpop.f32.mrb[0].mxu0
      %v2743 = vadd.f32 0.0, %v2742
      %v2744 = vpop.f32.mrb[0].mxu0
      %2745 = vmatprep.mubr.bf16.mxu0 %v1758
      %2746 = vmatmul.mubr.bf16.gmra.mrb[0].mxu0 %v1757
      %v2747 = vpop.f32.mrb[0].mxu0
      %v2748 = vadd.f32 0.0, %v2747
      %v2749 = vpop.f32.mrb[0].mxu0
      %v2750 = vpop.f32.mrb[0].mxu0
      %v2751 = vadd.f32 0.0, %v2750
      %v2752 = vpop.f32.mrb[0].mxu0
      %2753 = vmatprep.mubr.bf16.mxu0 %v1766
      %2754 = vmatmul.mubr.bf16.gmra.mrb[0].mxu0 %v1765
      %v2755 = vpop.f32.mrb[0].mxu0
      %v2756 = vadd.f32 0.0, %v2755
      %v2757 = vpop.f32.mrb[0].mxu0
      %v2758 = vpop.f32.mrb[0].mxu0
      %v2759 = vadd.f32 0.0, %v2758
      %v2760 = vpop.f32.mrb[0].mxu0
      %2761 = vmatprep.mubr.bf16.mxu0 %v1774
      %2762 = vmatmul.mubr.bf16.gmra.mrb[0].mxu0 %v1773
      %v2763 = vpop.f32.mrb[0].mxu0
      %v2764 = vadd.f32 0.0, %v2763
      %v2765 = vpop.f32.mrb[0].mxu0
      %v2766 = vpop.f32.mrb[0].mxu0
      %v2767 = vadd.f32 0.0, %v2766
      %v2768 = vpop.f32.mrb[0].mxu0
      %2769 = vmatprep.mubr.bf16.mxu0 %v1782
      %2770 = vmatmul.mubr.bf16.gmra.mrb[0].mxu0 %v1781
      %v2771 = vpop.f32.mrb[0].mxu0
      %v2772 = vadd.f32 0.0, %v2771
      %v2773 = vpop.f32.mrb[0].mxu0
      %v2774 = vpop.f32.mrb[0].mxu0
      %v2775 = vadd.f32 0.0, %v2774
      %v2776 = vpop.f32.mrb[0].mxu0
      %2777 = vdwg.mxu0
      %2778 = vmatprep.subr.bf16.mxu0 0
      %2779 = vmatpush1.bf16.msra.mxu0 %v2279
      %2780 = vmatprep.subr.bf16.mxu0 0
      %2781 = vmatpush1.bf16.msra.mxu0 %v2280
      %2782 = vmatprep.subr.bf16.mxu0 0
      %2783 = vmatpush1.bf16.msra.mxu0 %v2281
      %2784 = vmatprep.subr.bf16.mxu0 0
      %2785 = vmatpush1.bf16.msra.mxu0 %v2282
      %2786 = vmatprep.subr.bf16.mxu0 0
      %2787 = vmatpush1.bf16.msra.mxu0 %v2283
      %2788 = vmatprep.subr.bf16.mxu0 0
      %2789 = vmatpush1.bf16.msra.mxu0 %v2284
      %2790 = vmatprep.subr.bf16.mxu0 0
      %2791 = vmatpush1.bf16.msra.mxu0 %v2285
      %2792 = vmatprep.subr.bf16.mxu0 0
      %2793 = vmatpush1.bf16.msra.mxu0 %v2286
      %2794 = vmatprep.subr.bf16.mxu0 0
      %2795 = vmatpush1.bf16.msra.mxu0 %v2287
      %2796 = vmatprep.subr.bf16.mxu0 0
      %2797 = vmatpush1.bf16.msra.mxu0 %v2288
      %2798 = vmatprep.subr.bf16.mxu0 0
      %2799 = vmatpush1.bf16.msra.mxu0 %v2289
      %2800 = vmatprep.subr.bf16.mxu0 0
      %2801 = vmatpush1.bf16.msra.mxu0 %v2290
      %2802 = vmatprep.subr.bf16.mxu0 0
      %2803 = vmatpush1.bf16.msra.mxu0 %v2291
      %2804 = vmatprep.subr.bf16.mxu0 0
      %2805 = vmatpush1.bf16.msra.mxu0 %v2292
      %2806 = vmatprep.subr.bf16.mxu0 0
      %2807 = vmatpush1.bf16.msra.mxu0 %v2293
      %2808 = vmatprep.subr.bf16.mxu0 0
      %2809 = vmatpush1.bf16.msra.mxu0 %v2294
      %2810 = vmatprep.mubr.bf16.mxu0 %v1536
      %2811 = vmatmul.mubr.bf16.gmra.mrb[0].mxu0 %v1535
      %v2812 = vpop.f32.mrb[0].mxu0
      %v2813 = vadd.f32 %v2524, %v2812
      %v2814 = vpop.f32.mrb[0].mxu0
      %v2815 = vpop.f32.mrb[0].mxu0
      %v2816 = vadd.f32 %v2527, %v2815
      %v2817 = vpop.f32.mrb[0].mxu0
      %2818 = vmatprep.mubr.bf16.mxu0 %v1544
      %2819 = vmatmul.mubr.bf16.gmra.mrb[0].mxu0 %v1543
      %v2820 = vpop.f32.mrb[0].mxu0
      %v2821 = vadd.f32 %v2532, %v2820
      %v2822 = vpop.f32.mrb[0].mxu0
      %v2823 = vpop.f32.mrb[0].mxu0
      %v2824 = vadd.f32 %v2535, %v2823
      %v2825 = vpop.f32.mrb[0].mxu0
      %2826 = vmatprep.mubr.bf16.mxu0 %v1552
      %2827 = vmatmul.mubr.bf16.gmra.mrb[0].mxu0 %v1551
      %v2828 = vpop.f32.mrb[0].mxu0
      %v2829 = vadd.f32 %v2540, %v2828
      %v2830 = vpop.f32.mrb[0].mxu0
      %v2831 = vpop.f32.mrb[0].mxu0
      %v2832 = vadd.f32 %v2543, %v2831
      %v2833 = vpop.f32.mrb[0].mxu0
      %2834 = vmatprep.mubr.bf16.mxu0 %v1560
      %2835 = vmatmul.mubr.bf16.gmra.mrb[0].mxu0 %v1559
      %v2836 = vpop.f32.mrb[0].mxu0
      %v2837 = vadd.f32 %v2548, %v2836
      %v2838 = vpop.f32.mrb[0].mxu0
      %v2839 = vpop.f32.mrb[0].mxu0
      %v2840 = vadd.f32 %v2551, %v2839
      %v2841 = vpop.f32.mrb[0].mxu0
      %2842 = vmatprep.mubr.bf16.mxu0 %v1568
      %2843 = vmatmul.mubr.bf16.gmra.mrb[0].mxu0 %v1567
      %v2844 = vpop.f32.mrb[0].mxu0
      %v2845 = vadd.f32 %v2556, %v2844
      %v2846 = vpop.f32.mrb[0].mxu0
      %v2847 = vpop.f32.mrb[0].mxu0
      %v2848 = vadd.f32 %v2559, %v2847
      %v2849 = vpop.f32.mrb[0].mxu0
      %2850 = vmatprep.mubr.bf16.mxu0 %v1576
      %2851 = vmatmul.mubr.bf16.gmra.mrb[0].mxu0 %v1575
      %v2852 = vpop.f32.mrb[0].mxu0
      %v2853 = vadd.f32 %v2564, %v2852
      %v2854 = vpop.f32.mrb[0].mxu0
      %v2855 = vpop.f32.mrb[0].mxu0
      %v2856 = vadd.f32 %v2567, %v2855
      %v2857 = vpop.f32.mrb[0].mxu0
      %2858 = vmatprep.mubr.bf16.mxu0 %v1584
      %2859 = vmatmul.mubr.bf16.gmra.mrb[0].mxu0 %v1583
      %v2860 = vpop.f32.mrb[0].mxu0
      %v2861 = vadd.f32 %v2572, %v2860
      %v2862 = vpop.f32.mrb[0].mxu0
      %v2863 = vpop.f32.mrb[0].mxu0
      %v2864 = vadd.f32 %v2575, %v2863
      %v2865 = vpop.f32.mrb[0].mxu0
      %2866 = vmatprep.mubr.bf16.mxu0 %v1592
      %2867 = vmatmul.mubr.bf16.gmra.mrb[0].mxu0 %v1591
      %v2868 = vpop.f32.mrb[0].mxu0
      %v2869 = vadd.f32 %v2580, %v2868
      %v2870 = vpop.f32.mrb[0].mxu0
      %v2871 = vpop.f32.mrb[0].mxu0
      %v2872 = vadd.f32 %v2583, %v2871
      %v2873 = vpop.f32.mrb[0].mxu0
      %2874 = vmatprep.mubr.bf16.mxu0 %v1600
      %2875 = vmatmul.mubr.bf16.gmra.mrb[0].mxu0 %v1599
      %v2876 = vpop.f32.mrb[0].mxu0
      %v2877 = vadd.f32 %v2588, %v2876
      %v2878 = vpop.f32.mrb[0].mxu0
      %v2879 = vpop.f32.mrb[0].mxu0
      %v2880 = vadd.f32 %v2591, %v2879
      %v2881 = vpop.f32.mrb[0].mxu0
      %2882 = vmatprep.mubr.bf16.mxu0 %v1608
      %2883 = vmatmul.mubr.bf16.gmra.mrb[0].mxu0 %v1607
      %v2884 = vpop.f32.mrb[0].mxu0
      %v2885 = vadd.f32 %v2596, %v2884
      %v2886 = vpop.f32.mrb[0].mxu0
      %v2887 = vpop.f32.mrb[0].mxu0
      %v2888 = vadd.f32 %v2599, %v2887
      %v2889 = vpop.f32.mrb[0].mxu0
      %2890 = vmatprep.mubr.bf16.mxu0 %v1616
      %2891 = vmatmul.mubr.bf16.gmra.mrb[0].mxu0 %v1615
      %v2892 = vpop.f32.mrb[0].mxu0
      %v2893 = vadd.f32 %v2604, %v2892
      %v2894 = vpop.f32.mrb[0].mxu0
      %v2895 = vpop.f32.mrb[0].mxu0
      %v2896 = vadd.f32 %v2607, %v2895
      %v2897 = vpop.f32.mrb[0].mxu0
      %2898 = vmatprep.mubr.bf16.mxu0 %v1624
      %2899 = vmatmul.mubr.bf16.gmra.mrb[0].mxu0 %v1623
      %v2900 = vpop.f32.mrb[0].mxu0
      %v2901 = vadd.f32 %v2612, %v2900
      %v2902 = vpop.f32.mrb[0].mxu0
      %v2903 = vpop.f32.mrb[0].mxu0
      %v2904 = vadd.f32 %v2615, %v2903
      %v2905 = vpop.f32.mrb[0].mxu0
      %2906 = vmatprep.mubr.bf16.mxu0 %v1632
      %2907 = vmatmul.mubr.bf16.gmra.mrb[0].mxu0 %v1631
      %v2908 = vpop.f32.mrb[0].mxu0
      %v2909 = vadd.f32 %v2620, %v2908
      %v2910 = vpop.f32.mrb[0].mxu0
      %v2911 = vpop.f32.mrb[0].mxu0
      %v2912 = vadd.f32 %v2623, %v2911
      %v2913 = vpop.f32.mrb[0].mxu0
      %2914 = vmatprep.mubr.bf16.mxu0 %v1640
      %2915 = vmatmul.mubr.bf16.gmra.mrb[0].mxu0 %v1639
      %v2916 = vpop.f32.mrb[0].mxu0
      %v2917 = vadd.f32 %v2628, %v2916
      %v2918 = vpop.f32.mrb[0].mxu0
      %v2919 = vpop.f32.mrb[0].mxu0
      %v2920 = vadd.f32 %v2631, %v2919
      %v2921 = vpop.f32.mrb[0].mxu0
      %2922 = vmatprep.mubr.bf16.mxu0 %v1648
      %2923 = vmatmul.mubr.bf16.gmra.mrb[0].mxu0 %v1647
      %v2924 = vpop.f32.mrb[0].mxu0
      %v2925 = vadd.f32 %v2636, %v2924
      %v2926 = vpop.f32.mrb[0].mxu0
      %v2927 = vpop.f32.mrb[0].mxu0
      %v2928 = vadd.f32 %v2639, %v2927
      %v2929 = vpop.f32.mrb[0].mxu0
      %2930 = vmatprep.mubr.bf16.mxu0 %v1656
      %2931 = vmatmul.mubr.bf16.gmra.mrb[0].mxu0 %v1655
      %v2932 = vpop.f32.mrb[0].mxu0
      %v2933 = vadd.f32 %v2644, %v2932
      %v2934 = vpop.f32.mrb[0].mxu0
      %v2935 = vpop.f32.mrb[0].mxu0
      %v2936 = vadd.f32 %v2647, %v2935
      %v2937 = vpop.f32.mrb[0].mxu0
      %2938 = vmatprep.mubr.bf16.mxu0 %v1664
      %2939 = vmatmul.mubr.bf16.gmra.mrb[0].mxu0 %v1663
      %v2940 = vpop.f32.mrb[0].mxu0
      %v2941 = vadd.f32 %v2652, %v2940
      %v2942 = vpop.f32.mrb[0].mxu0
      %v2943 = vpop.f32.mrb[0].mxu0
      %v2944 = vadd.f32 %v2655, %v2943
      %v2945 = vpop.f32.mrb[0].mxu0
      %2946 = vmatprep.mubr.bf16.mxu0 %v1672
      %2947 = vmatmul.mubr.bf16.gmra.mrb[0].mxu0 %v1671
      %v2948 = vpop.f32.mrb[0].mxu0
      %v2949 = vadd.f32 %v2660, %v2948
      %v2950 = vpop.f32.mrb[0].mxu0
      %v2951 = vpop.f32.mrb[0].mxu0
      %v2952 = vadd.f32 %v2663, %v2951
      %v2953 = vpop.f32.mrb[0].mxu0
      %2954 = vmatprep.mubr.bf16.mxu0 %v1680
      %2955 = vmatmul.mubr.bf16.gmra.mrb[0].mxu0 %v1679
      %v2956 = vpop.f32.mrb[0].mxu0
      %v2957 = vadd.f32 %v2668, %v2956
      %v2958 = vpop.f32.mrb[0].mxu0
      %v2959 = vpop.f32.mrb[0].mxu0
      %v2960 = vadd.f32 %v2671, %v2959
      %v2961 = vpop.f32.mrb[0].mxu0
      %2962 = vmatprep.mubr.bf16.mxu0 %v1688
      %2963 = vmatmul.mubr.bf16.gmra.mrb[0].mxu0 %v1687
      %v2964 = vpop.f32.mrb[0].mxu0
      %v2965 = vadd.f32 %v2676, %v2964
      %v2966 = vpop.f32.mrb[0].mxu0
      %v2967 = vpop.f32.mrb[0].mxu0
      %v2968 = vadd.f32 %v2679, %v2967
      %v2969 = vpop.f32.mrb[0].mxu0
      %2970 = vmatprep.mubr.bf16.mxu0 %v1696
      %2971 = vmatmul.mubr.bf16.gmra.mrb[0].mxu0 %v1695
      %v2972 = vpop.f32.mrb[0].mxu0
      %v2973 = vadd.f32 %v2684, %v2972
      %v2974 = vpop.f32.mrb[0].mxu0
      %v2975 = vpop.f32.mrb[0].mxu0
      %v2976 = vadd.f32 %v2687, %v2975
      %v2977 = vpop.f32.mrb[0].mxu0
      %2978 = vmatprep.mubr.bf16.mxu0 %v1704
      %2979 = vmatmul.mubr.bf16.gmra.mrb[0].mxu0 %v1703
      %v2980 = vpop.f32.mrb[0].mxu0
      %v2981 = vadd.f32 %v2692, %v2980
      %v2982 = vpop.f32.mrb[0].mxu0
      %v2983 = vpop.f32.mrb[0].mxu0
      %v2984 = vadd.f32 %v2695, %v2983
      %v2985 = vpop.f32.mrb[0].mxu0
      %2986 = vmatprep.mubr.bf16.mxu0 %v1712
      %2987 = vmatmul.mubr.bf16.gmra.mrb[0].mxu0 %v1711
      %v2988 = vpop.f32.mrb[0].mxu0
      %v2989 = vadd.f32 %v2700, %v2988
      %v2990 = vpop.f32.mrb[0].mxu0
      %v2991 = vpop.f32.mrb[0].mxu0
      %v2992 = vadd.f32 %v2703, %v2991
      %v2993 = vpop.f32.mrb[0].mxu0
      %2994 = vmatprep.mubr.bf16.mxu0 %v1720
      %2995 = vmatmul.mubr.bf16.gmra.mrb[0].mxu0 %v1719
      %v2996 = vpop.f32.mrb[0].mxu0
      %v2997 = vadd.f32 %v2708, %v2996
      %v2998 = vpop.f32.mrb[0].mxu0
      %v2999 = vpop.f32.mrb[0].mxu0
      %v3000 = vadd.f32 %v2711, %v2999
      %v3001 = vpop.f32.mrb[0].mxu0
      %3002 = vmatprep.mubr.bf16.mxu0 %v1728
      %3003 = vmatmul.mubr.bf16.gmra.mrb[0].mxu0 %v1727
      %v3004 = vpop.f32.mrb[0].mxu0
      %v3005 = vadd.f32 %v2716, %v3004
      %v3006 = vpop.f32.mrb[0].mxu0
      %v3007 = vpop.f32.mrb[0].mxu0
      %v3008 = vadd.f32 %v2719, %v3007
      %v3009 = vpop.f32.mrb[0].mxu0
      %3010 = vmatprep.mubr.bf16.mxu0 %v1736
      %3011 = vmatmul.mubr.bf16.gmra.mrb[0].mxu0 %v1735
      %v3012 = vpop.f32.mrb[0].mxu0
      %v3013 = vadd.f32 %v2724, %v3012
      %v3014 = vpop.f32.mrb[0].mxu0
      %v3015 = vpop.f32.mrb[0].mxu0
      %v3016 = vadd.f32 %v2727, %v3015
      %v3017 = vpop.f32.mrb[0].mxu0
      %3018 = vmatprep.mubr.bf16.mxu0 %v1744
      %3019 = vmatmul.mubr.bf16.gmra.mrb[0].mxu0 %v1743
      %v3020 = vpop.f32.mrb[0].mxu0
      %v3021 = vadd.f32 %v2732, %v3020
      %v3022 = vpop.f32.mrb[0].mxu0
      %v3023 = vpop.f32.mrb[0].mxu0
      %v3024 = vadd.f32 %v2735, %v3023
      %v3025 = vpop.f32.mrb[0].mxu0
      %3026 = vmatprep.mubr.bf16.mxu0 %v1752
      %3027 = vmatmul.mubr.bf16.gmra.mrb[0].mxu0 %v1751
      %v3028 = vpop.f32.mrb[0].mxu0
      %v3029 = vadd.f32 %v2740, %v3028
      %v3030 = vpop.f32.mrb[0].mxu0
      %v3031 = vpop.f32.mrb[0].mxu0
      %v3032 = vadd.f32 %v2743, %v3031
      %v3033 = vpop.f32.mrb[0].mxu0
      %3034 = vmatprep.mubr.bf16.mxu0 %v1760
      %3035 = vmatmul.mubr.bf16.gmra.mrb[0].mxu0 %v1759
      %v3036 = vpop.f32.mrb[0].mxu0
      %v3037 = vadd.f32 %v2748, %v3036
      %v3038 = vpop.f32.mrb[0].mxu0
      %v3039 = vpop.f32.mrb[0].mxu0
      %v3040 = vadd.f32 %v2751, %v3039
      %v3041 = vpop.f32.mrb[0].mxu0
      %3042 = vmatprep.mubr.bf16.mxu0 %v1768
      %3043 = vmatmul.mubr.bf16.gmra.mrb[0].mxu0 %v1767
      %v3044 = vpop.f32.mrb[0].mxu0
      %v3045 = vadd.f32 %v2756, %v3044
      %v3046 = vpop.f32.mrb[0].mxu0
      %v3047 = vpop.f32.mrb[0].mxu0
      %v3048 = vadd.f32 %v2759, %v3047
      %v3049 = vpop.f32.mrb[0].mxu0
      %3050 = vmatprep.mubr.bf16.mxu0 %v1776
      %3051 = vmatmul.mubr.bf16.gmra.mrb[0].mxu0 %v1775
      %v3052 = vpop.f32.mrb[0].mxu0
      %v3053 = vadd.f32 %v2764, %v3052
      %v3054 = vpop.f32.mrb[0].mxu0
      %v3055 = vpop.f32.mrb[0].mxu0
      %v3056 = vadd.f32 %v2767, %v3055
      %v3057 = vpop.f32.mrb[0].mxu0
      %3058 = vmatprep.mubr.bf16.mxu0 %v1784
      %3059 = vmatmul.mubr.bf16.gmra.mrb[0].mxu0 %v1783
      %v3060 = vpop.f32.mrb[0].mxu0
      %v3061 = vadd.f32 %v2772, %v3060
      %v3062 = vpop.f32.mrb[0].mxu0
      %v3063 = vpop.f32.mrb[0].mxu0
      %v3064 = vadd.f32 %v2775, %v3063
      %v3065 = vpop.f32.mrb[0].mxu0
      %3066 = vdwg.mxu0
      %3067 = vmatprep.subr.bf16.mxu0 0
      %3068 = vmatpush1.bf16.msra.mxu0 %v2295
      %3069 = vmatprep.subr.bf16.mxu0 0
      %3070 = vmatpush1.bf16.msra.mxu0 %v2296
      %3071 = vmatprep.subr.bf16.mxu0 0
      %3072 = vmatpush1.bf16.msra.mxu0 %v2297
      %3073 = vmatprep.subr.bf16.mxu0 0
      %3074 = vmatpush1.bf16.msra.mxu0 %v2298
      %3075 = vmatprep.subr.bf16.mxu0 0
      %3076 = vmatpush1.bf16.msra.mxu0 %v2299
      %3077 = vmatprep.subr.bf16.mxu0 0
      %3078 = vmatpush1.bf16.msra.mxu0 %v2300
      %3079 = vmatprep.subr.bf16.mxu0 0
      %3080 = vmatpush1.bf16.msra.mxu0 %v2301
      %3081 = vmatprep.subr.bf16.mxu0 0
      %3082 = vmatpush1.bf16.msra.mxu0 %v2302
      %3083 = vmatprep.subr.bf16.mxu0 0
      %3084 = vmatpush1.bf16.msra.mxu0 %v2303
      %3085 = vmatprep.subr.bf16.mxu0 0
      %3086 = vmatpush1.bf16.msra.mxu0 %v2304
      %3087 = vmatprep.subr.bf16.mxu0 0
      %3088 = vmatpush1.bf16.msra.mxu0 %v2305
      %3089 = vmatprep.subr.bf16.mxu0 0
      %3090 = vmatpush1.bf16.msra.mxu0 %v2306
      %3091 = vmatprep.subr.bf16.mxu0 0
      %3092 = vmatpush1.bf16.msra.mxu0 %v2307
      %3093 = vmatprep.subr.bf16.mxu0 0
      %3094 = vmatpush1.bf16.msra.mxu0 %v2308
      %3095 = vmatprep.subr.bf16.mxu0 0
      %3096 = vmatpush1.bf16.msra.mxu0 %v2309
      %3097 = vmatprep.subr.bf16.mxu0 0
      %3098 = vmatpush1.bf16.msra.mxu0 %v2310
      %3099 = vmatprep.mubr.bf16.mxu0 %v1538
      %3100 = vmatmul.mubr.bf16.gmra.mrb[0].mxu0 %v1537
      %v3101 = vpop.f32.mrb[0].mxu0
      %v3102 = vadd.f32 %v2813, %v3101
      %v3103 = vpop.f32.mrb[0].mxu0
      %v3104 = vpop.f32.mrb[0].mxu0
      %v3105 = vadd.f32 %v2816, %v3104
      %v3106 = vpop.f32.mrb[0].mxu0
      %3107 = vmatprep.mubr.bf16.mxu0 %v1546
      %3108 = vmatmul.mubr.bf16.gmra.mrb[0].mxu0 %v1545
      %v3109 = vpop.f32.mrb[0].mxu0
      %v3110 = vadd.f32 %v2821, %v3109
      %v3111 = vpop.f32.mrb[0].mxu0
      %v3112 = vpop.f32.mrb[0].mxu0
      %v3113 = vadd.f32 %v2824, %v3112
      %v3114 = vpop.f32.mrb[0].mxu0
      %3115 = vmatprep.mubr.bf16.mxu0 %v1554
      %3116 = vmatmul.mubr.bf16.gmra.mrb[0].mxu0 %v1553
      %v3117 = vpop.f32.mrb[0].mxu0
      %v3118 = vadd.f32 %v2829, %v3117
      %v3119 = vpop.f32.mrb[0].mxu0
      %v3120 = vpop.f32.mrb[0].mxu0
      %v3121 = vadd.f32 %v2832, %v3120
      %v3122 = vpop.f32.mrb[0].mxu0
      %3123 = vmatprep.mubr.bf16.mxu0 %v1562
      %3124 = vmatmul.mubr.bf16.gmra.mrb[0].mxu0 %v1561
      %v3125 = vpop.f32.mrb[0].mxu0
      %v3126 = vadd.f32 %v2837, %v3125
      %v3127 = vpop.f32.mrb[0].mxu0
      %v3128 = vpop.f32.mrb[0].mxu0
      %v3129 = vadd.f32 %v2840, %v3128
      %v3130 = vpop.f32.mrb[0].mxu0
      %3131 = vmatprep.mubr.bf16.mxu0 %v1570
      %3132 = vmatmul.mubr.bf16.gmra.mrb[0].mxu0 %v1569
      %v3133 = vpop.f32.mrb[0].mxu0
      %v3134 = vadd.f32 %v2845, %v3133
      %v3135 = vpop.f32.mrb[0].mxu0
      %v3136 = vpop.f32.mrb[0].mxu0
      %v3137 = vadd.f32 %v2848, %v3136
      %v3138 = vpop.f32.mrb[0].mxu0
      %3139 = vmatprep.mubr.bf16.mxu0 %v1578
      %3140 = vmatmul.mubr.bf16.gmra.mrb[0].mxu0 %v1577
      %v3141 = vpop.f32.mrb[0].mxu0
      %v3142 = vadd.f32 %v2853, %v3141
      %v3143 = vpop.f32.mrb[0].mxu0
      %v3144 = vpop.f32.mrb[0].mxu0
      %v3145 = vadd.f32 %v2856, %v3144
      %v3146 = vpop.f32.mrb[0].mxu0
      %3147 = vmatprep.mubr.bf16.mxu0 %v1586
      %3148 = vmatmul.mubr.bf16.gmra.mrb[0].mxu0 %v1585
      %v3149 = vpop.f32.mrb[0].mxu0
      %v3150 = vadd.f32 %v2861, %v3149
      %v3151 = vpop.f32.mrb[0].mxu0
      %v3152 = vpop.f32.mrb[0].mxu0
      %v3153 = vadd.f32 %v2864, %v3152
      %v3154 = vpop.f32.mrb[0].mxu0
      %3155 = vmatprep.mubr.bf16.mxu0 %v1594
      %3156 = vmatmul.mubr.bf16.gmra.mrb[0].mxu0 %v1593
      %v3157 = vpop.f32.mrb[0].mxu0
      %v3158 = vadd.f32 %v2869, %v3157
      %v3159 = vpop.f32.mrb[0].mxu0
      %v3160 = vpop.f32.mrb[0].mxu0
      %v3161 = vadd.f32 %v2872, %v3160
      %v3162 = vpop.f32.mrb[0].mxu0
      %3163 = vmatprep.mubr.bf16.mxu0 %v1602
      %3164 = vmatmul.mubr.bf16.gmra.mrb[0].mxu0 %v1601
      %v3165 = vpop.f32.mrb[0].mxu0
      %v3166 = vadd.f32 %v2877, %v3165
      %v3167 = vpop.f32.mrb[0].mxu0
      %v3168 = vpop.f32.mrb[0].mxu0
      %v3169 = vadd.f32 %v2880, %v3168
      %v3170 = vpop.f32.mrb[0].mxu0
      %3171 = vmatprep.mubr.bf16.mxu0 %v1610
      %3172 = vmatmul.mubr.bf16.gmra.mrb[0].mxu0 %v1609
      %v3173 = vpop.f32.mrb[0].mxu0
      %v3174 = vadd.f32 %v2885, %v3173
      %v3175 = vpop.f32.mrb[0].mxu0
      %v3176 = vpop.f32.mrb[0].mxu0
      %v3177 = vadd.f32 %v2888, %v3176
      %v3178 = vpop.f32.mrb[0].mxu0
      %3179 = vmatprep.mubr.bf16.mxu0 %v1618
      %3180 = vmatmul.mubr.bf16.gmra.mrb[0].mxu0 %v1617
      %v3181 = vpop.f32.mrb[0].mxu0
      %v3182 = vadd.f32 %v2893, %v3181
      %v3183 = vpop.f32.mrb[0].mxu0
      %v3184 = vpop.f32.mrb[0].mxu0
      %v3185 = vadd.f32 %v2896, %v3184
      %v3186 = vpop.f32.mrb[0].mxu0
      %3187 = vmatprep.mubr.bf16.mxu0 %v1626
      %3188 = vmatmul.mubr.bf16.gmra.mrb[0].mxu0 %v1625
      %v3189 = vpop.f32.mrb[0].mxu0
      %v3190 = vadd.f32 %v2901, %v3189
      %v3191 = vpop.f32.mrb[0].mxu0
      %v3192 = vpop.f32.mrb[0].mxu0
      %v3193 = vadd.f32 %v2904, %v3192
      %v3194 = vpop.f32.mrb[0].mxu0
      %3195 = vmatprep.mubr.bf16.mxu0 %v1634
      %3196 = vmatmul.mubr.bf16.gmra.mrb[0].mxu0 %v1633
      %v3197 = vpop.f32.mrb[0].mxu0
      %v3198 = vadd.f32 %v2909, %v3197
      %v3199 = vpop.f32.mrb[0].mxu0
      %v3200 = vpop.f32.mrb[0].mxu0
      %v3201 = vadd.f32 %v2912, %v3200
      %v3202 = vpop.f32.mrb[0].mxu0
      %3203 = vmatprep.mubr.bf16.mxu0 %v1642
      %3204 = vmatmul.mubr.bf16.gmra.mrb[0].mxu0 %v1641
      %v3205 = vpop.f32.mrb[0].mxu0
      %v3206 = vadd.f32 %v2917, %v3205
      %v3207 = vpop.f32.mrb[0].mxu0
      %v3208 = vpop.f32.mrb[0].mxu0
      %v3209 = vadd.f32 %v2920, %v3208
      %v3210 = vpop.f32.mrb[0].mxu0
      %3211 = vmatprep.mubr.bf16.mxu0 %v1650
      %3212 = vmatmul.mubr.bf16.gmra.mrb[0].mxu0 %v1649
      %v3213 = vpop.f32.mrb[0].mxu0
      %v3214 = vadd.f32 %v2925, %v3213
      %v3215 = vpop.f32.mrb[0].mxu0
      %v3216 = vpop.f32.mrb[0].mxu0
      %v3217 = vadd.f32 %v2928, %v3216
      %v3218 = vpop.f32.mrb[0].mxu0
      %3219 = vmatprep.mubr.bf16.mxu0 %v1658
      %3220 = vmatmul.mubr.bf16.gmra.mrb[0].mxu0 %v1657
      %v3221 = vpop.f32.mrb[0].mxu0
      %v3222 = vadd.f32 %v2933, %v3221
      %v3223 = vpop.f32.mrb[0].mxu0
      %v3224 = vpop.f32.mrb[0].mxu0
      %v3225 = vadd.f32 %v2936, %v3224
      %v3226 = vpop.f32.mrb[0].mxu0
      %3227 = vmatprep.mubr.bf16.mxu0 %v1666
      %3228 = vmatmul.mubr.bf16.gmra.mrb[0].mxu0 %v1665
      %v3229 = vpop.f32.mrb[0].mxu0
      %v3230 = vadd.f32 %v2941, %v3229
      %v3231 = vpop.f32.mrb[0].mxu0
      %v3232 = vpop.f32.mrb[0].mxu0
      %v3233 = vadd.f32 %v2944, %v3232
      %v3234 = vpop.f32.mrb[0].mxu0
      %3235 = vmatprep.mubr.bf16.mxu0 %v1674
      %3236 = vmatmul.mubr.bf16.gmra.mrb[0].mxu0 %v1673
      %v3237 = vpop.f32.mrb[0].mxu0
      %v3238 = vadd.f32 %v2949, %v3237
      %v3239 = vpop.f32.mrb[0].mxu0
      %v3240 = vpop.f32.mrb[0].mxu0
      %v3241 = vadd.f32 %v2952, %v3240
      %v3242 = vpop.f32.mrb[0].mxu0
      %3243 = vmatprep.mubr.bf16.mxu0 %v1682
      %3244 = vmatmul.mubr.bf16.gmra.mrb[0].mxu0 %v1681
      %v3245 = vpop.f32.mrb[0].mxu0
      %v3246 = vadd.f32 %v2957, %v3245
      %v3247 = vpop.f32.mrb[0].mxu0
      %v3248 = vpop.f32.mrb[0].mxu0
      %v3249 = vadd.f32 %v2960, %v3248
      %v3250 = vpop.f32.mrb[0].mxu0
      %3251 = vmatprep.mubr.bf16.mxu0 %v1690
      %3252 = vmatmul.mubr.bf16.gmra.mrb[0].mxu0 %v1689
      %v3253 = vpop.f32.mrb[0].mxu0
      %v3254 = vadd.f32 %v2965, %v3253
      %v3255 = vpop.f32.mrb[0].mxu0
      %v3256 = vpop.f32.mrb[0].mxu0
      %v3257 = vadd.f32 %v2968, %v3256
      %v3258 = vpop.f32.mrb[0].mxu0
      %3259 = vmatprep.mubr.bf16.mxu0 %v1698
      %3260 = vmatmul.mubr.bf16.gmra.mrb[0].mxu0 %v1697
      %v3261 = vpop.f32.mrb[0].mxu0
      %v3262 = vadd.f32 %v2973, %v3261
      %v3263 = vpop.f32.mrb[0].mxu0
      %v3264 = vpop.f32.mrb[0].mxu0
      %v3265 = vadd.f32 %v2976, %v3264
      %v3266 = vpop.f32.mrb[0].mxu0
      %3267 = vmatprep.mubr.bf16.mxu0 %v1706
      %3268 = vmatmul.mubr.bf16.gmra.mrb[0].mxu0 %v1705
      %v3269 = vpop.f32.mrb[0].mxu0
      %v3270 = vadd.f32 %v2981, %v3269
      %v3271 = vpop.f32.mrb[0].mxu0
      %v3272 = vpop.f32.mrb[0].mxu0
      %v3273 = vadd.f32 %v2984, %v3272
      %v3274 = vpop.f32.mrb[0].mxu0
      %3275 = vmatprep.mubr.bf16.mxu0 %v1714
      %3276 = vmatmul.mubr.bf16.gmra.mrb[0].mxu0 %v1713
      %v3277 = vpop.f32.mrb[0].mxu0
      %v3278 = vadd.f32 %v2989, %v3277
      %v3279 = vpop.f32.mrb[0].mxu0
      %v3280 = vpop.f32.mrb[0].mxu0
      %v3281 = vadd.f32 %v2992, %v3280
      %v3282 = vpop.f32.mrb[0].mxu0
      %3283 = vmatprep.mubr.bf16.mxu0 %v1722
      %3284 = vmatmul.mubr.bf16.gmra.mrb[0].mxu0 %v1721
      %v3285 = vpop.f32.mrb[0].mxu0
      %v3286 = vadd.f32 %v2997, %v3285
      %v3287 = vpop.f32.mrb[0].mxu0
      %v3288 = vpop.f32.mrb[0].mxu0
      %v3289 = vadd.f32 %v3000, %v3288
      %v3290 = vpop.f32.mrb[0].mxu0
      %3291 = vmatprep.mubr.bf16.mxu0 %v1730
      %3292 = vmatmul.mubr.bf16.gmra.mrb[0].mxu0 %v1729
      %v3293 = vpop.f32.mrb[0].mxu0
      %v3294 = vadd.f32 %v3005, %v3293
      %v3295 = vpop.f32.mrb[0].mxu0
      %v3296 = vpop.f32.mrb[0].mxu0
      %v3297 = vadd.f32 %v3008, %v3296
      %v3298 = vpop.f32.mrb[0].mxu0
      %3299 = vmatprep.mubr.bf16.mxu0 %v1738
      %3300 = vmatmul.mubr.bf16.gmra.mrb[0].mxu0 %v1737
      %v3301 = vpop.f32.mrb[0].mxu0
      %v3302 = vadd.f32 %v3013, %v3301
      %v3303 = vpop.f32.mrb[0].mxu0
      %v3304 = vpop.f32.mrb[0].mxu0
      %v3305 = vadd.f32 %v3016, %v3304
      %v3306 = vpop.f32.mrb[0].mxu0
      %3307 = vmatprep.mubr.bf16.mxu0 %v1746
      %3308 = vmatmul.mubr.bf16.gmra.mrb[0].mxu0 %v1745
      %v3309 = vpop.f32.mrb[0].mxu0
      %v3310 = vadd.f32 %v3021, %v3309
      %v3311 = vpop.f32.mrb[0].mxu0
      %v3312 = vpop.f32.mrb[0].mxu0
      %v3313 = vadd.f32 %v3024, %v3312
      %v3314 = vpop.f32.mrb[0].mxu0
      %3315 = vmatprep.mubr.bf16.mxu0 %v1754
      %3316 = vmatmul.mubr.bf16.gmra.mrb[0].mxu0 %v1753
      %v3317 = vpop.f32.mrb[0].mxu0
      %v3318 = vadd.f32 %v3029, %v3317
      %v3319 = vpop.f32.mrb[0].mxu0
      %v3320 = vpop.f32.mrb[0].mxu0
      %v3321 = vadd.f32 %v3032, %v3320
      %v3322 = vpop.f32.mrb[0].mxu0
      %3323 = vmatprep.mubr.bf16.mxu0 %v1762
      %3324 = vmatmul.mubr.bf16.gmra.mrb[0].mxu0 %v1761
      %v3325 = vpop.f32.mrb[0].mxu0
      %v3326 = vadd.f32 %v3037, %v3325
      %v3327 = vpop.f32.mrb[0].mxu0
      %v3328 = vpop.f32.mrb[0].mxu0
      %v3329 = vadd.f32 %v3040, %v3328
      %v3330 = vpop.f32.mrb[0].mxu0
      %3331 = vmatprep.mubr.bf16.mxu0 %v1770
      %3332 = vmatmul.mubr.bf16.gmra.mrb[0].mxu0 %v1769
      %v3333 = vpop.f32.mrb[0].mxu0
      %v3334 = vadd.f32 %v3045, %v3333
      %v3335 = vpop.f32.mrb[0].mxu0
      %v3336 = vpop.f32.mrb[0].mxu0
      %v3337 = vadd.f32 %v3048, %v3336
      %v3338 = vpop.f32.mrb[0].mxu0
      %3339 = vmatprep.mubr.bf16.mxu0 %v1778
      %3340 = vmatmul.mubr.bf16.gmra.mrb[0].mxu0 %v1777
      %v3341 = vpop.f32.mrb[0].mxu0
      %v3342 = vadd.f32 %v3053, %v3341
      %v3343 = vpop.f32.mrb[0].mxu0
      %v3344 = vpop.f32.mrb[0].mxu0
      %v3345 = vadd.f32 %v3056, %v3344
      %v3346 = vpop.f32.mrb[0].mxu0
      %3347 = vmatprep.mubr.bf16.mxu0 %v1786
      %3348 = vmatmul.mubr.bf16.gmra.mrb[0].mxu0 %v1785
      %v3349 = vpop.f32.mrb[0].mxu0
      %v3350 = vadd.f32 %v3061, %v3349
      %v3351 = vpop.f32.mrb[0].mxu0
      %v3352 = vpop.f32.mrb[0].mxu0
      %v3353 = vadd.f32 %v3064, %v3352
      %v3354 = vpop.f32.mrb[0].mxu0
      %3355 = vdwg.mxu0
      %3356 = vmatprep.subr.bf16.mxu0 0
      %3357 = vmatpush1.bf16.msra.mxu0 %v2311
      %3358 = vmatprep.subr.bf16.mxu0 0
      %3359 = vmatpush1.bf16.msra.mxu0 %v2312
      %3360 = vmatprep.subr.bf16.mxu0 0
      %3361 = vmatpush1.bf16.msra.mxu0 %v2313
      %3362 = vmatprep.subr.bf16.mxu0 0
      %3363 = vmatpush1.bf16.msra.mxu0 %v2314
      %3364 = vmatprep.subr.bf16.mxu0 0
      %3365 = vmatpush1.bf16.msra.mxu0 %v2315
      %3366 = vmatprep.subr.bf16.mxu0 0
      %3367 = vmatpush1.bf16.msra.mxu0 %v2316
      %3368 = vmatprep.subr.bf16.mxu0 0
      %3369 = vmatpush1.bf16.msra.mxu0 %v2317
      %3370 = vmatprep.subr.bf16.mxu0 0
      %3371 = vmatpush1.bf16.msra.mxu0 %v2318
      %3372 = vmatprep.subr.bf16.mxu0 0
      %3373 = vmatpush1.bf16.msra.mxu0 %v2319
      %3374 = vmatprep.subr.bf16.mxu0 0
      %3375 = vmatpush1.bf16.msra.mxu0 %v2320
      %3376 = vmatprep.subr.bf16.mxu0 0
      %3377 = vmatpush1.bf16.msra.mxu0 %v2321
      %3378 = vmatprep.subr.bf16.mxu0 0
      %3379 = vmatpush1.bf16.msra.mxu0 %v2322
      %3380 = vmatprep.subr.bf16.mxu0 0
      %3381 = vmatpush1.bf16.msra.mxu0 %v2323
      %3382 = vmatprep.subr.bf16.mxu0 0
      %3383 = vmatpush1.bf16.msra.mxu0 %v2324
      %3384 = vmatprep.subr.bf16.mxu0 0
      %3385 = vmatpush1.bf16.msra.mxu0 %v2487
      %3386 = vmatprep.subr.bf16.mxu0 0
      %3387 = vmatpush1.bf16.msra.mxu0 0
      %3388 = vmatprep.mubr.bf16.mxu0 %v2390
      %3389 = vmatmul.mubr.bf16.gmra.mrb[0].mxu0 %v1539
      %v3390 = vpop.f32.mrb[0].mxu0
      %v3391 = vadd.f32 %v3102, %v3390
      %v3392 = vpop.f32.mrb[0].mxu0
      %v3393 = vpop.f32.mrb[0].mxu0
      %v3394 = vadd.f32 %v3105, %v3393
      %v3395 = vpop.f32.mrb[0].mxu0
      %3396 = vmatprep.mubr.bf16.mxu0 %v2393
      %3397 = vmatmul.mubr.bf16.gmra.mrb[0].mxu0 %v1547
      %v3398 = vpop.f32.mrb[0].mxu0
      %v3399 = vadd.f32 %v3110, %v3398
      %v3400 = vpop.f32.mrb[0].mxu0
      %v3401 = vpop.f32.mrb[0].mxu0
      %v3402 = vadd.f32 %v3113, %v3401
      %v3403 = vpop.f32.mrb[0].mxu0
      %3404 = vmatprep.mubr.bf16.mxu0 %v2396
      %3405 = vmatmul.mubr.bf16.gmra.mrb[0].mxu0 %v1555
      %v3406 = vpop.f32.mrb[0].mxu0
      %v3407 = vadd.f32 %v3118, %v3406
      %v3408 = vpop.f32.mrb[0].mxu0
      %v3409 = vpop.f32.mrb[0].mxu0
      %v3410 = vadd.f32 %v3121, %v3409
      %v3411 = vpop.f32.mrb[0].mxu0
      %3412 = vmatprep.mubr.bf16.mxu0 %v2399
      %3413 = vmatmul.mubr.bf16.gmra.mrb[0].mxu0 %v1563
      %v3414 = vpop.f32.mrb[0].mxu0
      %v3415 = vadd.f32 %v3126, %v3414
      %v3416 = vpop.f32.mrb[0].mxu0
      %v3417 = vpop.f32.mrb[0].mxu0
      %v3418 = vadd.f32 %v3129, %v3417
      %v3419 = vpop.f32.mrb[0].mxu0
      %3420 = vmatprep.mubr.bf16.mxu0 %v2402
      %3421 = vmatmul.mubr.bf16.gmra.mrb[0].mxu0 %v1571
      %v3422 = vpop.f32.mrb[0].mxu0
      %v3423 = vadd.f32 %v3134, %v3422
      %v3424 = vpop.f32.mrb[0].mxu0
      %v3425 = vpop.f32.mrb[0].mxu0
      %v3426 = vadd.f32 %v3137, %v3425
      %v3427 = vpop.f32.mrb[0].mxu0
      %3428 = vmatprep.mubr.bf16.mxu0 %v2405
      %3429 = vmatmul.mubr.bf16.gmra.mrb[0].mxu0 %v1579
      %v3430 = vpop.f32.mrb[0].mxu0
      %v3431 = vadd.f32 %v3142, %v3430
      %v3432 = vpop.f32.mrb[0].mxu0
      %v3433 = vpop.f32.mrb[0].mxu0
      %v3434 = vadd.f32 %v3145, %v3433
      %v3435 = vpop.f32.mrb[0].mxu0
      %3436 = vmatprep.mubr.bf16.mxu0 %v2408
      %3437 = vmatmul.mubr.bf16.gmra.mrb[0].mxu0 %v1587
      %v3438 = vpop.f32.mrb[0].mxu0
      %v3439 = vadd.f32 %v3150, %v3438
      %v3440 = vpop.f32.mrb[0].mxu0
      %v3441 = vpop.f32.mrb[0].mxu0
      %v3442 = vadd.f32 %v3153, %v3441
      %v3443 = vpop.f32.mrb[0].mxu0
      %3444 = vmatprep.mubr.bf16.mxu0 %v2411
      %3445 = vmatmul.mubr.bf16.gmra.mrb[0].mxu0 %v1595
      %v3446 = vpop.f32.mrb[0].mxu0
      %v3447 = vadd.f32 %v3158, %v3446
      %v3448 = vpop.f32.mrb[0].mxu0
      %v3449 = vpop.f32.mrb[0].mxu0
      %v3450 = vadd.f32 %v3161, %v3449
      %v3451 = vpop.f32.mrb[0].mxu0
      %3452 = vmatprep.mubr.bf16.mxu0 %v2414
      %3453 = vmatmul.mubr.bf16.gmra.mrb[0].mxu0 %v1603
      %v3454 = vpop.f32.mrb[0].mxu0
      %v3455 = vadd.f32 %v3166, %v3454
      %v3456 = vpop.f32.mrb[0].mxu0
      %v3457 = vpop.f32.mrb[0].mxu0
      %v3458 = vadd.f32 %v3169, %v3457
      %v3459 = vpop.f32.mrb[0].mxu0
      %3460 = vmatprep.mubr.bf16.mxu0 %v2417
      %3461 = vmatmul.mubr.bf16.gmra.mrb[0].mxu0 %v1611
      %v3462 = vpop.f32.mrb[0].mxu0
      %v3463 = vadd.f32 %v3174, %v3462
      %v3464 = vpop.f32.mrb[0].mxu0
      %v3465 = vpop.f32.mrb[0].mxu0
      %v3466 = vadd.f32 %v3177, %v3465
      %v3467 = vpop.f32.mrb[0].mxu0
      %3468 = vmatprep.mubr.bf16.mxu0 %v2420
      %3469 = vmatmul.mubr.bf16.gmra.mrb[0].mxu0 %v1619
      %v3470 = vpop.f32.mrb[0].mxu0
      %v3471 = vadd.f32 %v3182, %v3470
      %v3472 = vpop.f32.mrb[0].mxu0
      %v3473 = vpop.f32.mrb[0].mxu0
      %v3474 = vadd.f32 %v3185, %v3473
      %v3475 = vpop.f32.mrb[0].mxu0
      %3476 = vmatprep.mubr.bf16.mxu0 %v2423
      %3477 = vmatmul.mubr.bf16.gmra.mrb[0].mxu0 %v1627
      %v3478 = vpop.f32.mrb[0].mxu0
      %v3479 = vadd.f32 %v3190, %v3478
      %v3480 = vpop.f32.mrb[0].mxu0
      %v3481 = vpop.f32.mrb[0].mxu0
      %v3482 = vadd.f32 %v3193, %v3481
      %v3483 = vpop.f32.mrb[0].mxu0
      %3484 = vmatprep.mubr.bf16.mxu0 %v2426
      %3485 = vmatmul.mubr.bf16.gmra.mrb[0].mxu0 %v1635
      %v3486 = vpop.f32.mrb[0].mxu0
      %v3487 = vadd.f32 %v3198, %v3486
      %v3488 = vpop.f32.mrb[0].mxu0
      %v3489 = vpop.f32.mrb[0].mxu0
      %v3490 = vadd.f32 %v3201, %v3489
      %v3491 = vpop.f32.mrb[0].mxu0
      %3492 = vmatprep.mubr.bf16.mxu0 %v2429
      %3493 = vmatmul.mubr.bf16.gmra.mrb[0].mxu0 %v1643
      %v3494 = vpop.f32.mrb[0].mxu0
      %v3495 = vadd.f32 %v3206, %v3494
      %v3496 = vpop.f32.mrb[0].mxu0
      %v3497 = vpop.f32.mrb[0].mxu0
      %v3498 = vadd.f32 %v3209, %v3497
      %v3499 = vpop.f32.mrb[0].mxu0
      %3500 = vmatprep.mubr.bf16.mxu0 %v2432
      %3501 = vmatmul.mubr.bf16.gmra.mrb[0].mxu0 %v1651
      %v3502 = vpop.f32.mrb[0].mxu0
      %v3503 = vadd.f32 %v3214, %v3502
      %v3504 = vpop.f32.mrb[0].mxu0
      %v3505 = vpop.f32.mrb[0].mxu0
      %v3506 = vadd.f32 %v3217, %v3505
      %v3507 = vpop.f32.mrb[0].mxu0
      %3508 = vmatprep.mubr.bf16.mxu0 %v2435
      %3509 = vmatmul.mubr.bf16.gmra.mrb[0].mxu0 %v1659
      %v3510 = vpop.f32.mrb[0].mxu0
      %v3511 = vadd.f32 %v3222, %v3510
      %v3512 = vpop.f32.mrb[0].mxu0
      %v3513 = vpop.f32.mrb[0].mxu0
      %v3514 = vadd.f32 %v3225, %v3513
      %v3515 = vpop.f32.mrb[0].mxu0
      %3516 = vmatprep.mubr.bf16.mxu0 %v2438
      %3517 = vmatmul.mubr.bf16.gmra.mrb[0].mxu0 %v1667
      %v3518 = vpop.f32.mrb[0].mxu0
      %v3519 = vadd.f32 %v3230, %v3518
      %v3520 = vpop.f32.mrb[0].mxu0
      %v3521 = vpop.f32.mrb[0].mxu0
      %v3522 = vadd.f32 %v3233, %v3521
      %v3523 = vpop.f32.mrb[0].mxu0
      %3524 = vmatprep.mubr.bf16.mxu0 %v2441
      %3525 = vmatmul.mubr.bf16.gmra.mrb[0].mxu0 %v1675
      %v3526 = vpop.f32.mrb[0].mxu0
      %v3527 = vadd.f32 %v3238, %v3526
      %v3528 = vpop.f32.mrb[0].mxu0
      %v3529 = vpop.f32.mrb[0].mxu0
      %v3530 = vadd.f32 %v3241, %v3529
      %v3531 = vpop.f32.mrb[0].mxu0
      %3532 = vmatprep.mubr.bf16.mxu0 %v2444
      %3533 = vmatmul.mubr.bf16.gmra.mrb[0].mxu0 %v1683
      %v3534 = vpop.f32.mrb[0].mxu0
      %v3535 = vadd.f32 %v3246, %v3534
      %v3536 = vpop.f32.mrb[0].mxu0
      %v3537 = vpop.f32.mrb[0].mxu0
      %v3538 = vadd.f32 %v3249, %v3537
      %v3539 = vpop.f32.mrb[0].mxu0
      %3540 = vmatprep.mubr.bf16.mxu0 %v2447
      %3541 = vmatmul.mubr.bf16.gmra.mrb[0].mxu0 %v1691
      %v3542 = vpop.f32.mrb[0].mxu0
      %v3543 = vadd.f32 %v3254, %v3542
      %v3544 = vpop.f32.mrb[0].mxu0
      %v3545 = vpop.f32.mrb[0].mxu0
      %v3546 = vadd.f32 %v3257, %v3545
      %v3547 = vpop.f32.mrb[0].mxu0
      %3548 = vmatprep.mubr.bf16.mxu0 %v2450
      %3549 = vmatmul.mubr.bf16.gmra.mrb[0].mxu0 %v1699
      %v3550 = vpop.f32.mrb[0].mxu0
      %v3551 = vadd.f32 %v3262, %v3550
      %v3552 = vpop.f32.mrb[0].mxu0
      %v3553 = vpop.f32.mrb[0].mxu0
      %v3554 = vadd.f32 %v3265, %v3553
      %v3555 = vpop.f32.mrb[0].mxu0
      %3556 = vmatprep.mubr.bf16.mxu0 %v2453
      %3557 = vmatmul.mubr.bf16.gmra.mrb[0].mxu0 %v1707
      %v3558 = vpop.f32.mrb[0].mxu0
      %v3559 = vadd.f32 %v3270, %v3558
      %v3560 = vpop.f32.mrb[0].mxu0
      %v3561 = vpop.f32.mrb[0].mxu0
      %v3562 = vadd.f32 %v3273, %v3561
      %v3563 = vpop.f32.mrb[0].mxu0
      %3564 = vmatprep.mubr.bf16.mxu0 %v2456
      %3565 = vmatmul.mubr.bf16.gmra.mrb[0].mxu0 %v1715
      %v3566 = vpop.f32.mrb[0].mxu0
      %v3567 = vadd.f32 %v3278, %v3566
      %v3568 = vpop.f32.mrb[0].mxu0
      %v3569 = vpop.f32.mrb[0].mxu0
      %v3570 = vadd.f32 %v3281, %v3569
      %v3571 = vpop.f32.mrb[0].mxu0
      %3572 = vmatprep.mubr.bf16.mxu0 %v2459
      %3573 = vmatmul.mubr.bf16.gmra.mrb[0].mxu0 %v1723
      %v3574 = vpop.f32.mrb[0].mxu0
      %v3575 = vadd.f32 %v3286, %v3574
      %v3576 = vpop.f32.mrb[0].mxu0
      %v3577 = vpop.f32.mrb[0].mxu0
      %v3578 = vadd.f32 %v3289, %v3577
      %v3579 = vpop.f32.mrb[0].mxu0
      %3580 = vmatprep.mubr.bf16.mxu0 %v2462
      %3581 = vmatmul.mubr.bf16.gmra.mrb[0].mxu0 %v1731
      %v3582 = vpop.f32.mrb[0].mxu0
      %v3583 = vadd.f32 %v3294, %v3582
      %v3584 = vpop.f32.mrb[0].mxu0
      %v3585 = vpop.f32.mrb[0].mxu0
      %v3586 = vadd.f32 %v3297, %v3585
      %v3587 = vpop.f32.mrb[0].mxu0
      %3588 = vmatprep.mubr.bf16.mxu0 %v2465
      %3589 = vmatmul.mubr.bf16.gmra.mrb[0].mxu0 %v1739
      %v3590 = vpop.f32.mrb[0].mxu0
      %v3591 = vadd.f32 %v3302, %v3590
      %v3592 = vpop.f32.mrb[0].mxu0
      %v3593 = vpop.f32.mrb[0].mxu0
      %v3594 = vadd.f32 %v3305, %v3593
      %v3595 = vpop.f32.mrb[0].mxu0
      %3596 = vmatprep.mubr.bf16.mxu0 %v2468
      %3597 = vmatmul.mubr.bf16.gmra.mrb[0].mxu0 %v1747
      %v3598 = vpop.f32.mrb[0].mxu0
      %v3599 = vadd.f32 %v3310, %v3598
      %v3600 = vpop.f32.mrb[0].mxu0
      %v3601 = vpop.f32.mrb[0].mxu0
      %v3602 = vadd.f32 %v3313, %v3601
      %v3603 = vpop.f32.mrb[0].mxu0
      %3604 = vmatprep.mubr.bf16.mxu0 %v2471
      %3605 = vmatmul.mubr.bf16.gmra.mrb[0].mxu0 %v1755
      %v3606 = vpop.f32.mrb[0].mxu0
      %v3607 = vadd.f32 %v3318, %v3606
      %v3608 = vpop.f32.mrb[0].mxu0
      %v3609 = vpop.f32.mrb[0].mxu0
      %v3610 = vadd.f32 %v3321, %v3609
      %v3611 = vpop.f32.mrb[0].mxu0
      %3612 = vmatprep.mubr.bf16.mxu0 %v2474
      %3613 = vmatmul.mubr.bf16.gmra.mrb[0].mxu0 %v1763
      %v3614 = vpop.f32.mrb[0].mxu0
      %v3615 = vadd.f32 %v3326, %v3614
      %v3616 = vpop.f32.mrb[0].mxu0
      %v3617 = vpop.f32.mrb[0].mxu0
      %v3618 = vadd.f32 %v3329, %v3617
      %v3619 = vpop.f32.mrb[0].mxu0
      %3620 = vmatprep.mubr.bf16.mxu0 %v2477
      %3621 = vmatmul.mubr.bf16.gmra.mrb[0].mxu0 %v1771
      %v3622 = vpop.f32.mrb[0].mxu0
      %v3623 = vadd.f32 %v3334, %v3622
      %v3624 = vpop.f32.mrb[0].mxu0
      %v3625 = vpop.f32.mrb[0].mxu0
      %v3626 = vadd.f32 %v3337, %v3625
      %v3627 = vpop.f32.mrb[0].mxu0
      %3628 = vmatprep.mubr.bf16.mxu0 %v2480
      %3629 = vmatmul.mubr.bf16.gmra.mrb[0].mxu0 %v1779
      %v3630 = vpop.f32.mrb[0].mxu0
      %v3631 = vadd.f32 %v3342, %v3630
      %v3632 = vpop.f32.mrb[0].mxu0
      %v3633 = vpop.f32.mrb[0].mxu0
      %v3634 = vadd.f32 %v3345, %v3633
      %v3635 = vpop.f32.mrb[0].mxu0
      %3636 = vmatprep.mubr.bf16.mxu0 %v2483
      %3637 = vmatmul.mubr.bf16.gmra.mrb[0].mxu0 %v1787
      %v3638 = vpop.f32.mrb[0].mxu0
      %v3639 = vadd.f32 %v3350, %v3638
      %v3640 = vpop.f32.mrb[0].mxu0
      %v3641 = vpop.f32.mrb[0].mxu0
      %v3642 = vadd.f32 %v3353, %v3641
      %v3643 = vpop.f32.mrb[0].mxu0
      %3644 = vdwg.mxu0
      %v3645 = vadd.f32 %v317, %v3391
      %v3646 = vadd.f32 %v318, %v3394
      %v3647 = vadd.f32 %v319, %v3399
      %v3648 = vadd.f32 %v320, %v3402
      %v3649 = vadd.f32 %v321, %v3407
      %v3650 = vadd.f32 %v322, %v3410
      %v3651 = vadd.f32 %v323, %v3415
      %v3652 = vadd.f32 %v324, %v3418
      %v3653 = vadd.f32 %v325, %v3423
      %v3654 = vadd.f32 %v326, %v3426
      %v3655 = vadd.f32 %v327, %v3431
      %v3656 = vadd.f32 %v328, %v3434
      %v3657 = vadd.f32 %v329, %v3439
      %v3658 = vadd.f32 %v330, %v3442
      %v3659 = vadd.f32 %v331, %v3447
      %v3660 = vadd.f32 %v332, %v3450
      %v3661 = vadd.f32 %v333, %v3455
      %v3662 = vadd.f32 %v334, %v3458
      %v3663 = vadd.f32 %v335, %v3463
      %v3664 = vadd.f32 %v336, %v3466
      %v3665 = vadd.f32 %v337, %v3471
      %v3666 = vadd.f32 %v338, %v3474
      %v3667 = vadd.f32 %v339, %v3479
      %v3668 = vadd.f32 %v340, %v3482
      %v3669 = vadd.f32 %v341, %v3487
      %v3670 = vadd.f32 %v342, %v3490
      %v3671 = vadd.f32 %v343, %v3495
      %v3672 = vadd.f32 %v344, %v3498
      %v3673 = vadd.f32 %v345, %v3503
      %v3674 = vadd.f32 %v346, %v3506
      %v3675 = vadd.f32 %v347, %v3511
      %v3676 = vadd.f32 %v348, %v3514
      %v3677 = vadd.f32 %v349, %v3519
      %v3678 = vadd.f32 %v350, %v3522
      %v3679 = vadd.f32 %v351, %v3527
      %v3680 = vadd.f32 %v352, %v3530
      %v3681 = vadd.f32 %v353, %v3535
      %v3682 = vadd.f32 %v354, %v3538
      %v3683 = vadd.f32 %v355, %v3543
      %v3684 = vadd.f32 %v356, %v3546
      %v3685 = vadd.f32 %v357, %v3551
      %v3686 = vadd.f32 %v358, %v3554
      %v3687 = vadd.f32 %v359, %v3559
      %v3688 = vadd.f32 %v360, %v3562
      %v3689 = vadd.f32 %v361, %v3567
      %v3690 = vadd.f32 %v362, %v3570
      %v3691 = vadd.f32 %v363, %v3575
      %v3692 = vadd.f32 %v364, %v3578
      %v3693 = vadd.f32 %v365, %v3583
      %v3694 = vadd.f32 %v366, %v3586
      %v3695 = vadd.f32 %v367, %v3591
      %v3696 = vadd.f32 %v368, %v3594
      %v3697 = vadd.f32 %v369, %v3599
      %v3698 = vadd.f32 %v370, %v3602
      %v3699 = vadd.f32 %v371, %v3607
      %v3700 = vadd.f32 %v372, %v3610
      %v3701 = vadd.f32 %v373, %v3615
      %v3702 = vadd.f32 %v374, %v3618
      %v3703 = vadd.f32 %v375, %v3623
      %v3704 = vadd.f32 %v376, %v3626
      %v3705 = vadd.f32 %v377, %v3631
      %v3706 = vadd.f32 %v378, %v3634
      %v3707 = vadd.f32 %v379, %v3639
      %v3708 = vadd.f32 %v380, %v3642
      %vm3709 = vcmask 261120
      %3710 = vst.msk [vmem:[#allocation2] sm:$0xff] %vm3709, %v3645
      %3711 = vst.msk [vmem:[#allocation2 + $0x8] sm:$0xff] %vm3709, %v3646
      %3712 = vst.msk [vmem:[#allocation2 + $0x10] sm:$0xff] %vm3709, %v3647
      %3713 = vst.msk [vmem:[#allocation2 + $0x18] sm:$0xff] %vm3709, %v3648
      %3714 = vst.msk [vmem:[#allocation2 + $0x20] sm:$0xff] %vm3709, %v3649
      %3715 = vst.msk [vmem:[#allocation2 + $0x28] sm:$0xff] %vm3709, %v3650
      %3716 = vst.msk [vmem:[#allocation2 + $0x30] sm:$0xff] %vm3709, %v3651
      %3717 = vst.msk [vmem:[#allocation2 + $0x38] sm:$0xff] %vm3709, %v3652
      %3718 = vst.msk [vmem:[#allocation2 + $0x40] sm:$0xff] %vm3709, %v3653
      %3719 = vst.msk [vmem:[#allocation2 + $0x48] sm:$0xff] %vm3709, %v3654
      %3720 = vst.msk [vmem:[#allocation2 + $0x50] sm:$0xff] %vm3709, %v3655
      %3721 = vst.msk [vmem:[#allocation2 + $0x58] sm:$0xff] %vm3709, %v3656
      %3722 = vst.msk [vmem:[#allocation2 + $0x60] sm:$0xff] %vm3709, %v3657
      %3723 = vst.msk [vmem:[#allocation2 + $0x68] sm:$0xff] %vm3709, %v3658
      %3724 = vst.msk [vmem:[#allocation2 + $0x70] sm:$0xff] %vm3709, %v3659
      %3725 = vst.msk [vmem:[#allocation2 + $0x78] sm:$0xff] %vm3709, %v3660
      %3726 = vst.msk [vmem:[#allocation2 + $0x80] sm:$0xff] %vm3709, %v3661
      %3727 = vst.msk [vmem:[#allocation2 + $0x88] sm:$0xff] %vm3709, %v3662
      %3728 = vst.msk [vmem:[#allocation2 + $0x90] sm:$0xff] %vm3709, %v3663
      %3729 = vst.msk [vmem:[#allocation2 + $0x98] sm:$0xff] %vm3709, %v3664
      %3730 = vst.msk [vmem:[#allocation2 + $0xa0] sm:$0xff] %vm3709, %v3665
      %3731 = vst.msk [vmem:[#allocation2 + $0xa8] sm:$0xff] %vm3709, %v3666
      %3732 = vst.msk [vmem:[#allocation2 + $0xb0] sm:$0xff] %vm3709, %v3667
      %3733 = vst.msk [vmem:[#allocation2 + $0xb8] sm:$0xff] %vm3709, %v3668
      %3734 = vst.msk [vmem:[#allocation2 + $0xc0] sm:$0xff] %vm3709, %v3669
      %3735 = vst.msk [vmem:[#allocation2 + $0xc8] sm:$0xff] %vm3709, %v3670
      %3736 = vst.msk [vmem:[#allocation2 + $0xd0] sm:$0xff] %vm3709, %v3671
      %3737 = vst.msk [vmem:[#allocation2 + $0xd8] sm:$0xff] %vm3709, %v3672
      %3738 = vst.msk [vmem:[#allocation2 + $0xe0] sm:$0xff] %vm3709, %v3673
      %3739 = vst.msk [vmem:[#allocation2 + $0xe8] sm:$0xff] %vm3709, %v3674
      %3740 = vst.msk [vmem:[#allocation2 + $0xf0] sm:$0xff] %vm3709, %v3675
      %3741 = vst.msk [vmem:[#allocation2 + $0xf8] sm:$0xff] %vm3709, %v3676
      %3742 = vst.msk [vmem:[#allocation2 + $0x100] sm:$0xff] %vm3709, %v3677
      %3743 = vst.msk [vmem:[#allocation2 + $0x108] sm:$0xff] %vm3709, %v3678
      %3744 = vst.msk [vmem:[#allocation2 + $0x110] sm:$0xff] %vm3709, %v3679
      %3745 = vst.msk [vmem:[#allocation2 + $0x118] sm:$0xff] %vm3709, %v3680
      %3746 = vst.msk [vmem:[#allocation2 + $0x120] sm:$0xff] %vm3709, %v3681
      %3747 = vst.msk [vmem:[#allocation2 + $0x128] sm:$0xff] %vm3709, %v3682
      %3748 = vst.msk [vmem:[#allocation2 + $0x130] sm:$0xff] %vm3709, %v3683
      %3749 = vst.msk [vmem:[#allocation2 + $0x138] sm:$0xff] %vm3709, %v3684
      %3750 = vst.msk [vmem:[#allocation2 + $0x140] sm:$0xff] %vm3709, %v3685
      %3751 = vst.msk [vmem:[#allocation2 + $0x148] sm:$0xff] %vm3709, %v3686
      %3752 = vst.msk [vmem:[#allocation2 + $0x150] sm:$0xff] %vm3709, %v3687
      %3753 = vst.msk [vmem:[#allocation2 + $0x158] sm:$0xff] %vm3709, %v3688
      %3754 = vst.msk [vmem:[#allocation2 + $0x160] sm:$0xff] %vm3709, %v3689
      %3755 = vst.msk [vmem:[#allocation2 + $0x168] sm:$0xff] %vm3709, %v3690
      %3756 = vst.msk [vmem:[#allocation2 + $0x170] sm:$0xff] %vm3709, %v3691
      %3757 = vst.msk [vmem:[#allocation2 + $0x178] sm:$0xff] %vm3709, %v3692
      %3758 = vst.msk [vmem:[#allocation2 + $0x180] sm:$0xff] %vm3709, %v3693
      %3759 = vst.msk [vmem:[#allocation2 + $0x188] sm:$0xff] %vm3709, %v3694
      %3760 = vst.msk [vmem:[#allocation2 + $0x190] sm:$0xff] %vm3709, %v3695
      %3761 = vst.msk [vmem:[#allocation2 + $0x198] sm:$0xff] %vm3709, %v3696
      %3762 = vst.msk [vmem:[#allocation2 + $0x1a0] sm:$0xff] %vm3709, %v3697
      %3763 = vst.msk [vmem:[#allocation2 + $0x1a8] sm:$0xff] %vm3709, %v3698
      %3764 = vst.msk [vmem:[#allocation2 + $0x1b0] sm:$0xff] %vm3709, %v3699
      %3765 = vst.msk [vmem:[#allocation2 + $0x1b8] sm:$0xff] %vm3709, %v3700
      %3766 = vst.msk [vmem:[#allocation2 + $0x1c0] sm:$0xff] %vm3709, %v3701
      %3767 = vst.msk [vmem:[#allocation2 + $0x1c8] sm:$0xff] %vm3709, %v3702
      %3768 = vst.msk [vmem:[#allocation2 + $0x1d0] sm:$0xff] %vm3709, %v3703
      %3769 = vst.msk [vmem:[#allocation2 + $0x1d8] sm:$0xff] %vm3709, %v3704
      %3770 = vst.msk [vmem:[#allocation2 + $0x1e0] sm:$0xff] %vm3709, %v3705
      %3771 = vst.msk [vmem:[#allocation2 + $0x1e8] sm:$0xff] %vm3709, %v3706
      %3772 = vst.msk [vmem:[#allocation2 + $0x1f0] sm:$0xff] %vm3709, %v3707
      %3773 = vst.msk [vmem:[#allocation2 + $0x1f8] sm:$0xff] %vm3709, %v3708
      // Predicated region
      $region33: #{conv_bn_act.2} parent=27 // pred_check
        %p3774 = pneg %p248
      $region34: #{conv_bn_act.2} parent=27 // pred_check_branch
        %3776 = sbr.rel (%p3774) target = $region36
      $region35: #{conv_bn_act.2} parent=27 // pred_region
        %v3777 = vld [vmem:[#allocation2] sm:$0xff]
        %v3778 = vld [vmem:[#allocation2 + $0x8] sm:$0xff]
        %v3779 = vld [vmem:[#allocation2 + $0x10] sm:$0xff]
        %v3780 = vld [vmem:[#allocation2 + $0x18] sm:$0xff]
        %v3781 = vld [vmem:[#allocation2 + $0x20] sm:$0xff]
        %v3782 = vld [vmem:[#allocation2 + $0x28] sm:$0xff]
        %v3783 = vld [vmem:[#allocation2 + $0x30] sm:$0xff]
        %v3784 = vld [vmem:[#allocation2 + $0x38] sm:$0xff]
        %v3785 = vld [vmem:[#allocation2 + $0x40] sm:$0xff]
        %v3786 = vld [vmem:[#allocation2 + $0x48] sm:$0xff]
        %v3787 = vld [vmem:[#allocation2 + $0x50] sm:$0xff]
        %v3788 = vld [vmem:[#allocation2 + $0x58] sm:$0xff]
        %v3789 = vld [vmem:[#allocation2 + $0x60] sm:$0xff]
        %v3790 = vld [vmem:[#allocation2 + $0x68] sm:$0xff]
        %v3791 = vld [vmem:[#allocation2 + $0x70] sm:$0xff]
        %v3792 = vld [vmem:[#allocation2 + $0x78] sm:$0xff]
        %v3793 = vld [vmem:[#allocation2 + $0x80] sm:$0xff]
        %v3794 = vld [vmem:[#allocation2 + $0x88] sm:$0xff]
        %v3795 = vld [vmem:[#allocation2 + $0x90] sm:$0xff]
        %v3796 = vld [vmem:[#allocation2 + $0x98] sm:$0xff]
        %v3797 = vld [vmem:[#allocation2 + $0xa0] sm:$0xff]
        %v3798 = vld [vmem:[#allocation2 + $0xa8] sm:$0xff]
        %v3799 = vld [vmem:[#allocation2 + $0xb0] sm:$0xff]
        %v3800 = vld [vmem:[#allocation2 + $0xb8] sm:$0xff]
        %v3801 = vld [vmem:[#allocation2 + $0xc0] sm:$0xff]
        %v3802 = vld [vmem:[#allocation2 + $0xc8] sm:$0xff]
        %v3803 = vld [vmem:[#allocation2 + $0xd0] sm:$0xff]
        %v3804 = vld [vmem:[#allocation2 + $0xd8] sm:$0xff]
        %v3805 = vld [vmem:[#allocation2 + $0xe0] sm:$0xff]
        %v3806 = vld [vmem:[#allocation2 + $0xe8] sm:$0xff]
        %v3807 = vld [vmem:[#allocation2 + $0xf0] sm:$0xff]
        %v3808 = vld [vmem:[#allocation2 + $0xf8] sm:$0xff]
        %v3809 = vld [vmem:[#allocation2 + $0x100] sm:$0xff]
        %v3810 = vld [vmem:[#allocation2 + $0x108] sm:$0xff]
        %v3811 = vld [vmem:[#allocation2 + $0x110] sm:$0xff]
        %v3812 = vld [vmem:[#allocation2 + $0x118] sm:$0xff]
        %v3813 = vld [vmem:[#allocation2 + $0x120] sm:$0xff]
        %v3814 = vld [vmem:[#allocation2 + $0x128] sm:$0xff]
        %v3815 = vld [vmem:[#allocation2 + $0x130] sm:$0xff]
        %v3816 = vld [vmem:[#allocation2 + $0x138] sm:$0xff]
        %v3817 = vld [vmem:[#allocation2 + $0x140] sm:$0xff]
        %v3818 = vld [vmem:[#allocation2 + $0x148] sm:$0xff]
        %v3819 = vld [vmem:[#allocation2 + $0x150] sm:$0xff]
        %v3820 = vld [vmem:[#allocation2 + $0x158] sm:$0xff]
        %v3821 = vld [vmem:[#allocation2 + $0x160] sm:$0xff]
        %v3822 = vld [vmem:[#allocation2 + $0x168] sm:$0xff]
        %v3823 = vld [vmem:[#allocation2 + $0x170] sm:$0xff]
        %v3824 = vld [vmem:[#allocation2 + $0x178] sm:$0xff]
        %v3825 = vld [vmem:[#allocation2 + $0x180] sm:$0xff]
        %v3826 = vld [vmem:[#allocation2 + $0x188] sm:$0xff]
        %v3827 = vld [vmem:[#allocation2 + $0x190] sm:$0xff]
        %v3828 = vld [vmem:[#allocation2 + $0x198] sm:$0xff]
        %v3829 = vld [vmem:[#allocation2 + $0x1a0] sm:$0xff]
        %v3830 = vld [vmem:[#allocation2 + $0x1a8] sm:$0xff]
        %v3831 = vld [vmem:[#allocation2 + $0x1b0] sm:$0xff]
        %v3832 = vld [vmem:[#allocation2 + $0x1b8] sm:$0xff]
        %v3833 = vld [vmem:[#allocation2 + $0x1c0] sm:$0xff]
        %v3834 = vld [vmem:[#allocation2 + $0x1c8] sm:$0xff]
        %v3835 = vld [vmem:[#allocation2 + $0x1d0] sm:$0xff]
        %v3836 = vld [vmem:[#allocation2 + $0x1d8] sm:$0xff]
        %v3837 = vld [vmem:[#allocation2 + $0x1e0] sm:$0xff]
        %v3838 = vld [vmem:[#allocation2 + $0x1e8] sm:$0xff]
        %v3839 = vld [vmem:[#allocation2 + $0x1f0] sm:$0xff]
        %v3840 = vld [vmem:[#allocation2 + $0x1f8] sm:$0xff]
        %v3841 = vpack.c.bf16 %v3778, %v3777
        %v3842 = vpack.c.bf16 %v3780, %v3779
        %v3843 = vpack.c.bf16 %v3782, %v3781
        %v3844 = vpack.c.bf16 %v3784, %v3783
        %v3845 = vpack.c.bf16 %v3786, %v3785
        %v3846 = vpack.c.bf16 %v3788, %v3787
        %v3847 = vpack.c.bf16 %v3790, %v3789
        %v3848 = vpack.c.bf16 %v3792, %v3791
        %v3849 = vpack.c.bf16 %v3794, %v3793
        %v3850 = vpack.c.bf16 %v3796, %v3795
        %v3851 = vpack.c.bf16 %v3798, %v3797
        %v3852 = vpack.c.bf16 %v3800, %v3799
        %v3853 = vpack.c.bf16 %v3802, %v3801
        %v3854 = vpack.c.bf16 %v3804, %v3803
        %v3855 = vpack.c.bf16 %v3806, %v3805
        %v3856 = vpack.c.bf16 %v3808, %v3807
        %v3857 = vpack.c.bf16 %v3810, %v3809
        %v3858 = vpack.c.bf16 %v3812, %v3811
        %v3859 = vpack.c.bf16 %v3814, %v3813
        %v3860 = vpack.c.bf16 %v3816, %v3815
        %v3861 = vpack.c.bf16 %v3818, %v3817
        %v3862 = vpack.c.bf16 %v3820, %v3819
        %v3863 = vpack.c.bf16 %v3822, %v3821
        %v3864 = vpack.c.bf16 %v3824, %v3823
        %v3865 = vpack.c.bf16 %v3826, %v3825
        %v3866 = vpack.c.bf16 %v3828, %v3827
        %v3867 = vpack.c.bf16 %v3830, %v3829
        %v3868 = vpack.c.bf16 %v3832, %v3831
        %v3869 = vpack.c.bf16 %v3834, %v3833
        %v3870 = vpack.c.bf16 %v3836, %v3835
        %v3871 = vpack.c.bf16 %v3838, %v3837
        %v3872 = vpack.c.bf16 %v3840, %v3839
        %v3905 = vunpack.c.l.b16 %v3841
        %v3906 = vunpack.c.h.b16 %v3841
        %v3907 = vunpack.c.l.b16 %v3842
        %v3908 = vunpack.c.h.b16 %v3842
        %v3909 = vunpack.c.l.b16 %v3843
        %v3910 = vunpack.c.h.b16 %v3843
        %v3911 = vunpack.c.l.b16 %v3844
        %v3912 = vunpack.c.h.b16 %v3844
        %v3913 = vunpack.c.l.b16 %v3845
        %v3914 = vunpack.c.h.b16 %v3845
        %v3915 = vunpack.c.l.b16 %v3846
        %v3916 = vunpack.c.h.b16 %v3846
        %v3917 = vunpack.c.l.b16 %v3847
        %v3918 = vunpack.c.h.b16 %v3847
        %v3919 = vunpack.c.l.b16 %v3848
        %v3920 = vunpack.c.h.b16 %v3848
        %v3921 = vunpack.c.l.b16 %v3849
        %v3922 = vunpack.c.h.b16 %v3849
        %v3923 = vunpack.c.l.b16 %v3850
        %v3924 = vunpack.c.h.b16 %v3850
        %v3925 = vunpack.c.l.b16 %v3851
        %v3926 = vunpack.c.h.b16 %v3851
        %v3927 = vunpack.c.l.b16 %v3852
        %v3928 = vunpack.c.h.b16 %v3852
        %v3929 = vunpack.c.l.b16 %v3853
        %v3930 = vunpack.c.h.b16 %v3853
        %v3931 = vunpack.c.l.b16 %v3854
        %v3932 = vunpack.c.h.b16 %v3854
        %v3933 = vunpack.c.l.b16 %v3855
        %v3934 = vunpack.c.h.b16 %v3855
        %v3935 = vunpack.c.l.b16 %v3856
        %v3936 = vunpack.c.h.b16 %v3856
        %v3937 = vunpack.c.l.b16 %v3857
        %v3938 = vunpack.c.h.b16 %v3857
        %v3939 = vunpack.c.l.b16 %v3858
        %v3940 = vunpack.c.h.b16 %v3858
        %v3941 = vunpack.c.l.b16 %v3859
        %v3942 = vunpack.c.h.b16 %v3859
        %v3943 = vunpack.c.l.b16 %v3860
        %v3944 = vunpack.c.h.b16 %v3860
        %v3945 = vunpack.c.l.b16 %v3861
        %v3946 = vunpack.c.h.b16 %v3861
        %v3947 = vunpack.c.l.b16 %v3862
        %v3948 = vunpack.c.h.b16 %v3862
        %v3949 = vunpack.c.l.b16 %v3863
        %v3950 = vunpack.c.h.b16 %v3863
        %v3951 = vunpack.c.l.b16 %v3864
        %v3952 = vunpack.c.h.b16 %v3864
        %v3953 = vunpack.c.l.b16 %v3865
        %v3954 = vunpack.c.h.b16 %v3865
        %v3955 = vunpack.c.l.b16 %v3866
        %v3956 = vunpack.c.h.b16 %v3866
        %v3957 = vunpack.c.l.b16 %v3867
        %v3958 = vunpack.c.h.b16 %v3867
        %v3959 = vunpack.c.l.b16 %v3868
        %v3960 = vunpack.c.h.b16 %v3868
        %v3961 = vunpack.c.l.b16 %v3869
        %v3962 = vunpack.c.h.b16 %v3869
        %v3963 = vunpack.c.l.b16 %v3870
        %v3964 = vunpack.c.h.b16 %v3870
        %v3965 = vunpack.c.l.b16 %v3871
        %v3966 = vunpack.c.h.b16 %v3871
        %v3967 = vunpack.c.l.b16 %v3872
        %v3968 = vunpack.c.h.b16 %v3872
        %v3969 = vpack.c.b16 %v3905, %v3905
        %v3970 = vpack.c.b16 %v3906, %v3906
        %v3971 = vpack.c.b16 %v3907, %v3907
        %v3972 = vpack.c.b16 %v3908, %v3908
        %v3973 = vpack.c.b16 %v3909, %v3909
        %v3974 = vpack.c.b16 %v3910, %v3910
        %v3975 = vpack.c.b16 %v3911, %v3911
        %v3976 = vpack.c.b16 %v3912, %v3912
        %v3977 = vpack.c.b16 %v3913, %v3913
        %v3978 = vpack.c.b16 %v3914, %v3914
        %v3979 = vpack.c.b16 %v3915, %v3915
        %v3980 = vpack.c.b16 %v3916, %v3916
        %v3981 = vpack.c.b16 %v3917, %v3917
        %v3982 = vpack.c.b16 %v3918, %v3918
        %v3983 = vpack.c.b16 %v3919, %v3919
        %v3984 = vpack.c.b16 %v3920, %v3920
        %v3985 = vpack.c.b16 %v3921, %v3921
        %v3986 = vpack.c.b16 %v3922, %v3922
        %v3987 = vpack.c.b16 %v3923, %v3923
        %v3988 = vpack.c.b16 %v3924, %v3924
        %v3989 = vpack.c.b16 %v3925, %v3925
        %v3990 = vpack.c.b16 %v3926, %v3926
        %v3991 = vpack.c.b16 %v3927, %v3927
        %v3992 = vpack.c.b16 %v3928, %v3928
        %v3993 = vpack.c.b16 %v3929, %v3929
        %v3994 = vpack.c.b16 %v3930, %v3930
        %v3995 = vpack.c.b16 %v3931, %v3931
        %v3996 = vpack.c.b16 %v3932, %v3932
        %v3997 = vpack.c.b16 %v3933, %v3933
        %v3998 = vpack.c.b16 %v3934, %v3934
        %v3999 = vpack.c.b16 %v3935, %v3935
        %v4000 = vpack.c.b16 %v3936, %v3936
        %v4001 = vpack.c.b16 %v3937, %v3937
        %v4002 = vpack.c.b16 %v3938, %v3938
        %v4003 = vpack.c.b16 %v3939, %v3939
        %v4004 = vpack.c.b16 %v3940, %v3940
        %v4005 = vpack.c.b16 %v3941, %v3941
        %v4006 = vpack.c.b16 %v3942, %v3942
        %v4007 = vpack.c.b16 %v3943, %v3943
        %v4008 = vpack.c.b16 %v3944, %v3944
        %v4009 = vpack.c.b16 %v3945, %v3945
        %v4010 = vpack.c.b16 %v3946, %v3946
        %v4011 = vpack.c.b16 %v3947, %v3947
        %v4012 = vpack.c.b16 %v3948, %v3948
        %v4013 = vpack.c.b16 %v3949, %v3949
        %v4014 = vpack.c.b16 %v3950, %v3950
        %v4015 = vpack.c.b16 %v3951, %v3951
        %v4016 = vpack.c.b16 %v3952, %v3952
        %v4017 = vpack.c.b16 %v3953, %v3953
        %v4018 = vpack.c.b16 %v3954, %v3954
        %v4019 = vpack.c.b16 %v3955, %v3955
        %v4020 = vpack.c.b16 %v3956, %v3956
        %v4021 = vpack.c.b16 %v3957, %v3957
        %v4022 = vpack.c.b16 %v3958, %v3958
        %v4023 = vpack.c.b16 %v3959, %v3959
        %v4024 = vpack.c.b16 %v3960, %v3960
        %v4025 = vpack.c.b16 %v3961, %v3961
        %v4026 = vpack.c.b16 %v3962, %v3962
        %v4027 = vpack.c.b16 %v3963, %v3963
        %v4028 = vpack.c.b16 %v3964, %v3964
        %v4029 = vpack.c.b16 %v3965, %v3965
        %v4030 = vpack.c.b16 %v3966, %v3966
        %v4031 = vpack.c.b16 %v3967, %v3967
        %v4032 = vpack.c.b16 %v3968, %v3968
        %vm4097 = vcmask 257024
        %4098 = vst.msk [vmem:[%s239] sm:$0xf] %vm4097, %v3969
        %4099 = vst.msk [vmem:[%s239 + $0x4] sm:$0xf] %vm4097, %v3970
        %4100 = vst.msk [vmem:[%s239 + $0x8] sm:$0xf] %vm4097, %v3971
        %4101 = vst.msk [vmem:[%s239 + $0xc] sm:$0xf] %vm4097, %v3972
        %4102 = vst.msk [vmem:[%s239 + $0x10] sm:$0xf] %vm4097, %v3973
        %4103 = vst.msk [vmem:[%s239 + $0x14] sm:$0xf] %vm4097, %v3974
        %4104 = vst.msk [vmem:[%s239 + $0x18] sm:$0xf] %vm4097, %v3975
        %4105 = vst.msk [vmem:[%s239 + $0x1c] sm:$0xf] %vm4097, %v3976
        %4106 = vst.msk [vmem:[%s239 + $0x20] sm:$0xf] %vm4097, %v3977
        %4107 = vst.msk [vmem:[%s239 + $0x24] sm:$0xf] %vm4097, %v3978
        %4108 = vst.msk [vmem:[%s239 + $0x28] sm:$0xf] %vm4097, %v3979
        %4109 = vst.msk [vmem:[%s239 + $0x2c] sm:$0xf] %vm4097, %v3980
        %4110 = vst.msk [vmem:[%s239 + $0x30] sm:$0xf] %vm4097, %v3981
        %4111 = vst.msk [vmem:[%s239 + $0x34] sm:$0xf] %vm4097, %v3982
        %4112 = vst.msk [vmem:[%s239 + $0x38] sm:$0xf] %vm4097, %v3983
        %4113 = vst.msk [vmem:[%s239 + $0x3c] sm:$0xf] %vm4097, %v3984
        %4114 = vst.msk [vmem:[%s239 + $0x40] sm:$0xf] %vm4097, %v3985
        %4115 = vst.msk [vmem:[%s239 + $0x44] sm:$0xf] %vm4097, %v3986
        %4116 = vst.msk [vmem:[%s239 + $0x48] sm:$0xf] %vm4097, %v3987
        %4117 = vst.msk [vmem:[%s239 + $0x4c] sm:$0xf] %vm4097, %v3988
        %4118 = vst.msk [vmem:[%s239 + $0x50] sm:$0xf] %vm4097, %v3989
        %4119 = vst.msk [vmem:[%s239 + $0x54] sm:$0xf] %vm4097, %v3990
        %4120 = vst.msk [vmem:[%s239 + $0x58] sm:$0xf] %vm4097, %v3991
        %4121 = vst.msk [vmem:[%s239 + $0x5c] sm:$0xf] %vm4097, %v3992
        %4122 = vst.msk [vmem:[%s239 + $0x60] sm:$0xf] %vm4097, %v3993
        %4123 = vst.msk [vmem:[%s239 + $0x64] sm:$0xf] %vm4097, %v3994
        %4124 = vst.msk [vmem:[%s239 + $0x68] sm:$0xf] %vm4097, %v3995
        %4125 = vst.msk [vmem:[%s239 + $0x6c] sm:$0xf] %vm4097, %v3996
        %4126 = vst.msk [vmem:[%s239 + $0x70] sm:$0xf] %vm4097, %v3997
        %4127 = vst.msk [vmem:[%s239 + $0x74] sm:$0xf] %vm4097, %v3998
        %4128 = vst.msk [vmem:[%s239 + $0x78] sm:$0xf] %vm4097, %v3999
        %4129 = vst.msk [vmem:[%s239 + $0x7c] sm:$0xf] %vm4097, %v4000
        %4130 = vst.msk [vmem:[%s239 + $0x80] sm:$0xf] %vm4097, %v4001
        %4131 = vst.msk [vmem:[%s239 + $0x84] sm:$0xf] %vm4097, %v4002
        %4132 = vst.msk [vmem:[%s239 + $0x88] sm:$0xf] %vm4097, %v4003
        %4133 = vst.msk [vmem:[%s239 + $0x8c] sm:$0xf] %vm4097, %v4004
        %4134 = vst.msk [vmem:[%s239 + $0x90] sm:$0xf] %vm4097, %v4005
        %4135 = vst.msk [vmem:[%s239 + $0x94] sm:$0xf] %vm4097, %v4006
        %4136 = vst.msk [vmem:[%s239 + $0x98] sm:$0xf] %vm4097, %v4007
        %4137 = vst.msk [vmem:[%s239 + $0x9c] sm:$0xf] %vm4097, %v4008
        %4138 = vst.msk [vmem:[%s239 + $0xa0] sm:$0xf] %vm4097, %v4009
        %4139 = vst.msk [vmem:[%s239 + $0xa4] sm:$0xf] %vm4097, %v4010
        %4140 = vst.msk [vmem:[%s239 + $0xa8] sm:$0xf] %vm4097, %v4011
        %4141 = vst.msk [vmem:[%s239 + $0xac] sm:$0xf] %vm4097, %v4012
        %4142 = vst.msk [vmem:[%s239 + $0xb0] sm:$0xf] %vm4097, %v4013
        %4143 = vst.msk [vmem:[%s239 + $0xb4] sm:$0xf] %vm4097, %v4014
        %4144 = vst.msk [vmem:[%s239 + $0xb8] sm:$0xf] %vm4097, %v4015
        %4145 = vst.msk [vmem:[%s239 + $0xbc] sm:$0xf] %vm4097, %v4016
        %4146 = vst.msk [vmem:[%s239 + $0xc0] sm:$0xf] %vm4097, %v4017
        %4147 = vst.msk [vmem:[%s239 + $0xc4] sm:$0xf] %vm4097, %v4018
        %4148 = vst.msk [vmem:[%s239 + $0xc8] sm:$0xf] %vm4097, %v4019
        %4149 = vst.msk [vmem:[%s239 + $0xcc] sm:$0xf] %vm4097, %v4020
        %4150 = vst.msk [vmem:[%s239 + $0xd0] sm:$0xf] %vm4097, %v4021
        %4151 = vst.msk [vmem:[%s239 + $0xd4] sm:$0xf] %vm4097, %v4022
        %4152 = vst.msk [vmem:[%s239 + $0xd8] sm:$0xf] %vm4097, %v4023
        %4153 = vst.msk [vmem:[%s239 + $0xdc] sm:$0xf] %vm4097, %v4024
        %4154 = vst.msk [vmem:[%s239 + $0xe0] sm:$0xf] %vm4097, %v4025
        %4155 = vst.msk [vmem:[%s239 + $0xe4] sm:$0xf] %vm4097, %v4026
        %4156 = vst.msk [vmem:[%s239 + $0xe8] sm:$0xf] %vm4097, %v4027
        %4157 = vst.msk [vmem:[%s239 + $0xec] sm:$0xf] %vm4097, %v4028
        %4158 = vst.msk [vmem:[%s239 + $0xf0] sm:$0xf] %vm4097, %v4029
        %4159 = vst.msk [vmem:[%s239 + $0xf4] sm:$0xf] %vm4097, %v4030
        %4160 = vst.msk [vmem:[%s239 + $0xf8] sm:$0xf] %vm4097, %v4031
        %4161 = vst.msk [vmem:[%s239 + $0xfc] sm:$0xf] %vm4097, %v4032
        %v4162 = vsel %vm3709, %v3777, 0.0
        %v4163 = vsel %vm3709, %v3778, 0.0
        %v4164 = vadd.f32 %v4162, %v4163
        %v4165 = vsel %vm3709, %v3779, 0.0
        %v4166 = vadd.f32 %v4164, %v4165
        %v4167 = vsel %vm3709, %v3780, 0.0
        %v4168 = vadd.f32 %v4166, %v4167
        %v4169 = vsel %vm3709, %v3781, 0.0
        %v4170 = vadd.f32 %v4168, %v4169
        %v4171 = vsel %vm3709, %v3782, 0.0
        %v4172 = vadd.f32 %v4170, %v4171
        %v4173 = vsel %vm3709, %v3783, 0.0
        %v4174 = vadd.f32 %v4172, %v4173
        %v4175 = vsel %vm3709, %v3784, 0.0
        %v4176 = vadd.f32 %v4174, %v4175
        %v4177 = vsel %vm3709, %v3785, 0.0
        %v4178 = vadd.f32 %v4176, %v4177
        %v4179 = vsel %vm3709, %v3786, 0.0
        %v4180 = vadd.f32 %v4178, %v4179
        %v4181 = vsel %vm3709, %v3787, 0.0
        %v4182 = vadd.f32 %v4180, %v4181
        %v4183 = vsel %vm3709, %v3788, 0.0
        %v4184 = vadd.f32 %v4182, %v4183
        %v4185 = vsel %vm3709, %v3789, 0.0
        %v4186 = vadd.f32 %v4184, %v4185
        %v4187 = vsel %vm3709, %v3790, 0.0
        %v4188 = vadd.f32 %v4186, %v4187
        %v4189 = vsel %vm3709, %v3791, 0.0
        %v4190 = vadd.f32 %v4188, %v4189
        %v4191 = vsel %vm3709, %v3792, 0.0
        %v4192 = vadd.f32 %v4190, %v4191
        %v4193 = vsel %vm3709, %v3793, 0.0
        %v4194 = vadd.f32 %v4192, %v4193
        %v4195 = vsel %vm3709, %v3794, 0.0
        %v4196 = vadd.f32 %v4194, %v4195
        %v4197 = vsel %vm3709, %v3795, 0.0
        %v4198 = vadd.f32 %v4196, %v4197
        %v4199 = vsel %vm3709, %v3796, 0.0
        %v4200 = vadd.f32 %v4198, %v4199
        %v4201 = vsel %vm3709, %v3797, 0.0
        %v4202 = vadd.f32 %v4200, %v4201
        %v4203 = vsel %vm3709, %v3798, 0.0
        %v4204 = vadd.f32 %v4202, %v4203
        %v4205 = vsel %vm3709, %v3799, 0.0
        %v4206 = vadd.f32 %v4204, %v4205
        %v4207 = vsel %vm3709, %v3800, 0.0
        %v4208 = vadd.f32 %v4206, %v4207
        %v4209 = vsel %vm3709, %v3801, 0.0
        %v4210 = vadd.f32 %v4208, %v4209
        %v4211 = vsel %vm3709, %v3802, 0.0
        %v4212 = vadd.f32 %v4210, %v4211
        %v4213 = vsel %vm3709, %v3803, 0.0
        %v4214 = vadd.f32 %v4212, %v4213
        %v4215 = vsel %vm3709, %v3804, 0.0
        %v4216 = vadd.f32 %v4214, %v4215
        %v4217 = vsel %vm3709, %v3805, 0.0
        %v4218 = vadd.f32 %v4216, %v4217
        %v4219 = vsel %vm3709, %v3806, 0.0
        %v4220 = vadd.f32 %v4218, %v4219
        %v4221 = vsel %vm3709, %v3807, 0.0
        %v4222 = vadd.f32 %v4220, %v4221
        %v4223 = vsel %vm3709, %v3808, 0.0
        %v4224 = vadd.f32 %v4222, %v4223
        %v4225 = vsel %vm3709, %v3809, 0.0
        %v4226 = vadd.f32 %v4224, %v4225
        %v4227 = vsel %vm3709, %v3810, 0.0
        %v4228 = vadd.f32 %v4226, %v4227
        %v4229 = vsel %vm3709, %v3811, 0.0
        %v4230 = vadd.f32 %v4228, %v4229
        %v4231 = vsel %vm3709, %v3812, 0.0
        %v4232 = vadd.f32 %v4230, %v4231
        %v4233 = vsel %vm3709, %v3813, 0.0
        %v4234 = vadd.f32 %v4232, %v4233
        %v4235 = vsel %vm3709, %v3814, 0.0
        %v4236 = vadd.f32 %v4234, %v4235
        %v4237 = vsel %vm3709, %v3815, 0.0
        %v4238 = vadd.f32 %v4236, %v4237
        %v4239 = vsel %vm3709, %v3816, 0.0
        %v4240 = vadd.f32 %v4238, %v4239
        %v4241 = vsel %vm3709, %v3817, 0.0
        %v4242 = vadd.f32 %v4240, %v4241
        %v4243 = vsel %vm3709, %v3818, 0.0
        %v4244 = vadd.f32 %v4242, %v4243
        %v4245 = vsel %vm3709, %v3819, 0.0
        %v4246 = vadd.f32 %v4244, %v4245
        %v4247 = vsel %vm3709, %v3820, 0.0
        %v4248 = vadd.f32 %v4246, %v4247
        %v4249 = vsel %vm3709, %v3821, 0.0
        %v4250 = vadd.f32 %v4248, %v4249
        %v4251 = vsel %vm3709, %v3822, 0.0
        %v4252 = vadd.f32 %v4250, %v4251
        %v4253 = vsel %vm3709, %v3823, 0.0
        %v4254 = vadd.f32 %v4252, %v4253
        %v4255 = vsel %vm3709, %v3824, 0.0
        %v4256 = vadd.f32 %v4254, %v4255
        %v4257 = vsel %vm3709, %v3825, 0.0
        %v4258 = vadd.f32 %v4256, %v4257
        %v4259 = vsel %vm3709, %v3826, 0.0
        %v4260 = vadd.f32 %v4258, %v4259
        %v4261 = vsel %vm3709, %v3827, 0.0
        %v4262 = vadd.f32 %v4260, %v4261
        %v4263 = vsel %vm3709, %v3828, 0.0
        %v4264 = vadd.f32 %v4262, %v4263
        %v4265 = vsel %vm3709, %v3829, 0.0
        %v4266 = vadd.f32 %v4264, %v4265
        %v4267 = vsel %vm3709, %v3830, 0.0
        %v4268 = vadd.f32 %v4266, %v4267
        %v4269 = vsel %vm3709, %v3831, 0.0
        %v4270 = vadd.f32 %v4268, %v4269
        %v4271 = vsel %vm3709, %v3832, 0.0
        %v4272 = vadd.f32 %v4270, %v4271
        %v4273 = vsel %vm3709, %v3833, 0.0
        %v4274 = vadd.f32 %v4272, %v4273
        %v4275 = vsel %vm3709, %v3834, 0.0
        %v4276 = vadd.f32 %v4274, %v4275
        %v4277 = vsel %vm3709, %v3835, 0.0
        %v4278 = vadd.f32 %v4276, %v4277
        %v4279 = vsel %vm3709, %v3836, 0.0
        %v4280 = vadd.f32 %v4278, %v4279
        %v4281 = vsel %vm3709, %v3837, 0.0
        %v4282 = vadd.f32 %v4280, %v4281
        %v4283 = vsel %vm3709, %v3838, 0.0
        %v4284 = vadd.f32 %v4282, %v4283
        %v4285 = vsel %vm3709, %v3839, 0.0
        %v4286 = vadd.f32 %v4284, %v4285
        %v4287 = vsel %vm3709, %v3840, 0.0
        %v4288 = vadd.f32 %v4286, %v4287
        %v4289 = vrot.slane %v4288, 4
        %v4290 = vadd.f32 %v4288, %v4289
        %v4291 = vrot.slane %v4290, 2
        %v4292 = vadd.f32 %v4290, %v4291
        %v4293 = vrot.slane %v4292, 1
        %v4294 = vadd.f32 %v4292, %v4293
        %vm4295 = vcmask 253952
        %4296 = vst.msk [vmem:[%s243] sm:$0x1] %vm4295, %v4294
        %v4297 = vmul.f32 %v3777, %v3777
        %v4298 = vmul.f32 %v3778, %v3778
        %v4299 = vmul.f32 %v3779, %v3779
        %v4300 = vmul.f32 %v3780, %v3780
        %v4301 = vmul.f32 %v3781, %v3781
        %v4302 = vmul.f32 %v3782, %v3782
        %v4303 = vmul.f32 %v3783, %v3783
        %v4304 = vmul.f32 %v3784, %v3784
        %v4305 = vmul.f32 %v3785, %v3785
        %v4306 = vmul.f32 %v3786, %v3786
        %v4307 = vmul.f32 %v3787, %v3787
        %v4308 = vmul.f32 %v3788, %v3788
        %v4309 = vmul.f32 %v3789, %v3789
        %v4310 = vmul.f32 %v3790, %v3790
        %v4311 = vmul.f32 %v3791, %v3791
        %v4312 = vmul.f32 %v3792, %v3792
        %v4313 = vmul.f32 %v3793, %v3793
        %v4314 = vmul.f32 %v3794, %v3794
        %v4315 = vmul.f32 %v3795, %v3795
        %v4316 = vmul.f32 %v3796, %v3796
        %v4317 = vmul.f32 %v3797, %v3797
        %v4318 = vmul.f32 %v3798, %v3798
        %v4319 = vmul.f32 %v3799, %v3799
        %v4320 = vmul.f32 %v3800, %v3800
        %v4321 = vmul.f32 %v3801, %v3801
        %v4322 = vmul.f32 %v3802, %v3802
        %v4323 = vmul.f32 %v3803, %v3803
        %v4324 = vmul.f32 %v3804, %v3804
        %v4325 = vmul.f32 %v3805, %v3805
        %v4326 = vmul.f32 %v3806, %v3806
        %v4327 = vmul.f32 %v3807, %v3807
        %v4328 = vmul.f32 %v3808, %v3808
        %v4329 = vmul.f32 %v3809, %v3809
        %v4330 = vmul.f32 %v3810, %v3810
        %v4331 = vmul.f32 %v3811, %v3811
        %v4332 = vmul.f32 %v3812, %v3812
        %v4333 = vmul.f32 %v3813, %v3813
        %v4334 = vmul.f32 %v3814, %v3814
        %v4335 = vmul.f32 %v3815, %v3815
        %v4336 = vmul.f32 %v3816, %v3816
        %v4337 = vmul.f32 %v3817, %v3817
        %v4338 = vmul.f32 %v3818, %v3818
        %v4339 = vmul.f32 %v3819, %v3819
        %v4340 = vmul.f32 %v3820, %v3820
        %v4341 = vmul.f32 %v3821, %v3821
        %v4342 = vmul.f32 %v3822, %v3822
        %v4343 = vmul.f32 %v3823, %v3823
        %v4344 = vmul.f32 %v3824, %v3824
        %v4345 = vmul.f32 %v3825, %v3825
        %v4346 = vmul.f32 %v3826, %v3826
        %v4347 = vmul.f32 %v3827, %v3827
        %v4348 = vmul.f32 %v3828, %v3828
        %v4349 = vmul.f32 %v3829, %v3829
        %v4350 = vmul.f32 %v3830, %v3830
        %v4351 = vmul.f32 %v3831, %v3831
        %v4352 = vmul.f32 %v3832, %v3832
        %v4353 = vmul.f32 %v3833, %v3833
        %v4354 = vmul.f32 %v3834, %v3834
        %v4355 = vmul.f32 %v3835, %v3835
        %v4356 = vmul.f32 %v3836, %v3836
        %v4357 = vmul.f32 %v3837, %v3837
        %v4358 = vmul.f32 %v3838, %v3838
        %v4359 = vmul.f32 %v3839, %v3839
        %v4360 = vmul.f32 %v3840, %v3840
        %v4361 = vsel %vm3709, %v4297, 0.0
        %v4362 = vsel %vm3709, %v4298, 0.0
        %v4363 = vadd.f32 %v4361, %v4362
        %v4364 = vsel %vm3709, %v4299, 0.0
        %v4365 = vadd.f32 %v4363, %v4364
        %v4366 = vsel %vm3709, %v4300, 0.0
        %v4367 = vadd.f32 %v4365, %v4366
        %v4368 = vsel %vm3709, %v4301, 0.0
        %v4369 = vadd.f32 %v4367, %v4368
        %v4370 = vsel %vm3709, %v4302, 0.0
        %v4371 = vadd.f32 %v4369, %v4370
        %v4372 = vsel %vm3709, %v4303, 0.0
        %v4373 = vadd.f32 %v4371, %v4372
        %v4374 = vsel %vm3709, %v4304, 0.0
        %v4375 = vadd.f32 %v4373, %v4374
        %v4376 = vsel %vm3709, %v4305, 0.0
        %v4377 = vadd.f32 %v4375, %v4376
        %v4378 = vsel %vm3709, %v4306, 0.0
        %v4379 = vadd.f32 %v4377, %v4378
        %v4380 = vsel %vm3709, %v4307, 0.0
        %v4381 = vadd.f32 %v4379, %v4380
        %v4382 = vsel %vm3709, %v4308, 0.0
        %v4383 = vadd.f32 %v4381, %v4382
        %v4384 = vsel %vm3709, %v4309, 0.0
        %v4385 = vadd.f32 %v4383, %v4384
        %v4386 = vsel %vm3709, %v4310, 0.0
        %v4387 = vadd.f32 %v4385, %v4386
        %v4388 = vsel %vm3709, %v4311, 0.0
        %v4389 = vadd.f32 %v4387, %v4388
        %v4390 = vsel %vm3709, %v4312, 0.0
        %v4391 = vadd.f32 %v4389, %v4390
        %v4392 = vsel %vm3709, %v4313, 0.0
        %v4393 = vadd.f32 %v4391, %v4392
        %v4394 = vsel %vm3709, %v4314, 0.0
        %v4395 = vadd.f32 %v4393, %v4394
        %v4396 = vsel %vm3709, %v4315, 0.0
        %v4397 = vadd.f32 %v4395, %v4396
        %v4398 = vsel %vm3709, %v4316, 0.0
        %v4399 = vadd.f32 %v4397, %v4398
        %v4400 = vsel %vm3709, %v4317, 0.0
        %v4401 = vadd.f32 %v4399, %v4400
        %v4402 = vsel %vm3709, %v4318, 0.0
        %v4403 = vadd.f32 %v4401, %v4402
        %v4404 = vsel %vm3709, %v4319, 0.0
        %v4405 = vadd.f32 %v4403, %v4404
        %v4406 = vsel %vm3709, %v4320, 0.0
        %v4407 = vadd.f32 %v4405, %v4406
        %v4408 = vsel %vm3709, %v4321, 0.0
        %v4409 = vadd.f32 %v4407, %v4408
        %v4410 = vsel %vm3709, %v4322, 0.0
        %v4411 = vadd.f32 %v4409, %v4410
        %v4412 = vsel %vm3709, %v4323, 0.0
        %v4413 = vadd.f32 %v4411, %v4412
        %v4414 = vsel %vm3709, %v4324, 0.0
        %v4415 = vadd.f32 %v4413, %v4414
        %v4416 = vsel %vm3709, %v4325, 0.0
        %v4417 = vadd.f32 %v4415, %v4416
        %v4418 = vsel %vm3709, %v4326, 0.0
        %v4419 = vadd.f32 %v4417, %v4418
        %v4420 = vsel %vm3709, %v4327, 0.0
        %v4421 = vadd.f32 %v4419, %v4420
        %v4422 = vsel %vm3709, %v4328, 0.0
        %v4423 = vadd.f32 %v4421, %v4422
        %v4424 = vsel %vm3709, %v4329, 0.0
        %v4425 = vadd.f32 %v4423, %v4424
        %v4426 = vsel %vm3709, %v4330, 0.0
        %v4427 = vadd.f32 %v4425, %v4426
        %v4428 = vsel %vm3709, %v4331, 0.0
        %v4429 = vadd.f32 %v4427, %v4428
        %v4430 = vsel %vm3709, %v4332, 0.0
        %v4431 = vadd.f32 %v4429, %v4430
        %v4432 = vsel %vm3709, %v4333, 0.0
        %v4433 = vadd.f32 %v4431, %v4432
        %v4434 = vsel %vm3709, %v4334, 0.0
        %v4435 = vadd.f32 %v4433, %v4434
        %v4436 = vsel %vm3709, %v4335, 0.0
        %v4437 = vadd.f32 %v4435, %v4436
        %v4438 = vsel %vm3709, %v4336, 0.0
        %v4439 = vadd.f32 %v4437, %v4438
        %v4440 = vsel %vm3709, %v4337, 0.0
        %v4441 = vadd.f32 %v4439, %v4440
        %v4442 = vsel %vm3709, %v4338, 0.0
        %v4443 = vadd.f32 %v4441, %v4442
        %v4444 = vsel %vm3709, %v4339, 0.0
        %v4445 = vadd.f32 %v4443, %v4444
        %v4446 = vsel %vm3709, %v4340, 0.0
        %v4447 = vadd.f32 %v4445, %v4446
        %v4448 = vsel %vm3709, %v4341, 0.0
        %v4449 = vadd.f32 %v4447, %v4448
        %v4450 = vsel %vm3709, %v4342, 0.0
        %v4451 = vadd.f32 %v4449, %v4450
        %v4452 = vsel %vm3709, %v4343, 0.0
        %v4453 = vadd.f32 %v4451, %v4452
        %v4454 = vsel %vm3709, %v4344, 0.0
        %v4455 = vadd.f32 %v4453, %v4454
        %v4456 = vsel %vm3709, %v4345, 0.0
        %v4457 = vadd.f32 %v4455, %v4456
        %v4458 = vsel %vm3709, %v4346, 0.0
        %v4459 = vadd.f32 %v4457, %v4458
        %v4460 = vsel %vm3709, %v4347, 0.0
        %v4461 = vadd.f32 %v4459, %v4460
        %v4462 = vsel %vm3709, %v4348, 0.0
        %v4463 = vadd.f32 %v4461, %v4462
        %v4464 = vsel %vm3709, %v4349, 0.0
        %v4465 = vadd.f32 %v4463, %v4464
        %v4466 = vsel %vm3709, %v4350, 0.0
        %v4467 = vadd.f32 %v4465, %v4466
        %v4468 = vsel %vm3709, %v4351, 0.0
        %v4469 = vadd.f32 %v4467, %v4468
        %v4470 = vsel %vm3709, %v4352, 0.0
        %v4471 = vadd.f32 %v4469, %v4470
        %v4472 = vsel %vm3709, %v4353, 0.0
        %v4473 = vadd.f32 %v4471, %v4472
        %v4474 = vsel %vm3709, %v4354, 0.0
        %v4475 = vadd.f32 %v4473, %v4474
        %v4476 = vsel %vm3709, %v4355, 0.0
        %v4477 = vadd.f32 %v4475, %v4476
        %v4478 = vsel %vm3709, %v4356, 0.0
        %v4479 = vadd.f32 %v4477, %v4478
        %v4480 = vsel %vm3709, %v4357, 0.0
        %v4481 = vadd.f32 %v4479, %v4480
        %v4482 = vsel %vm3709, %v4358, 0.0
        %v4483 = vadd.f32 %v4481, %v4482
        %v4484 = vsel %vm3709, %v4359, 0.0
        %v4485 = vadd.f32 %v4483, %v4484
        %v4486 = vsel %vm3709, %v4360, 0.0
        %v4487 = vadd.f32 %v4485, %v4486
        %v4488 = vrot.slane %v4487, 4
        %v4489 = vadd.f32 %v4487, %v4488
        %v4490 = vrot.slane %v4489, 2
        %v4491 = vadd.f32 %v4489, %v4490
        %v4492 = vrot.slane %v4491, 1
        %v4493 = vadd.f32 %v4491, %v4492
        %4494 = vst.msk [vmem:[%s246] sm:$0x1] %vm4295, %v4493
      $region36: #{conv_bn_act.2} parent=27 // pred_fallthru
        _
      %s4495 = smul.u32 64, %s20
      %p4496 = scmp.lt.s32.totalorder %s4495, 127
      %s4497 = scalar_select %p4496, %s4495, 127
      %s4498 = smul.addr %s4497, 4
      %s4499 = scalar_lea.vmem %s2, %s4498
      %p4500 = scmp.lt.s32.totalorder %s20, 1
      %s4501 = scalar_select %p4500, %s20, 1
      %s4502 = scalar_lea.vmem %s3, %s4501
      %p4503 = scmp.lt.s32.totalorder %s20, 1
      %s4504 = scalar_select %p4503, %s20, 1
      %s4505 = scalar_lea.vmem %s4, %s4504
      // Predicated region
      $region37: #{conv_bn_act.2} parent=27 // pred_check
        %p4506 = pneg %p95
      $region38: #{conv_bn_act.2} parent=27 // pred_check_branch
        %4508 = sbr.rel (%p4506) target = $region40
      $region39: #{conv_bn_act.2} parent=27 // pred_region
        %s4509 = smul.u32 64, %s20
      $region40: #{conv_bn_act.2} parent=27 // pred_fallthru
        _
      // Predicated region
      $region41: #{conv_bn_act.2} parent=27 // pred_check
        %p4510 = pneg %p121
      $region42: #{conv_bn_act.2} parent=27 // pred_check_branch
        %4512 = sbr.rel (%p4510) target = $region44
      $region43: #{conv_bn_act.2} parent=27 // pred_region
        _
      $region44: #{conv_bn_act.2} parent=27 // pred_fallthru
        _
      // Predicated region
      $region45: #{conv_bn_act.2} parent=27 // pred_check
        %p4513 = pneg %p147
      $region46: #{conv_bn_act.2} parent=27 // pred_check_branch
        %4515 = sbr.rel (%p4513) target = $region48
      $region47: #{conv_bn_act.2} parent=27 // pred_region
        _
      $region48: #{conv_bn_act.2} parent=27 // pred_fallthru
        _
    $region28: #{conv_bn_act.2} parent=5 // pred_fallthru
      _
    %p4516 = scmp.le.s32.totalorder 2, %s11
    // Predicated region
    $region49: #{conv_bn_act.2} parent=5 // pred_check
      %p4517 = pneg %p4516
    $region50: #{conv_bn_act.2} parent=5 // pred_check_branch
      %4519 = sbr.rel (%p4517) target = $region52
    $region51: #{conv_bn_act.2} parent=5 // pred_region
      %s4520 = ssub.s32 %s11, 2
      // Predicated region
      $region53: #{conv_bn_act.2} parent=51 // pred_check
        %p4521 = pneg %p101
      $region54: #{conv_bn_act.2} parent=51 // pred_check_branch
        %4523 = sbr.rel (%p4521) target = $region56
      $region55: #{conv_bn_act.2} parent=51 // pred_region
        %s4524 = smul.u32 64, %s22
        %p4525 = scmp.lt.s32.totalorder %s4524, 127
        %s4526 = scalar_select %p4525, %s4524, 127
        %s4527 = smul.addr %s4526, 4
        %s4528 = scalar_lea.vmem %s2, %s4527
      $region56: #{conv_bn_act.2} parent=51 // pred_fallthru
        _
      // Predicated region
      $region57: #{conv_bn_act.2} parent=51 // pred_check
        %p4529 = pneg %p127
      $region58: #{conv_bn_act.2} parent=51 // pred_check_branch
        %4531 = sbr.rel (%p4529) target = $region60
      $region59: #{conv_bn_act.2} parent=51 // pred_region
        %p4532 = scmp.lt.s32.totalorder %s22, 1
        %s4533 = scalar_select %p4532, %s22, 1
        %s4534 = scalar_lea.vmem %s3, %s4533
      $region60: #{conv_bn_act.2} parent=51 // pred_fallthru
        _
      // Predicated region
      $region61: #{conv_bn_act.2} parent=51 // pred_check
        %p4535 = pneg %p153
      $region62: #{conv_bn_act.2} parent=51 // pred_check_branch
        %4537 = sbr.rel (%p4535) target = $region64
      $region63: #{conv_bn_act.2} parent=51 // pred_region
        %p4538 = scmp.lt.s32.totalorder %s22, 1
        %s4539 = scalar_select %p4538, %s22, 1
        %s4540 = scalar_lea.vmem %s4, %s4539
      $region64: #{conv_bn_act.2} parent=51 // pred_fallthru
        _
    $region52: #{conv_bn_act.2} parent=5 // pred_fallthru
      _
  $region6: #{conv_bn_act.2} parent=0 // loop_footer
    %s15 = sadd.s32 1, %s11
  $region7: #{conv_bn_act.2} parent=0 // loop_footer_branch
    %10 = sbr.rel target = $region3
  $region8: #{conv_bn_act.2} parent=0 // loop_exit
    _

</llo_original>
